<compile_context>
chip_gen: v7x
topology: tpu7x:2x2x1
jax: 0.10.0
libtpu: 0.0.40
codegen_flags: <defaults>
</compile_context>

<pallas_src>
import numpy as np

import jax
import jax.numpy as jnp
from jax import lax
from jax.experimental import pallas as pl
from jax.experimental.pallas import tpu as pltpu


# ----------------------------- host-side weight restructuring -----------------------------

def prepare_params(params, batch):
    """One-time restructuring of torch-layout parameters into bf16 MXU operands."""
    w1c, b1c, w2c, b2c, wf1, bf1, wf2, bf2 = [np.asarray(p, np.float32) for p in params]
    n = batch
    bf16 = jnp.bfloat16
    f32 = jnp.float32

    # conv1: all 11 kernel rows stacked along K.  Pairs with the host-side row
    # unfold of the input so the kernel does a single (40n,550)x(550,240) matmul.
    w1 = np.zeros((11 * 50, 6 * 40), np.float32)
    j = np.arange(40)
    for ki in range(11):
        for kj in range(11):
            for co in range(6):
                w1[ki * 50 + j + kj, co * 40 + j] = w1c[co, 0, ki, kj]
    b1row = np.repeat(b1c, 40)[None, :]                                   # (1, 240)

    # pool1 selectors: even-column selector (output padded to 128 lanes so the
    # conv2 lane-concat lands on a vreg boundary) and even-row selector.
    d1 = np.zeros((6 * 40 - 1, 128), np.float32)
    for c in range(6):
        for jp in range(20):
            d1[c * 40 + 2 * jp, c * 20 + jp] = 1.0
    e1 = np.zeros((20 * n, 40 * n - n), np.float32)
    for i in range(20):
        for b in range(n):
            e1[i * n + b, 2 * i * n + b] = 1.0

    # conv2: 5 two-tap groups (K=256: tap 2t in lanes [0,128), tap 2t+1 in lanes
    # [128,256)) plus a K=128 remainder for tap 10.  p1 lanes are ci*20+col
    # (120 used + 8 zero-padded lanes).
    w2g = np.zeros((5, 256, 18 * 10), np.float32)
    w2r = np.zeros((128, 18 * 10), np.float32)
    j = np.arange(10)
    for t in range(5):
        for g in range(2):
            ki = 2 * t + g
            for kj in range(11):
                for ci in range(6):
                    for co in range(18):
                        w2g[t, g * 128 + ci * 20 + j + kj, co * 10 + j] = w2c[co, ci, ki, kj]
    for kj in range(11):
        for ci in range(6):
            for co in range(18):
                w2r[ci * 20 + j + kj, co * 10 + j] = w2c[co, ci, 10, kj]
    b2row = np.repeat(b2c, 10)[None, :]                                   # (1, 180)

    # pool2 selectors.
    d2 = np.zeros((18 * 10 - 1, 18 * 5), np.float32)
    for c in range(18):
        for jp in range(5):
            d2[c * 10 + 2 * jp, c * 5 + jp] = 1.0
    e2 = np.zeros((5 * n, 10 * n - n), np.float32)
    for i in range(5):
        for b in range(n):
            e2[i * n + b, 2 * i * n + b] = 1.0

    # fc1: fold the torch NCHW flatten (c, h, w) into 5 per-spatial-row slabs so
    # the kernel never transposes the pooled activations.
    wf1s = wf1.reshape(18, 5, 5, 84).transpose(1, 0, 2, 3).reshape(5, 90, 84)

    prepped = (
        jnp.asarray(w1, bf16), jnp.asarray(b1row, f32),
        jnp.asarray(d1, bf16), jnp.asarray(e1, bf16),
        jnp.asarray(w2g, bf16), jnp.asarray(w2r, bf16), jnp.asarray(b2row, f32),
        jnp.asarray(d2, bf16), jnp.asarray(e2, bf16),
        jnp.asarray(wf1s, bf16), jnp.asarray(bf1[None, :], f32),
        jnp.asarray(wf2, bf16), jnp.asarray(bf2[None, :], f32),
    )
    return prepped


# ----------------------------- fused Pallas kernel -----------------------------

def _make_kernel(batch):
    n = batch
    f32 = jnp.float32
    bf16 = jnp.bfloat16

    def mm(a, b):
        # bf16 x bf16 operands, f32 accumulation on the MXU.
        return jnp.dot(a, b, preferred_element_type=f32)

    def pool2x2(act, d_ref, e_ref):
        # 2x2 max-pool: pair-max via shifted slices (cheap relayout work), then
        # ONE even-column and ONE even-row selection matmul (odd selectors gone).
        a = act.astype(bf16)
        m = jnp.maximum(a[:, :-1], a[:, 1:])          # adjacent-column max
        jm = mm(m, d_ref[...])                        # keep even columns -> W/2
        r = jnp.maximum(jm[:-n, :], jm[n:, :])        # adjacent-spatial-row max
        return mm(e_ref[...], r.astype(bf16))         # keep even rows   -> H/2

    def net_kernel(x_ref, w1_ref, b1_ref, d1_ref, e1_ref,
                   w2g_ref, w2r_ref, b2_ref, d2_ref, e2_ref,
                   wf1_ref, bf1_ref, wf2_ref, bf2_ref, o_ref):
        # ---- conv1 (11x11, 1->6) + ReLU: ONE K=550 matmul (rows pre-unfolded) --
        act1 = jnp.maximum(mm(x_ref[...], w1_ref[...]) + b1_ref[...], 0.0)   # (40n, 240)
        p1 = pool2x2(act1, d1_ref, e1_ref)                                   # (20n, 128)

        # ---- conv2 (11x11, 6->18) + ReLU: 2-tap groups (K=256) + remainder ----
        p1b = p1.astype(bf16)
        # lanes [0,128): spatial row r ; lanes [128,256): spatial row r+1
        p1w = jnp.concatenate([p1b[:-n, :], p1b[n:, :]], axis=1)             # (20n-n, 256)
        parts = [mm(p1w[2 * t * n:(2 * t + 10) * n, :], w2g_ref[t]) for t in range(5)]
        parts.append(mm(p1b[10 * n:20 * n, :], w2r_ref[...]))                # tap 10
        acc2 = (parts[0] + parts[1]) + (parts[2] + parts[3]) + (parts[4] + parts[5])
        act2 = jnp.maximum(acc2 + b2_ref[...], 0.0)                          # (10n, 180)
        p2 = pool2x2(act2, d2_ref, e2_ref)                                   # (5n, 90)

        # ---- fc1 (450->84) + ReLU: NCHW flatten folded into 5 row slabs -------
        p2b = p2.astype(bf16)
        hp = [mm(p2b[r * n:(r + 1) * n, :], wf1_ref[r]) for r in range(5)]
        h = jnp.maximum((hp[0] + hp[1]) + (hp[2] + hp[3]) + hp[4] + bf1_ref[...], 0.0)

        # ---- fc2 (84->5) + softmax over classes (exact divide, f32) -----------
        logits = mm(h.astype(bf16), wf2_ref[...]) + bf2_ref[...]             # (n, 5)
        z = logits - jnp.max(logits, axis=-1, keepdims=True)
        e = jnp.exp(z)
        o_ref[...] = e / jnp.sum(e, axis=-1, keepdims=True)

    return net_kernel


def make_net_forward(batch):
    kernel = _make_kernel(batch)

    @jax.jit
    def forward(x, prepped):
        nb = x.shape[0]
        # Kernel (and row selectors in `prepped`) are specialized to `batch`; a
        # mismatch would silently mis-stride every row slice.
        assert nb == batch, (nb, batch)

        # Layout-only XLA glue: unfold the 11 conv1 kernel rows along lanes so
        # conv1 is a single K=550 matmul inside the kernel (the input is ~20 KB,
        # so the 11x unfold is ~110 KB bf16 — nothing like a full im2col).
        x3 = x.reshape(nb, 50, 50)
        x11 = jnp.concatenate([x3[:, ki:ki + 40, :] for ki in range(11)], axis=-1)
        x11 = x11.transpose(1, 0, 2).reshape(40 * nb, 11 * 50).astype(jnp.bfloat16)

        args = (x11,) + tuple(prepped)

        flops = int(
            2 * (40 * nb) * 550 * 240                      # conv1
            + 2 * (40 * nb) * 239 * 128                    # pool1 column select
            + 2 * (20 * nb) * (40 * nb - nb) * 128         # pool1 row select
            + 2 * (10 * nb) * (5 * 256 + 128) * 180        # conv2 groups + remainder
            + 2 * (10 * nb) * 179 * 90                     # pool2 column select
            + 2 * (5 * nb) * (10 * nb - nb) * 90           # pool2 row select
            + 2 * nb * 5 * 90 * 84                         # fc1
            + 2 * nb * 84 * 5)                             # fc2
        bytes_accessed = int(sum(a.size * a.dtype.itemsize for a in args) + nb * 5 * 4)

        # No grid: single invocation with every (small) operand VMEM-resident —
        # no pointless double-buffering for a one-step "pipeline".
        return pl.pallas_call(
            kernel,
            out_shape=jax.ShapeDtypeStruct((nb, 5), jnp.float32),
            in_specs=[pl.BlockSpec(memory_space=pltpu.MemorySpace.VMEM) for _ in args],
            out_specs=pl.BlockSpec(memory_space=pltpu.MemorySpace.VMEM),
            cost_estimate=pl.CostEstimate(flops=flops, transcendentals=5 * nb,
                                          bytes_accessed=bytes_accessed),
        )(*args)

    return forward


# ----------------------------- plain-XLA reference (validation) -----------------------------

def net_reference(x, params):
    w1c, b1c, w2c, b2c, wf1, bf1, wf2, bf2 = params
    dn = ("NCHW", "OIHW", "NCHW")

    def conv_relu_pool(v, w, b):
        v = lax.conv_general_dilated(v, w, (1, 1), "VALID", dimension_numbers=dn)
        v = jnp.maximum(v + b.reshape(1, -1, 1, 1), 0.0)
        return lax.reduce_window(v, -jnp.inf, lax.max,
                                 (1, 1, 2, 2), (1, 1, 2, 2), "VALID")

    y = conv_relu_pool(x, w1c, b1c)
    y = conv_relu_pool(y, w2c, b2c)
    flat = y.reshape(y.shape[0], -1)
    h = jnp.maximum(flat @ wf1 + bf1, 0.0)
    logits = h @ wf2 + bf2
    return jax.nn.softmax(logits, axis=-1)


# ----------------------------- deterministic params -----------------------------

def init_params(key):
    ks = jax.random.split(key, 8)

    def u(k, shape, fan_in):
        bound = 1.0 / (fan_in ** 0.5)
        return jax.random.uniform(k, shape, jnp.float32, -bound, bound)

    w1c = u(ks[0], (6, 1, 11, 11), 1 * 11 * 11)
    b1c = u(ks[1], (6,), 1 * 11 * 11)
    w2c = u(ks[2], (18, 6, 11, 11), 6 * 11 * 11)
    b2c = u(ks[3], (18,), 6 * 11 * 11)
    wf1 = u(ks[4], (450, 84), 450)    # stored (in, out); torch Linear stores (out, in)
    bf1 = u(ks[5], (84,), 450)
    wf2 = u(ks[6], (84, 5), 84)
    bf2 = u(ks[7], (5,), 84)
    return (w1c, b1c, w2c, b2c, wf1, bf1, wf2, bf2)


if __name__ == "__main__":
    key = jax.random.PRNGKey(0)
    kx, kp = jax.random.split(key)
    batch = 2
    # 50x50 input is dictated by the architecture (50 ->conv 40 ->pool 20
    # ->conv 10 ->pool 5, giving the 5*5*18 = 450 flatten the module expects).
    x = jax.random.normal(kx, (batch, 1, 50, 50), dtype=jnp.float32)
    params = init_params(kp)

    prepped = prepare_params(params, batch)
    net_forward = make_net_forward(batch)

    out = jax.block_until_ready(net_forward(x, prepped))

    assert out.shape == (batch, 5), out.shape
    assert bool(jnp.all(jnp.isfinite(out)))
    assert bool(jnp.allclose(jnp.sum(out, axis=-1), 1.0, atol=1e-3))

    # Validate the fused bf16-operand kernel against the f32 XLA reference.
    # Tolerance sized for bf16 matmul operands (f32 accumulation).
    ref = jax.block_until_ready(net_reference(x, params))
    err = float(jnp.max(jnp.abs(out - ref)))
    assert err < 3e-2, err

    print("KERNEL_OK")
</pallas_src>

<mosaic_0001>
module attributes {stable_mosaic.version = 11 : i64} {
  func.func @net_kernel(%arg0: memref<80x550xbf16, #tpu.memory_space<vmem>>, %arg1: memref<550x240xbf16, #tpu.memory_space<vmem>>, %arg2: memref<1x240xf32, #tpu.memory_space<vmem>>, %arg3: memref<239x128xbf16, #tpu.memory_space<vmem>>, %arg4: memref<40x78xbf16, #tpu.memory_space<vmem>>, %arg5: memref<5x256x180xbf16, #tpu.memory_space<vmem>>, %arg6: memref<128x180xbf16, #tpu.memory_space<vmem>>, %arg7: memref<1x180xf32, #tpu.memory_space<vmem>>, %arg8: memref<179x90xbf16, #tpu.memory_space<vmem>>, %arg9: memref<10x18xbf16, #tpu.memory_space<vmem>>, %arg10: memref<5x90x84xbf16, #tpu.memory_space<vmem>>, %arg11: memref<1x84xf32, #tpu.memory_space<vmem>>, %arg12: memref<84x5xbf16, #tpu.memory_space<vmem>>, %arg13: memref<1x5xf32, #tpu.memory_space<vmem>>, %arg14: memref<2x5xf32, #tpu.memory_space<vmem>>) attributes {dimension_semantics = [], scalar_prefetch = 0 : i64, scratch_operands = 0 : i64, tpu.core_type = #tpu.core_type<tc>} {
    %c0 = arith.constant 0 : index
    %c0_0 = arith.constant 0 : index
    %0 = vector.load %arg0[%c0, %c0_0] : memref<80x550xbf16, #tpu.memory_space<vmem>>, vector<80x550xbf16>
    %c0_1 = arith.constant 0 : index
    %c0_2 = arith.constant 0 : index
    %1 = vector.load %arg1[%c0_1, %c0_2] : memref<550x240xbf16, #tpu.memory_space<vmem>>, vector<550x240xbf16>
    %cst = arith.constant dense<0.000000e+00> : vector<80x240xf32>
    %2 = tpu.matmul %0, %1, %cst {dimension_numbers = #tpu.dot_dimension_numbers<[1], [0], [0], [1], [0, 0, 1, 1], [], []>} : vector<80x550xbf16>, vector<550x240xbf16>, vector<80x240xf32> -> vector<80x240xf32>
    %c0_3 = arith.constant 0 : index
    %c0_4 = arith.constant 0 : index
    %3 = vector.load %arg2[%c0_3, %c0_4] : memref<1x240xf32, #tpu.memory_space<vmem>>, vector<1x240xf32>
    %4 = vector.broadcast %3 : vector<1x240xf32> to vector<80x240xf32>
    %5 = arith.addf %2, %4 : vector<80x240xf32>
    %cst_5 = arith.constant 0.000000e+00 : f32
    %6 = vector.broadcast %cst_5 : f32 to vector<80x240xf32>
    %7 = arith.maximumf %5, %6 : vector<80x240xf32>
    %8 = arith.truncf %7 : vector<80x240xf32> to vector<80x240xbf16>
    %9 = vector.extract_strided_slice %8 {offsets = [0, 0], sizes = [80, 239], strides = [1, 1]} : vector<80x240xbf16> to vector<80x239xbf16>
    %10 = vector.extract_strided_slice %8 {offsets = [0, 1], sizes = [80, 239], strides = [1, 1]} : vector<80x240xbf16> to vector<80x239xbf16>
    %11 = arith.maximumf %9, %10 : vector<80x239xbf16>
    %c0_6 = arith.constant 0 : index
    %c0_7 = arith.constant 0 : index
    %12 = vector.load %arg3[%c0_6, %c0_7] : memref<239x128xbf16, #tpu.memory_space<vmem>>, vector<239x128xbf16>
    %cst_8 = arith.constant dense<0.000000e+00> : vector<80x128xf32>
    %13 = tpu.matmul %11, %12, %cst_8 {dimension_numbers = #tpu.dot_dimension_numbers<[1], [0], [0], [1], [0, 0, 1, 1], [], []>} : vector<80x239xbf16>, vector<239x128xbf16>, vector<80x128xf32> -> vector<80x128xf32>
    %14 = vector.extract_strided_slice %13 {offsets = [0, 0], sizes = [78, 128], strides = [1, 1]} : vector<80x128xf32> to vector<78x128xf32>
    %15 = vector.extract_strided_slice %13 {offsets = [2, 0], sizes = [78, 128], strides = [1, 1]} : vector<80x128xf32> to vector<78x128xf32>
    %16 = arith.maximumf %14, %15 : vector<78x128xf32>
    %c0_9 = arith.constant 0 : index
    %c0_10 = arith.constant 0 : index
    %17 = vector.load %arg4[%c0_9, %c0_10] : memref<40x78xbf16, #tpu.memory_space<vmem>>, vector<40x78xbf16>
    %18 = arith.truncf %16 : vector<78x128xf32> to vector<78x128xbf16>
    %cst_11 = arith.constant dense<0.000000e+00> : vector<40x128xf32>
    %19 = tpu.matmul %17, %18, %cst_11 {dimension_numbers = #tpu.dot_dimension_numbers<[1], [0], [0], [1], [0, 0, 1, 1], [], []>} : vector<40x78xbf16>, vector<78x128xbf16>, vector<40x128xf32> -> vector<40x128xf32>
    %20 = arith.truncf %19 : vector<40x128xf32> to vector<40x128xbf16>
    %21 = vector.extract_strided_slice %20 {offsets = [0, 0], sizes = [38, 128], strides = [1, 1]} : vector<40x128xbf16> to vector<38x128xbf16>
    %22 = vector.extract_strided_slice %20 {offsets = [2, 0], sizes = [38, 128], strides = [1, 1]} : vector<40x128xbf16> to vector<38x128xbf16>
    %23 = tpu.concatenate %21, %22 in 1 : vector<38x128xbf16>, vector<38x128xbf16> -> vector<38x256xbf16>
    %24 = vector.extract_strided_slice %23 {offsets = [0, 0], sizes = [20, 256], strides = [1, 1]} : vector<38x256xbf16> to vector<20x256xbf16>
    %c0_12 = arith.constant 0 : index
    %c0_13 = arith.constant 0 : index
    %c0_14 = arith.constant 0 : index
    %25 = vector.load %arg5[%c0_12, %c0_13, %c0_14] : memref<5x256x180xbf16, #tpu.memory_space<vmem>>, vector<1x256x180xbf16>
    %26 = vector.shape_cast %25 : vector<1x256x180xbf16> to vector<256x180xbf16>
    %cst_15 = arith.constant dense<0.000000e+00> : vector<20x180xf32>
    %27 = tpu.matmul %24, %26, %cst_15 {dimension_numbers = #tpu.dot_dimension_numbers<[1], [0], [0], [1], [0, 0, 1, 1], [], []>} : vector<20x256xbf16>, vector<256x180xbf16>, vector<20x180xf32> -> vector<20x180xf32>
    %28 = vector.extract_strided_slice %23 {offsets = [4, 0], sizes = [20, 256], strides = [1, 1]} : vector<38x256xbf16> to vector<20x256xbf16>
    %c1 = arith.constant 1 : index
    %c0_16 = arith.constant 0 : index
    %c0_17 = arith.constant 0 : index
    %29 = vector.load %arg5[%c1, %c0_16, %c0_17] : memref<5x256x180xbf16, #tpu.memory_space<vmem>>, vector<1x256x180xbf16>
    %30 = vector.shape_cast %29 : vector<1x256x180xbf16> to vector<256x180xbf16>
    %cst_18 = arith.constant dense<0.000000e+00> : vector<20x180xf32>
    %31 = tpu.matmul %28, %30, %cst_18 {dimension_numbers = #tpu.dot_dimension_numbers<[1], [0], [0], [1], [0, 0, 1, 1], [], []>} : vector<20x256xbf16>, vector<256x180xbf16>, vector<20x180xf32> -> vector<20x180xf32>
    %32 = vector.extract_strided_slice %23 {offsets = [8, 0], sizes = [20, 256], strides = [1, 1]} : vector<38x256xbf16> to vector<20x256xbf16>
    %c2 = arith.constant 2 : index
    %c0_19 = arith.constant 0 : index
    %c0_20 = arith.constant 0 : index
    %33 = vector.load %arg5[%c2, %c0_19, %c0_20] : memref<5x256x180xbf16, #tpu.memory_space<vmem>>, vector<1x256x180xbf16>
    %34 = vector.shape_cast %33 : vector<1x256x180xbf16> to vector<256x180xbf16>
    %cst_21 = arith.constant dense<0.000000e+00> : vector<20x180xf32>
    %35 = tpu.matmul %32, %34, %cst_21 {dimension_numbers = #tpu.dot_dimension_numbers<[1], [0], [0], [1], [0, 0, 1, 1], [], []>} : vector<20x256xbf16>, vector<256x180xbf16>, vector<20x180xf32> -> vector<20x180xf32>
    %36 = vector.extract_strided_slice %23 {offsets = [12, 0], sizes = [20, 256], strides = [1, 1]} : vector<38x256xbf16> to vector<20x256xbf16>
    %c3 = arith.constant 3 : index
    %c0_22 = arith.constant 0 : index
    %c0_23 = arith.constant 0 : index
    %37 = vector.load %arg5[%c3, %c0_22, %c0_23] : memref<5x256x180xbf16, #tpu.memory_space<vmem>>, vector<1x256x180xbf16>
    %38 = vector.shape_cast %37 : vector<1x256x180xbf16> to vector<256x180xbf16>
    %cst_24 = arith.constant dense<0.000000e+00> : vector<20x180xf32>
    %39 = tpu.matmul %36, %38, %cst_24 {dimension_numbers = #tpu.dot_dimension_numbers<[1], [0], [0], [1], [0, 0, 1, 1], [], []>} : vector<20x256xbf16>, vector<256x180xbf16>, vector<20x180xf32> -> vector<20x180xf32>
    %40 = vector.extract_strided_slice %23 {offsets = [16, 0], sizes = [20, 256], strides = [1, 1]} : vector<38x256xbf16> to vector<20x256xbf16>
    %c4 = arith.constant 4 : index
    %c0_25 = arith.constant 0 : index
    %c0_26 = arith.constant 0 : index
    %41 = vector.load %arg5[%c4, %c0_25, %c0_26] : memref<5x256x180xbf16, #tpu.memory_space<vmem>>, vector<1x256x180xbf16>
    %42 = vector.shape_cast %41 : vector<1x256x180xbf16> to vector<256x180xbf16>
    %cst_27 = arith.constant dense<0.000000e+00> : vector<20x180xf32>
    %43 = tpu.matmul %40, %42, %cst_27 {dimension_numbers = #tpu.dot_dimension_numbers<[1], [0], [0], [1], [0, 0, 1, 1], [], []>} : vector<20x256xbf16>, vector<256x180xbf16>, vector<20x180xf32> -> vector<20x180xf32>
    %44 = vector.extract_strided_slice %20 {offsets = [20, 0], sizes = [20, 128], strides = [1, 1]} : vector<40x128xbf16> to vector<20x128xbf16>
    %c0_28 = arith.constant 0 : index
    %c0_29 = arith.constant 0 : index
    %45 = vector.load %arg6[%c0_28, %c0_29] : memref<128x180xbf16, #tpu.memory_space<vmem>>, vector<128x180xbf16>
    %cst_30 = arith.constant dense<0.000000e+00> : vector<20x180xf32>
    %46 = tpu.matmul %44, %45, %cst_30 {dimension_numbers = #tpu.dot_dimension_numbers<[1], [0], [0], [1], [0, 0, 1, 1], [], []>} : vector<20x128xbf16>, vector<128x180xbf16>, vector<20x180xf32> -> vector<20x180xf32>
    %47 = arith.addf %27, %31 : vector<20x180xf32>
    %48 = arith.addf %35, %39 : vector<20x180xf32>
    %49 = arith.addf %47, %48 : vector<20x180xf32>
    %50 = arith.addf %43, %46 : vector<20x180xf32>
    %51 = arith.addf %49, %50 : vector<20x180xf32>
    %c0_31 = arith.constant 0 : index
    %c0_32 = arith.constant 0 : index
    %52 = vector.load %arg7[%c0_31, %c0_32] : memref<1x180xf32, #tpu.memory_space<vmem>>, vector<1x180xf32>
    %53 = vector.broadcast %52 : vector<1x180xf32> to vector<20x180xf32>
    %54 = arith.addf %51, %53 : vector<20x180xf32>
    %cst_33 = arith.constant 0.000000e+00 : f32
    %55 = vector.broadcast %cst_33 : f32 to vector<20x180xf32>
    %56 = arith.maximumf %54, %55 : vector<20x180xf32>
    %57 = arith.truncf %56 : vector<20x180xf32> to vector<20x180xbf16>
    %58 = vector.extract_strided_slice %57 {offsets = [0, 0], sizes = [20, 179], strides = [1, 1]} : vector<20x180xbf16> to vector<20x179xbf16>
    %59 = vector.extract_strided_slice %57 {offsets = [0, 1], sizes = [20, 179], strides = [1, 1]} : vector<20x180xbf16> to vector<20x179xbf16>
    %60 = arith.maximumf %58, %59 : vector<20x179xbf16>
    %c0_34 = arith.constant 0 : index
    %c0_35 = arith.constant 0 : index
    %61 = vector.load %arg8[%c0_34, %c0_35] : memref<179x90xbf16, #tpu.memory_space<vmem>>, vector<179x90xbf16>
    %cst_36 = arith.constant dense<0.000000e+00> : vector<20x90xf32>
    %62 = tpu.matmul %60, %61, %cst_36 {dimension_numbers = #tpu.dot_dimension_numbers<[1], [0], [0], [1], [0, 0, 1, 1], [], []>} : vector<20x179xbf16>, vector<179x90xbf16>, vector<20x90xf32> -> vector<20x90xf32>
    %63 = vector.extract_strided_slice %62 {offsets = [0, 0], sizes = [18, 90], strides = [1, 1]} : vector<20x90xf32> to vector<18x90xf32>
    %64 = vector.extract_strided_slice %62 {offsets = [2, 0], sizes = [18, 90], strides = [1, 1]} : vector<20x90xf32> to vector<18x90xf32>
    %65 = arith.maximumf %63, %64 : vector<18x90xf32>
    %c0_37 = arith.constant 0 : index
    %c0_38 = arith.constant 0 : index
    %66 = vector.load %arg9[%c0_37, %c0_38] : memref<10x18xbf16, #tpu.memory_space<vmem>>, vector<10x18xbf16>
    %67 = arith.truncf %65 : vector<18x90xf32> to vector<18x90xbf16>
    %cst_39 = arith.constant dense<0.000000e+00> : vector<10x90xf32>
    %68 = tpu.matmul %66, %67, %cst_39 {dimension_numbers = #tpu.dot_dimension_numbers<[1], [0], [0], [1], [0, 0, 1, 1], [], []>} : vector<10x18xbf16>, vector<18x90xbf16>, vector<10x90xf32> -> vector<10x90xf32>
    %69 = arith.truncf %68 : vector<10x90xf32> to vector<10x90xbf16>
    %70 = vector.extract_strided_slice %69 {offsets = [0, 0], sizes = [2, 90], strides = [1, 1]} : vector<10x90xbf16> to vector<2x90xbf16>
    %c0_40 = arith.constant 0 : index
    %c0_41 = arith.constant 0 : index
    %c0_42 = arith.constant 0 : index
    %71 = vector.load %arg10[%c0_40, %c0_41, %c0_42] : memref<5x90x84xbf16, #tpu.memory_space<vmem>>, vector<1x90x84xbf16>
    %72 = vector.shape_cast %71 : vector<1x90x84xbf16> to vector<90x84xbf16>
    %cst_43 = arith.constant dense<0.000000e+00> : vector<2x84xf32>
    %73 = tpu.matmul %70, %72, %cst_43 {dimension_numbers = #tpu.dot_dimension_numbers<[1], [0], [0], [1], [0, 0, 1, 1], [], []>} : vector<2x90xbf16>, vector<90x84xbf16>, vector<2x84xf32> -> vector<2x84xf32>
    %74 = vector.extract_strided_slice %69 {offsets = [2, 0], sizes = [2, 90], strides = [1, 1]} : vector<10x90xbf16> to vector<2x90xbf16>
    %c1_44 = arith.constant 1 : index
    %c0_45 = arith.constant 0 : index
    %c0_46 = arith.constant 0 : index
    %75 = vector.load %arg10[%c1_44, %c0_45, %c0_46] : memref<5x90x84xbf16, #tpu.memory_space<vmem>>, vector<1x90x84xbf16>
    %76 = vector.shape_cast %75 : vector<1x90x84xbf16> to vector<90x84xbf16>
    %cst_47 = arith.constant dense<0.000000e+00> : vector<2x84xf32>
    %77 = tpu.matmul %74, %76, %cst_47 {dimension_numbers = #tpu.dot_dimension_numbers<[1], [0], [0], [1], [0, 0, 1, 1], [], []>} : vector<2x90xbf16>, vector<90x84xbf16>, vector<2x84xf32> -> vector<2x84xf32>
    %78 = vector.extract_strided_slice %69 {offsets = [4, 0], sizes = [2, 90], strides = [1, 1]} : vector<10x90xbf16> to vector<2x90xbf16>
    %c2_48 = arith.constant 2 : index
    %c0_49 = arith.constant 0 : index
    %c0_50 = arith.constant 0 : index
    %79 = vector.load %arg10[%c2_48, %c0_49, %c0_50] : memref<5x90x84xbf16, #tpu.memory_space<vmem>>, vector<1x90x84xbf16>
    %80 = vector.shape_cast %79 : vector<1x90x84xbf16> to vector<90x84xbf16>
    %cst_51 = arith.constant dense<0.000000e+00> : vector<2x84xf32>
    %81 = tpu.matmul %78, %80, %cst_51 {dimension_numbers = #tpu.dot_dimension_numbers<[1], [0], [0], [1], [0, 0, 1, 1], [], []>} : vector<2x90xbf16>, vector<90x84xbf16>, vector<2x84xf32> -> vector<2x84xf32>
    %82 = vector.extract_strided_slice %69 {offsets = [6, 0], sizes = [2, 90], strides = [1, 1]} : vector<10x90xbf16> to vector<2x90xbf16>
    %c3_52 = arith.constant 3 : index
    %c0_53 = arith.constant 0 : index
    %c0_54 = arith.constant 0 : index
    %83 = vector.load %arg10[%c3_52, %c0_53, %c0_54] : memref<5x90x84xbf16, #tpu.memory_space<vmem>>, vector<1x90x84xbf16>
    %84 = vector.shape_cast %83 : vector<1x90x84xbf16> to vector<90x84xbf16>
    %cst_55 = arith.constant dense<0.000000e+00> : vector<2x84xf32>
    %85 = tpu.matmul %82, %84, %cst_55 {dimension_numbers = #tpu.dot_dimension_numbers<[1], [0], [0], [1], [0, 0, 1, 1], [], []>} : vector<2x90xbf16>, vector<90x84xbf16>, vector<2x84xf32> -> vector<2x84xf32>
    %86 = vector.extract_strided_slice %69 {offsets = [8, 0], sizes = [2, 90], strides = [1, 1]} : vector<10x90xbf16> to vector<2x90xbf16>
    %c4_56 = arith.constant 4 : index
    %c0_57 = arith.constant 0 : index
    %c0_58 = arith.constant 0 : index
    %87 = vector.load %arg10[%c4_56, %c0_57, %c0_58] : memref<5x90x84xbf16, #tpu.memory_space<vmem>>, vector<1x90x84xbf16>
    %88 = vector.shape_cast %87 : vector<1x90x84xbf16> to vector<90x84xbf16>
    %cst_59 = arith.constant dense<0.000000e+00> : vector<2x84xf32>
    %89 = tpu.matmul %86, %88, %cst_59 {dimension_numbers = #tpu.dot_dimension_numbers<[1], [0], [0], [1], [0, 0, 1, 1], [], []>} : vector<2x90xbf16>, vector<90x84xbf16>, vector<2x84xf32> -> vector<2x84xf32>
    %90 = arith.addf %73, %77 : vector<2x84xf32>
    %91 = arith.addf %81, %85 : vector<2x84xf32>
    %92 = arith.addf %90, %91 : vector<2x84xf32>
    %93 = arith.addf %92, %89 : vector<2x84xf32>
    %c0_60 = arith.constant 0 : index
    %c0_61 = arith.constant 0 : index
    %94 = vector.load %arg11[%c0_60, %c0_61] : memref<1x84xf32, #tpu.memory_space<vmem>>, vector<1x84xf32>
    %95 = vector.broadcast %94 : vector<1x84xf32> to vector<2x84xf32>
    %96 = arith.addf %93, %95 : vector<2x84xf32>
    %cst_62 = arith.constant 0.000000e+00 : f32
    %97 = vector.broadcast %cst_62 : f32 to vector<2x84xf32>
    %98 = arith.maximumf %96, %97 : vector<2x84xf32>
    %99 = arith.truncf %98 : vector<2x84xf32> to vector<2x84xbf16>
    %c0_63 = arith.constant 0 : index
    %c0_64 = arith.constant 0 : index
    %100 = vector.load %arg12[%c0_63, %c0_64] : memref<84x5xbf16, #tpu.memory_space<vmem>>, vector<84x5xbf16>
    %cst_65 = arith.constant dense<0.000000e+00> : vector<2x5xf32>
    %101 = tpu.matmul %99, %100, %cst_65 {dimension_numbers = #tpu.dot_dimension_numbers<[1], [0], [0], [1], [0, 0, 1, 1], [], []>} : vector<2x84xbf16>, vector<84x5xbf16>, vector<2x5xf32> -> vector<2x5xf32>
    %c0_66 = arith.constant 0 : index
    %c0_67 = arith.constant 0 : index
    %102 = vector.load %arg13[%c0_66, %c0_67] : memref<1x5xf32, #tpu.memory_space<vmem>>, vector<1x5xf32>
    %103 = vector.broadcast %102 : vector<1x5xf32> to vector<2x5xf32>
    %104 = arith.addf %101, %103 : vector<2x5xf32>
    %cst_68 = arith.constant dense<0xFF800000> : vector<2xf32>
    %105 = vector.multi_reduction <maximumf>, %104, %cst_68 [1] : vector<2x5xf32> to vector<2xf32>
    %106 = vector.shape_cast %105 : vector<2xf32> to vector<2x1xf32>
    %107 = vector.broadcast %106 : vector<2x1xf32> to vector<2x5xf32>
    %108 = arith.subf %104, %107 : vector<2x5xf32>
    %109 = math.exp %108 : vector<2x5xf32>
    %cst_69 = arith.constant dense<0.000000e+00> : vector<2xf32>
    %110 = vector.multi_reduction <add>, %109, %cst_69 [1] : vector<2x5xf32> to vector<2xf32>
    %111 = vector.shape_cast %110 : vector<2xf32> to vector<2x1xf32>
    %112 = vector.broadcast %111 : vector<2x1xf32> to vector<2x5xf32>
    %113 = arith.divf %109, %112 : vector<2x5xf32>
    %c0_70 = arith.constant 0 : index
    %c0_71 = arith.constant 0 : index
    %114 = vector.load %arg14[%c0_70, %c0_71] : memref<2x5xf32, #tpu.memory_space<vmem>>, vector<2x5xf32>
    tpu.vector_store %arg14[%c0_70, %c0_71], %113 {strides = array<i32>} : memref<2x5xf32, #tpu.memory_space<vmem>>, vector<2x5xf32>,
    return
  }
}

</mosaic_0001>

<llo_original>
// kernel: forward.1
$region0: #{forward.1}
  #allocation0 [shape = 'u32[]', space=smem, size = 0x4, offset = 0x4, fixed_abs, tag = 'smem constant byte address 0x4 - core index']
  #allocation1 [shape = 'u32[144,128]{1,0:T(1,128)}', space=vmem, size = 0x12000, scoped, tag = 'internal scratch']
  %s0 = inlined_call_operand.vmem [shape: bf16[80,550], index: 0, kind: input, shape index: {}]
  %s1 = inlined_call_operand.vmem [shape: bf16[550,240], index: 1, kind: input, shape index: {}]
  %s2 = inlined_call_operand.vmem [shape: f32[1,240], index: 2, kind: input, shape index: {}]
  %s3 = inlined_call_operand.vmem [shape: bf16[239,128], index: 3, kind: input, shape index: {}]
  %s4 = inlined_call_operand.vmem [shape: bf16[40,78], index: 4, kind: input, shape index: {}]
  %s5 = inlined_call_operand.vmem [shape: bf16[5,256,180], index: 5, kind: input, shape index: {}]
  %s6 = inlined_call_operand.vmem [shape: bf16[128,180], index: 6, kind: input, shape index: {}]
  %s7 = inlined_call_operand.vmem [shape: f32[1,180], index: 7, kind: input, shape index: {}]
  %s8 = inlined_call_operand.vmem [shape: bf16[179,90], index: 8, kind: input, shape index: {}]
  %s9 = inlined_call_operand.vmem [shape: bf16[10,18], index: 9, kind: input, shape index: {}]
  %s10 = inlined_call_operand.vmem [shape: bf16[5,90,84], index: 10, kind: input, shape index: {}]
  %s11 = inlined_call_operand.vmem [shape: f32[1,84], index: 11, kind: input, shape index: {}]
  %s12 = inlined_call_operand.vmem [shape: bf16[84,5], index: 12, kind: input, shape index: {}]
  %s13 = inlined_call_operand.vmem [shape: f32[1,5], index: 13, kind: input, shape index: {}]
  %s14 = inlined_call_operand.hbm [shape: f32[2,5], index: 14, kind: output, shape index: {}]
  %s15 = sld [smem:[#allocation0]]
  $region66: #{forward.1} parent=0
    _
  %s17 = ssub.s32 1, %s15
  %s18 = scalar_select 0, %s17, %s15
  $region1: #{forward.1} parent=0
    #allocation2 [shape = 'u8[1024]{0}', space=vmem, size = 0x400, scoped, tag = 'output window, operand 0, single buffered']
    #allocation3 [shape = 's32[1]{0}', space=sflag, size = 0x4, scoped, tag = 'scoped memory for forward.1']
    %19 = vsyncpa [#allocation3], 0
    // Predicated region
    $region2: #{forward.1} parent=1 // pred_check
      _
    $region3: #{forward.1} parent=1 // pred_check_branch
      %21 = sbr.rel (0) target = $region5
    $region4: #{forward.1} parent=1 // pred_region
      _
    $region5: #{forward.1} parent=1 // pred_fallthru
      _
    // Predicated region
    $region6: #{forward.1} parent=1 // pred_check
      _
    $region7: #{forward.1} parent=1 // pred_check_branch
      %23 = sbr.rel (0) target = $region9
    $region8: #{forward.1} parent=1 // pred_region
      _
    $region9: #{forward.1} parent=1 // pred_fallthru
      _
    // Predicated region
    $region10: #{forward.1} parent=1 // pred_check
      _
    $region11: #{forward.1} parent=1 // pred_check_branch
      %25 = sbr.rel (0) target = $region13
    $region12: #{forward.1} parent=1 // pred_region
      _
    $region13: #{forward.1} parent=1 // pred_fallthru
      _
    // Predicated region
    $region14: #{forward.1} parent=1 // pred_check
      _
    $region15: #{forward.1} parent=1 // pred_check_branch
      %27 = sbr.rel (0) target = $region17
    $region16: #{forward.1} parent=1 // pred_region
      _
    $region17: #{forward.1} parent=1 // pred_fallthru
      _
    // Predicated region
    $region18: #{forward.1} parent=1 // pred_check
      _
    $region19: #{forward.1} parent=1 // pred_check_branch
      %29 = sbr.rel (0) target = $region21
    $region20: #{forward.1} parent=1 // pred_region
      _
    $region21: #{forward.1} parent=1 // pred_fallthru
      _
    // Predicated region
    $region22: #{forward.1} parent=1 // pred_check
      _
    $region23: #{forward.1} parent=1 // pred_check_branch
      %31 = sbr.rel (0) target = $region25
    $region24: #{forward.1} parent=1 // pred_region
      _
    $region25: #{forward.1} parent=1 // pred_fallthru
      _
    // Predicated region
    $region26: #{forward.1} parent=1 // pred_check
      _
    $region27: #{forward.1} parent=1 // pred_check_branch
      %33 = sbr.rel (0) target = $region29
    $region28: #{forward.1} parent=1 // pred_region
      _
    $region29: #{forward.1} parent=1 // pred_fallthru
      _
    // Predicated region
    $region30: #{forward.1} parent=1 // pred_check
      _
    $region31: #{forward.1} parent=1 // pred_check_branch
      %35 = sbr.rel (0) target = $region33
    $region32: #{forward.1} parent=1 // pred_region
      _
    $region33: #{forward.1} parent=1 // pred_fallthru
      _
    // Predicated region
    $region34: #{forward.1} parent=1 // pred_check
      _
    $region35: #{forward.1} parent=1 // pred_check_branch
      %37 = sbr.rel (0) target = $region37
    $region36: #{forward.1} parent=1 // pred_region
      _
    $region37: #{forward.1} parent=1 // pred_fallthru
      _
    // Predicated region
    $region38: #{forward.1} parent=1 // pred_check
      _
    $region39: #{forward.1} parent=1 // pred_check_branch
      %39 = sbr.rel (0) target = $region41
    $region40: #{forward.1} parent=1 // pred_region
      _
    $region41: #{forward.1} parent=1 // pred_fallthru
      _
    // Predicated region
    $region42: #{forward.1} parent=1 // pred_check
      _
    $region43: #{forward.1} parent=1 // pred_check_branch
      %41 = sbr.rel (0) target = $region45
    $region44: #{forward.1} parent=1 // pred_region
      _
    $region45: #{forward.1} parent=1 // pred_fallthru
      _
    // Predicated region
    $region46: #{forward.1} parent=1 // pred_check
      _
    $region47: #{forward.1} parent=1 // pred_check_branch
      %43 = sbr.rel (0) target = $region49
    $region48: #{forward.1} parent=1 // pred_region
      _
    $region49: #{forward.1} parent=1 // pred_fallthru
      _
    // Predicated region
    $region50: #{forward.1} parent=1 // pred_check
      _
    $region51: #{forward.1} parent=1 // pred_check_branch
      %45 = sbr.rel (0) target = $region53
    $region52: #{forward.1} parent=1 // pred_region
      _
    $region53: #{forward.1} parent=1 // pred_fallthru
      _
    // Predicated region
    $region54: #{forward.1} parent=1 // pred_check
      _
    $region55: #{forward.1} parent=1 // pred_check_branch
      %47 = sbr.rel (0) target = $region57
    $region56: #{forward.1} parent=1 // pred_region
      _
    $region57: #{forward.1} parent=1 // pred_fallthru
      _
    %v49 = vld [vmem:[%s0] sm:$0xff]
    %v50 = vld [vmem:[%s0 + $0x8] sm:$0xff]
    %v51 = vld [vmem:[%s0 + $0x10] sm:$0xf]
    %v52 = vld [vmem:[%s0 + $0x14] sm:$0xff]
    %v53 = vld [vmem:[%s0 + $0x1c] sm:$0xff]
    %v54 = vld [vmem:[%s0 + $0x24] sm:$0xf]
    %v55 = vld [vmem:[%s0 + $0x28] sm:$0xff]
    %v56 = vld [vmem:[%s0 + $0x30] sm:$0xff]
    %v57 = vld [vmem:[%s0 + $0x38] sm:$0xf]
    %v58 = vld [vmem:[%s0 + $0x3c] sm:$0xff]
    %v59 = vld [vmem:[%s0 + $0x44] sm:$0xff]
    %v60 = vld [vmem:[%s0 + $0x4c] sm:$0xf]
    %v61 = vld [vmem:[%s0 + $0x50] sm:$0xff]
    %v62 = vld [vmem:[%s0 + $0x58] sm:$0xff]
    %v63 = vld [vmem:[%s0 + $0x60] sm:$0xf]
    %v64 = vld [vmem:[%s0 + $0x64] sm:$0xff]
    %v65 = vld [vmem:[%s0 + $0x6c] sm:$0xff]
    %v66 = vld [vmem:[%s0 + $0x74] sm:$0xf]
    %v67 = vld [vmem:[%s0 + $0x78] sm:$0xff]
    %v68 = vld [vmem:[%s0 + $0x80] sm:$0xff]
    %v69 = vld [vmem:[%s0 + $0x88] sm:$0xf]
    %v70 = vld [vmem:[%s0 + $0x8c] sm:$0xff]
    %v71 = vld [vmem:[%s0 + $0x94] sm:$0xff]
    %v72 = vld [vmem:[%s0 + $0x9c] sm:$0xf]
    %v73 = vld [vmem:[%s0 + $0xa0] sm:$0xff]
    %v74 = vld [vmem:[%s0 + $0xa8] sm:$0xff]
    %v75 = vld [vmem:[%s0 + $0xb0] sm:$0xf]
    %v76 = vld [vmem:[%s0 + $0xb4] sm:$0xff]
    %v77 = vld [vmem:[%s0 + $0xbc] sm:$0xff]
    %v78 = vld [vmem:[%s0 + $0xc4] sm:$0xf]
    %v79 = vld [vmem:[%s1] sm:$0xff]
    %v80 = vld [vmem:[%s1 + $0x8] sm:$0xff]
    %v81 = vld [vmem:[%s1 + $0x10] sm:$0xff]
    %v82 = vld [vmem:[%s1 + $0x18] sm:$0xff]
    %v83 = vld [vmem:[%s1 + $0x20] sm:$0xff]
    %v84 = vld [vmem:[%s1 + $0x28] sm:$0xff]
    %v85 = vld [vmem:[%s1 + $0x30] sm:$0xff]
    %v86 = vld [vmem:[%s1 + $0x38] sm:$0xff]
    %v87 = vld [vmem:[%s1 + $0x40] sm:$0xff]
    %v88 = vld [vmem:[%s1 + $0x48] sm:$0xff]
    %v89 = vld [vmem:[%s1 + $0x50] sm:$0xff]
    %v90 = vld [vmem:[%s1 + $0x58] sm:$0xff]
    %v91 = vld [vmem:[%s1 + $0x60] sm:$0xff]
    %v92 = vld [vmem:[%s1 + $0x68] sm:$0xff]
    %v93 = vld [vmem:[%s1 + $0x70] sm:$0xff]
    %v94 = vld [vmem:[%s1 + $0x78] sm:$0xff]
    %v95 = vld [vmem:[%s1 + $0x80] sm:$0xff]
    %v96 = vld [vmem:[%s1 + $0x88] sm:$0xff]
    %v97 = vld [vmem:[%s1 + $0x90] sm:$0xff]
    %v98 = vld [vmem:[%s1 + $0x98] sm:$0xff]
    %v99 = vld [vmem:[%s1 + $0xa0] sm:$0xff]
    %v100 = vld [vmem:[%s1 + $0xa8] sm:$0xff]
    %v101 = vld [vmem:[%s1 + $0xb0] sm:$0xff]
    %v102 = vld [vmem:[%s1 + $0xb8] sm:$0xff]
    %v103 = vld [vmem:[%s1 + $0xc0] sm:$0xff]
    %v104 = vld [vmem:[%s1 + $0xc8] sm:$0xff]
    %v105 = vld [vmem:[%s1 + $0xd0] sm:$0xff]
    %v106 = vld [vmem:[%s1 + $0xd8] sm:$0xff]
    %v107 = vld [vmem:[%s1 + $0xe0] sm:$0xff]
    %v108 = vld [vmem:[%s1 + $0xe8] sm:$0xff]
    %v109 = vld [vmem:[%s1 + $0xf0] sm:$0xff]
    %v110 = vld [vmem:[%s1 + $0xf8] sm:$0xff]
    %v111 = vld [vmem:[%s1 + $0x100] sm:$0xff]
    %v112 = vld [vmem:[%s1 + $0x108] sm:$0xff]
    %v113 = vld [vmem:[%s1 + $0x110] sm:$0xff]
    %v114 = vld [vmem:[%s1 + $0x118] sm:$0xff]
    %v115 = vld [vmem:[%s1 + $0x120] sm:$0xff]
    %v116 = vld [vmem:[%s1 + $0x128] sm:$0xff]
    %v117 = vld [vmem:[%s1 + $0x130] sm:$0xff]
    %v118 = vld [vmem:[%s1 + $0x138] sm:$0xff]
    %v119 = vld [vmem:[%s1 + $0x140] sm:$0xff]
    %v120 = vld [vmem:[%s1 + $0x148] sm:$0xff]
    %v121 = vld [vmem:[%s1 + $0x150] sm:$0xff]
    %v122 = vld [vmem:[%s1 + $0x158] sm:$0xff]
    %v123 = vld [vmem:[%s1 + $0x160] sm:$0xff]
    %v124 = vld [vmem:[%s1 + $0x168] sm:$0xff]
    %v125 = vld [vmem:[%s1 + $0x170] sm:$0xff]
    %v126 = vld [vmem:[%s1 + $0x178] sm:$0xff]
    %v127 = vld [vmem:[%s1 + $0x180] sm:$0xff]
    %v128 = vld [vmem:[%s1 + $0x188] sm:$0xff]
    %v129 = vld [vmem:[%s1 + $0x190] sm:$0xff]
    %v130 = vld [vmem:[%s1 + $0x198] sm:$0xff]
    %v131 = vld [vmem:[%s1 + $0x1a0] sm:$0xff]
    %v132 = vld [vmem:[%s1 + $0x1a8] sm:$0xff]
    %v133 = vld [vmem:[%s1 + $0x1b0] sm:$0xff]
    %v134 = vld [vmem:[%s1 + $0x1b8] sm:$0xff]
    %v135 = vld [vmem:[%s1 + $0x1c0] sm:$0xff]
    %v136 = vld [vmem:[%s1 + $0x1c8] sm:$0xff]
    %v137 = vld [vmem:[%s1 + $0x1d0] sm:$0xff]
    %v138 = vld [vmem:[%s1 + $0x1d8] sm:$0xff]
    %v139 = vld [vmem:[%s1 + $0x1e0] sm:$0xff]
    %v140 = vld [vmem:[%s1 + $0x1e8] sm:$0xff]
    %v141 = vld [vmem:[%s1 + $0x1f0] sm:$0xff]
    %v142 = vld [vmem:[%s1 + $0x1f8] sm:$0xff]
    %v143 = vld [vmem:[%s1 + $0x200] sm:$0xff]
    %v144 = vld [vmem:[%s1 + $0x208] sm:$0xff]
    %v145 = vld [vmem:[%s1 + $0x210] sm:$0xff]
    %v146 = vld [vmem:[%s1 + $0x218] sm:$0xff]
    %v147 = vld [vmem:[%s1 + $0x220] sm:$0x77]
    %v148 = vld [vmem:[%s2] sm:$0x3]
    %v150 = vlaneseq
    %v151 = vshrl.u32 %v150, 7
    %v152 = vsub.s32 0, %v151
    %v153 = vrot.slane %v148, %v152
    %v154 = vlaneseq
    %v155 = vshrl.u32 %v154, 7
    %v156 = vsub.s32 1, %v155
    %v157 = vrot.slane %v148, %v156
    %v190 = vunpack.c.l.b16 %v49
    %v191 = vunpack.c.h.b16 %v49
    %v192 = vunpack.c.l.b16 %v50
    %v193 = vunpack.c.h.b16 %v50
    %v194 = vunpack.c.l.b16 %v51
    %v195 = vunpack.c.l.b16 %v52
    %v196 = vunpack.c.h.b16 %v52
    %v197 = vunpack.c.l.b16 %v53
    %v198 = vunpack.c.h.b16 %v53
    %v199 = vunpack.c.l.b16 %v54
    %v200 = vunpack.c.l.b16 %v55
    %v201 = vunpack.c.h.b16 %v55
    %v202 = vunpack.c.l.b16 %v56
    %v203 = vunpack.c.h.b16 %v56
    %v204 = vunpack.c.l.b16 %v57
    %v205 = vunpack.c.l.b16 %v58
    %v206 = vunpack.c.h.b16 %v58
    %v207 = vunpack.c.l.b16 %v59
    %v208 = vunpack.c.h.b16 %v59
    %v209 = vunpack.c.l.b16 %v60
    %v210 = vunpack.c.l.b16 %v61
    %v211 = vunpack.c.h.b16 %v61
    %v212 = vunpack.c.l.b16 %v62
    %v213 = vunpack.c.h.b16 %v62
    %v214 = vunpack.c.l.b16 %v63
    %v215 = vunpack.c.l.b16 %v64
    %v216 = vunpack.c.h.b16 %v64
    %v217 = vunpack.c.l.b16 %v65
    %v218 = vunpack.c.h.b16 %v65
    %v219 = vunpack.c.l.b16 %v66
    %v220 = vunpack.c.l.b16 %v67
    %v221 = vunpack.c.h.b16 %v67
    %v222 = vunpack.c.l.b16 %v68
    %v223 = vunpack.c.h.b16 %v68
    %v224 = vunpack.c.l.b16 %v69
    %v225 = vunpack.c.l.b16 %v70
    %v226 = vunpack.c.h.b16 %v70
    %v227 = vunpack.c.l.b16 %v71
    %v228 = vunpack.c.h.b16 %v71
    %v229 = vunpack.c.l.b16 %v72
    %v230 = vunpack.c.l.b16 %v73
    %v231 = vunpack.c.h.b16 %v73
    %v232 = vunpack.c.l.b16 %v74
    %v233 = vunpack.c.h.b16 %v74
    %v234 = vunpack.c.l.b16 %v75
    %v235 = vunpack.c.l.b16 %v76
    %v236 = vunpack.c.h.b16 %v76
    %v237 = vunpack.c.l.b16 %v77
    %v238 = vunpack.c.h.b16 %v77
    %v239 = vunpack.c.l.b16 %v78
    %v240 = vpack.c.b16 %v195, %v190
    %v241 = vpack.c.b16 %v196, %v191
    %v242 = vpack.c.b16 %v197, %v192
    %v243 = vpack.c.b16 %v198, %v193
    %v244 = vpack.c.b16 %v199, %v194
    %v245 = vpack.c.b16 %v205, %v200
    %v246 = vpack.c.b16 %v206, %v201
    %v247 = vpack.c.b16 %v207, %v202
    %v248 = vpack.c.b16 %v208, %v203
    %v249 = vpack.c.b16 %v209, %v204
    %v250 = vpack.c.b16 %v215, %v210
    %v251 = vpack.c.b16 %v216, %v211
    %v252 = vpack.c.b16 %v217, %v212
    %v253 = vpack.c.b16 %v218, %v213
    %v254 = vpack.c.b16 %v219, %v214
    %v255 = vpack.c.b16 %v225, %v220
    %v256 = vpack.c.b16 %v226, %v221
    %v257 = vpack.c.b16 %v227, %v222
    %v258 = vpack.c.b16 %v228, %v223
    %v259 = vpack.c.b16 %v229, %v224
    %v260 = vpack.c.b16 %v235, %v230
    %v261 = vpack.c.b16 %v236, %v231
    %v262 = vpack.c.b16 %v237, %v232
    %v263 = vpack.c.b16 %v238, %v233
    %v264 = vpack.c.b16 %v239, %v234
    %v354 = vunpack.c.l.b16 %v79
    %v355 = vunpack.c.h.b16 %v79
    %v356 = vunpack.c.l.b16 %v80
    %v357 = vunpack.c.h.b16 %v80
    %v358 = vunpack.c.l.b16 %v81
    %v359 = vunpack.c.h.b16 %v81
    %v360 = vunpack.c.l.b16 %v82
    %v361 = vunpack.c.h.b16 %v82
    %v362 = vunpack.c.l.b16 %v83
    %v363 = vunpack.c.h.b16 %v83
    %v364 = vunpack.c.l.b16 %v84
    %v365 = vunpack.c.h.b16 %v84
    %v366 = vunpack.c.l.b16 %v85
    %v367 = vunpack.c.h.b16 %v85
    %v368 = vunpack.c.l.b16 %v86
    %v369 = vunpack.c.h.b16 %v86
    %v370 = vunpack.c.l.b16 %v87
    %v371 = vunpack.c.h.b16 %v87
    %v372 = vunpack.c.l.b16 %v88
    %v373 = vunpack.c.h.b16 %v88
    %v374 = vunpack.c.l.b16 %v89
    %v375 = vunpack.c.h.b16 %v89
    %v376 = vunpack.c.l.b16 %v90
    %v377 = vunpack.c.h.b16 %v90
    %v378 = vunpack.c.l.b16 %v91
    %v379 = vunpack.c.h.b16 %v91
    %v380 = vunpack.c.l.b16 %v92
    %v381 = vunpack.c.h.b16 %v92
    %v382 = vunpack.c.l.b16 %v93
    %v383 = vunpack.c.h.b16 %v93
    %v384 = vunpack.c.l.b16 %v94
    %v385 = vunpack.c.h.b16 %v94
    %v386 = vunpack.c.l.b16 %v95
    %v387 = vunpack.c.h.b16 %v95
    %v388 = vunpack.c.l.b16 %v96
    %v389 = vunpack.c.h.b16 %v96
    %v390 = vunpack.c.l.b16 %v97
    %v391 = vunpack.c.h.b16 %v97
    %v392 = vunpack.c.l.b16 %v98
    %v393 = vunpack.c.h.b16 %v98
    %v394 = vunpack.c.l.b16 %v99
    %v395 = vunpack.c.h.b16 %v99
    %v396 = vunpack.c.l.b16 %v100
    %v397 = vunpack.c.h.b16 %v100
    %v398 = vunpack.c.l.b16 %v101
    %v399 = vunpack.c.h.b16 %v101
    %v400 = vunpack.c.l.b16 %v102
    %v401 = vunpack.c.h.b16 %v102
    %v402 = vunpack.c.l.b16 %v103
    %v403 = vunpack.c.h.b16 %v103
    %v404 = vunpack.c.l.b16 %v104
    %v405 = vunpack.c.h.b16 %v104
    %v406 = vunpack.c.l.b16 %v105
    %v407 = vunpack.c.h.b16 %v105
    %v408 = vunpack.c.l.b16 %v106
    %v409 = vunpack.c.h.b16 %v106
    %v410 = vunpack.c.l.b16 %v107
    %v411 = vunpack.c.h.b16 %v107
    %v412 = vunpack.c.l.b16 %v108
    %v413 = vunpack.c.h.b16 %v108
    %v414 = vunpack.c.l.b16 %v109
    %v415 = vunpack.c.h.b16 %v109
    %v416 = vunpack.c.l.b16 %v110
    %v417 = vunpack.c.h.b16 %v110
    %v418 = vunpack.c.l.b16 %v111
    %v419 = vunpack.c.h.b16 %v111
    %v420 = vunpack.c.l.b16 %v112
    %v421 = vunpack.c.h.b16 %v112
    %v422 = vunpack.c.l.b16 %v113
    %v423 = vunpack.c.h.b16 %v113
    %v424 = vunpack.c.l.b16 %v114
    %v425 = vunpack.c.h.b16 %v114
    %v426 = vunpack.c.l.b16 %v115
    %v427 = vunpack.c.h.b16 %v115
    %v428 = vunpack.c.l.b16 %v116
    %v429 = vunpack.c.h.b16 %v116
    %v430 = vunpack.c.l.b16 %v117
    %v431 = vunpack.c.h.b16 %v117
    %v432 = vunpack.c.l.b16 %v118
    %v433 = vunpack.c.h.b16 %v118
    %v434 = vunpack.c.l.b16 %v119
    %v435 = vunpack.c.h.b16 %v119
    %v436 = vunpack.c.l.b16 %v120
    %v437 = vunpack.c.h.b16 %v120
    %v438 = vunpack.c.l.b16 %v121
    %v439 = vunpack.c.h.b16 %v121
    %v440 = vunpack.c.l.b16 %v122
    %v441 = vunpack.c.h.b16 %v122
    %v442 = vunpack.c.l.b16 %v123
    %v443 = vunpack.c.h.b16 %v123
    %v444 = vunpack.c.l.b16 %v124
    %v445 = vunpack.c.h.b16 %v124
    %v446 = vunpack.c.l.b16 %v125
    %v447 = vunpack.c.h.b16 %v125
    %v448 = vunpack.c.l.b16 %v126
    %v449 = vunpack.c.h.b16 %v126
    %v450 = vunpack.c.l.b16 %v127
    %v451 = vunpack.c.h.b16 %v127
    %v452 = vunpack.c.l.b16 %v128
    %v453 = vunpack.c.h.b16 %v128
    %v454 = vunpack.c.l.b16 %v129
    %v455 = vunpack.c.h.b16 %v129
    %v456 = vunpack.c.l.b16 %v130
    %v457 = vunpack.c.h.b16 %v130
    %v458 = vunpack.c.l.b16 %v131
    %v459 = vunpack.c.h.b16 %v131
    %v460 = vunpack.c.l.b16 %v132
    %v461 = vunpack.c.h.b16 %v132
    %v462 = vunpack.c.l.b16 %v133
    %v463 = vunpack.c.h.b16 %v133
    %v464 = vunpack.c.l.b16 %v134
    %v465 = vunpack.c.h.b16 %v134
    %v466 = vunpack.c.l.b16 %v135
    %v467 = vunpack.c.h.b16 %v135
    %v468 = vunpack.c.l.b16 %v136
    %v469 = vunpack.c.h.b16 %v136
    %v470 = vunpack.c.l.b16 %v137
    %v471 = vunpack.c.h.b16 %v137
    %v472 = vunpack.c.l.b16 %v138
    %v473 = vunpack.c.h.b16 %v138
    %v474 = vunpack.c.l.b16 %v139
    %v475 = vunpack.c.h.b16 %v139
    %v476 = vunpack.c.l.b16 %v140
    %v477 = vunpack.c.h.b16 %v140
    %v478 = vunpack.c.l.b16 %v141
    %v479 = vunpack.c.h.b16 %v141
    %v480 = vunpack.c.l.b16 %v142
    %v481 = vunpack.c.h.b16 %v142
    %v482 = vunpack.c.l.b16 %v143
    %v483 = vunpack.c.h.b16 %v143
    %v484 = vunpack.c.l.b16 %v144
    %v485 = vunpack.c.h.b16 %v144
    %v486 = vunpack.c.l.b16 %v145
    %v487 = vunpack.c.h.b16 %v145
    %v488 = vunpack.c.l.b16 %v146
    %v489 = vunpack.c.h.b16 %v146
    %v490 = vunpack.c.l.b16 %v147
    %v491 = vunpack.c.h.b16 %v147
    %v492 = vpack.c.b16 %v356, %v354
    %v493 = vpack.c.b16 %v357, %v355
    %v494 = vpack.c.b16 %v360, %v358
    %v495 = vpack.c.b16 %v361, %v359
    %v496 = vpack.c.b16 %v364, %v362
    %v497 = vpack.c.b16 %v365, %v363
    %v498 = vpack.c.b16 %v368, %v366
    %v499 = vpack.c.b16 %v369, %v367
    %v500 = vpack.c.b16 %v372, %v370
    %v501 = vpack.c.b16 %v373, %v371
    %v502 = vpack.c.b16 %v376, %v374
    %v503 = vpack.c.b16 %v377, %v375
    %v504 = vpack.c.b16 %v380, %v378
    %v505 = vpack.c.b16 %v381, %v379
    %v506 = vpack.c.b16 %v384, %v382
    %v507 = vpack.c.b16 %v385, %v383
    %v508 = vpack.c.b16 %v388, %v386
    %v509 = vpack.c.b16 %v389, %v387
    %v510 = vpack.c.b16 %v392, %v390
    %v511 = vpack.c.b16 %v393, %v391
    %v512 = vpack.c.b16 %v396, %v394
    %v513 = vpack.c.b16 %v397, %v395
    %v514 = vpack.c.b16 %v400, %v398
    %v515 = vpack.c.b16 %v401, %v399
    %v516 = vpack.c.b16 %v404, %v402
    %v517 = vpack.c.b16 %v405, %v403
    %v518 = vpack.c.b16 %v408, %v406
    %v519 = vpack.c.b16 %v409, %v407
    %v520 = vpack.c.b16 %v412, %v410
    %v521 = vpack.c.b16 %v413, %v411
    %v522 = vpack.c.b16 %v416, %v414
    %v523 = vpack.c.b16 %v417, %v415
    %v524 = vpack.c.b16 %v420, %v418
    %v525 = vpack.c.b16 %v421, %v419
    %v526 = vpack.c.b16 %v424, %v422
    %v527 = vpack.c.b16 %v425, %v423
    %v528 = vpack.c.b16 %v428, %v426
    %v529 = vpack.c.b16 %v429, %v427
    %v530 = vpack.c.b16 %v432, %v430
    %v531 = vpack.c.b16 %v433, %v431
    %v532 = vpack.c.b16 %v436, %v434
    %v533 = vpack.c.b16 %v437, %v435
    %v534 = vpack.c.b16 %v440, %v438
    %v535 = vpack.c.b16 %v441, %v439
    %v536 = vpack.c.b16 %v444, %v442
    %v537 = vpack.c.b16 %v445, %v443
    %v538 = vpack.c.b16 %v448, %v446
    %v539 = vpack.c.b16 %v449, %v447
    %v540 = vpack.c.b16 %v452, %v450
    %v541 = vpack.c.b16 %v453, %v451
    %v542 = vpack.c.b16 %v456, %v454
    %v543 = vpack.c.b16 %v457, %v455
    %v544 = vpack.c.b16 %v460, %v458
    %v545 = vpack.c.b16 %v461, %v459
    %v546 = vpack.c.b16 %v464, %v462
    %v547 = vpack.c.b16 %v465, %v463
    %v548 = vpack.c.b16 %v468, %v466
    %v549 = vpack.c.b16 %v469, %v467
    %v550 = vpack.c.b16 %v472, %v470
    %v551 = vpack.c.b16 %v473, %v471
    %v552 = vpack.c.b16 %v476, %v474
    %v553 = vpack.c.b16 %v477, %v475
    %v554 = vpack.c.b16 %v480, %v478
    %v555 = vpack.c.b16 %v481, %v479
    %v556 = vpack.c.b16 %v484, %v482
    %v557 = vpack.c.b16 %v485, %v483
    %v558 = vpack.c.b16 %v488, %v486
    %v559 = vpack.c.b16 %v489, %v487
    %v560 = vpack.c.b16 %v490, %v490
    %v561 = vpack.c.b16 %v491, %v491
    %vm630 = vcmask 310272
    %v632 = vsel %vm630, %v244, 0
    %v635 = vsel %vm630, %v249, 0
    %v638 = vsel %vm630, %v254, 0
    %v641 = vsel %vm630, %v259, 0
    %v644 = vsel %vm630, %v264, 0
    %vm646 = vcmask 1042432
    %v648 = vsel %vm646, %v560, 0
    %v651 = vsel %vm646, %v561, 0
    %653 = vmatprep.subr.bf16.mxu0 %v493
    %654 = vmatpush1.bf16.msra.mxu0 %v492
    %655 = vmatprep.subr.bf16.mxu0 %v495
    %656 = vmatpush1.bf16.msra.mxu0 %v494
    %657 = vmatprep.subr.bf16.mxu0 %v497
    %658 = vmatpush1.bf16.msra.mxu0 %v496
    %659 = vmatprep.subr.bf16.mxu0 %v499
    %660 = vmatpush1.bf16.msra.mxu0 %v498
    %661 = vmatprep.subr.bf16.mxu0 %v501
    %662 = vmatpush1.bf16.msra.mxu0 %v500
    %663 = vmatprep.subr.bf16.mxu0 %v503
    %664 = vmatpush1.bf16.msra.mxu0 %v502
    %665 = vmatprep.subr.bf16.mxu0 %v505
    %666 = vmatpush1.bf16.msra.mxu0 %v504
    %667 = vmatprep.subr.bf16.mxu0 %v507
    %668 = vmatpush1.bf16.msra.mxu0 %v506
    %669 = vmatprep.subr.bf16.mxu0 %v509
    %670 = vmatpush1.bf16.msra.mxu0 %v508
    %671 = vmatprep.subr.bf16.mxu0 %v511
    %672 = vmatpush1.bf16.msra.mxu0 %v510
    %673 = vmatprep.subr.bf16.mxu0 %v513
    %674 = vmatpush1.bf16.msra.mxu0 %v512
    %675 = vmatprep.subr.bf16.mxu0 %v515
    %676 = vmatpush1.bf16.msra.mxu0 %v514
    %677 = vmatprep.subr.bf16.mxu0 %v517
    %678 = vmatpush1.bf16.msra.mxu0 %v516
    %679 = vmatprep.subr.bf16.mxu0 %v519
    %680 = vmatpush1.bf16.msra.mxu0 %v518
    %681 = vmatprep.subr.bf16.mxu0 %v521
    %682 = vmatpush1.bf16.msra.mxu0 %v520
    %683 = vmatprep.subr.bf16.mxu0 %v523
    %684 = vmatpush1.bf16.msra.mxu0 %v522
    %685 = vmatprep.mubr.bf16.mxu0 %v241
    %686 = vmatmul.mubr.bf16.gmra.mrb[0].mxu0 %v240
    %v687 = vpop.f32.mrb[0].mxu0
    %v688 = vadd.f32 %v153, %v687
    %v689 = vpop.f32.mrb[0].mxu0
    %v690 = vadd.f32 %v157, %v689
    %v691 = vpop.f32.mrb[0].mxu0
    %v692 = vadd.f32 %v153, %v691
    %v693 = vpop.f32.mrb[0].mxu0
    %v694 = vadd.f32 %v157, %v693
    %695 = vmatprep.mubr.bf16.mxu0 %v246
    %696 = vmatmul.mubr.bf16.gmra.mrb[0].mxu0 %v245
    %v697 = vpop.f32.mrb[0].mxu0
    %v698 = vadd.f32 %v153, %v697
    %v699 = vpop.f32.mrb[0].mxu0
    %v700 = vadd.f32 %v157, %v699
    %v701 = vpop.f32.mrb[0].mxu0
    %v702 = vadd.f32 %v153, %v701
    %v703 = vpop.f32.mrb[0].mxu0
    %v704 = vadd.f32 %v157, %v703
    %705 = vmatprep.mubr.bf16.mxu0 %v251
    %706 = vmatmul.mubr.bf16.gmra.mrb[0].mxu0 %v250
    %v707 = vpop.f32.mrb[0].mxu0
    %v708 = vadd.f32 %v153, %v707
    %v709 = vpop.f32.mrb[0].mxu0
    %v710 = vadd.f32 %v157, %v709
    %v711 = vpop.f32.mrb[0].mxu0
    %v712 = vadd.f32 %v153, %v711
    %v713 = vpop.f32.mrb[0].mxu0
    %v714 = vadd.f32 %v157, %v713
    %715 = vmatprep.mubr.bf16.mxu0 %v256
    %716 = vmatmul.mubr.bf16.gmra.mrb[0].mxu0 %v255
    %v717 = vpop.f32.mrb[0].mxu0
    %v718 = vadd.f32 %v153, %v717
    %v719 = vpop.f32.mrb[0].mxu0
    %v720 = vadd.f32 %v157, %v719
    %v721 = vpop.f32.mrb[0].mxu0
    %v722 = vadd.f32 %v153, %v721
    %v723 = vpop.f32.mrb[0].mxu0
    %v724 = vadd.f32 %v157, %v723
    %725 = vmatprep.mubr.bf16.mxu0 %v261
    %726 = vmatmul.mubr.bf16.gmra.mrb[0].mxu0 %v260
    %v727 = vpop.f32.mrb[0].mxu0
    %v728 = vadd.f32 %v153, %v727
    %v729 = vpop.f32.mrb[0].mxu0
    %v730 = vadd.f32 %v157, %v729
    %v731 = vpop.f32.mrb[0].mxu0
    %v732 = vadd.f32 %v153, %v731
    %v733 = vpop.f32.mrb[0].mxu0
    %v734 = vadd.f32 %v157, %v733
    %735 = vdwg.mxu0
    %736 = vmatprep.subr.bf16.mxu0 %v525
    %737 = vmatpush1.bf16.msra.mxu0 %v524
    %738 = vmatprep.subr.bf16.mxu0 %v527
    %739 = vmatpush1.bf16.msra.mxu0 %v526
    %740 = vmatprep.subr.bf16.mxu0 %v529
    %741 = vmatpush1.bf16.msra.mxu0 %v528
    %742 = vmatprep.subr.bf16.mxu0 %v531
    %743 = vmatpush1.bf16.msra.mxu0 %v530
    %744 = vmatprep.subr.bf16.mxu0 %v533
    %745 = vmatpush1.bf16.msra.mxu0 %v532
    %746 = vmatprep.subr.bf16.mxu0 %v535
    %747 = vmatpush1.bf16.msra.mxu0 %v534
    %748 = vmatprep.subr.bf16.mxu0 %v537
    %749 = vmatpush1.bf16.msra.mxu0 %v536
    %750 = vmatprep.subr.bf16.mxu0 %v539
    %751 = vmatpush1.bf16.msra.mxu0 %v538
    %752 = vmatprep.subr.bf16.mxu0 %v541
    %753 = vmatpush1.bf16.msra.mxu0 %v540
    %754 = vmatprep.subr.bf16.mxu0 %v543
    %755 = vmatpush1.bf16.msra.mxu0 %v542
    %756 = vmatprep.subr.bf16.mxu0 %v545
    %757 = vmatpush1.bf16.msra.mxu0 %v544
    %758 = vmatprep.subr.bf16.mxu0 %v547
    %759 = vmatpush1.bf16.msra.mxu0 %v546
    %760 = vmatprep.subr.bf16.mxu0 %v549
    %761 = vmatpush1.bf16.msra.mxu0 %v548
    %762 = vmatprep.subr.bf16.mxu0 %v551
    %763 = vmatpush1.bf16.msra.mxu0 %v550
    %764 = vmatprep.subr.bf16.mxu0 %v553
    %765 = vmatpush1.bf16.msra.mxu0 %v552
    %766 = vmatprep.subr.bf16.mxu0 %v555
    %767 = vmatpush1.bf16.msra.mxu0 %v554
    %768 = vmatprep.mubr.bf16.mxu0 %v243
    %769 = vmatmul.mubr.bf16.gmra.mrb[0].mxu0 %v242
    %v770 = vpop.f32.mrb[0].mxu0
    %v771 = vadd.f32 %v688, %v770
    %v772 = vpop.f32.mrb[0].mxu0
    %v773 = vadd.f32 %v690, %v772
    %v774 = vpop.f32.mrb[0].mxu0
    %v775 = vadd.f32 %v692, %v774
    %v776 = vpop.f32.mrb[0].mxu0
    %v777 = vadd.f32 %v694, %v776
    %778 = vmatprep.mubr.bf16.mxu0 %v248
    %779 = vmatmul.mubr.bf16.gmra.mrb[0].mxu0 %v247
    %v780 = vpop.f32.mrb[0].mxu0
    %v781 = vadd.f32 %v698, %v780
    %v782 = vpop.f32.mrb[0].mxu0
    %v783 = vadd.f32 %v700, %v782
    %v784 = vpop.f32.mrb[0].mxu0
    %v785 = vadd.f32 %v702, %v784
    %v786 = vpop.f32.mrb[0].mxu0
    %v787 = vadd.f32 %v704, %v786
    %788 = vmatprep.mubr.bf16.mxu0 %v253
    %789 = vmatmul.mubr.bf16.gmra.mrb[0].mxu0 %v252
    %v790 = vpop.f32.mrb[0].mxu0
    %v791 = vadd.f32 %v708, %v790
    %v792 = vpop.f32.mrb[0].mxu0
    %v793 = vadd.f32 %v710, %v792
    %v794 = vpop.f32.mrb[0].mxu0
    %v795 = vadd.f32 %v712, %v794
    %v796 = vpop.f32.mrb[0].mxu0
    %v797 = vadd.f32 %v714, %v796
    %798 = vmatprep.mubr.bf16.mxu0 %v258
    %799 = vmatmul.mubr.bf16.gmra.mrb[0].mxu0 %v257
    %v800 = vpop.f32.mrb[0].mxu0
    %v801 = vadd.f32 %v718, %v800
    %v802 = vpop.f32.mrb[0].mxu0
    %v803 = vadd.f32 %v720, %v802
    %v804 = vpop.f32.mrb[0].mxu0
    %v805 = vadd.f32 %v722, %v804
    %v806 = vpop.f32.mrb[0].mxu0
    %v807 = vadd.f32 %v724, %v806
    %808 = vmatprep.mubr.bf16.mxu0 %v263
    %809 = vmatmul.mubr.bf16.gmra.mrb[0].mxu0 %v262
    %v810 = vpop.f32.mrb[0].mxu0
    %v811 = vadd.f32 %v728, %v810
    %v812 = vpop.f32.mrb[0].mxu0
    %v813 = vadd.f32 %v730, %v812
    %v814 = vpop.f32.mrb[0].mxu0
    %v815 = vadd.f32 %v732, %v814
    %v816 = vpop.f32.mrb[0].mxu0
    %v817 = vadd.f32 %v734, %v816
    %818 = vdwg.mxu0
    %819 = vmatprep.subr.bf16.mxu0 %v557
    %820 = vmatpush1.bf16.msra.mxu0 %v556
    %821 = vmatprep.subr.bf16.mxu0 %v559
    %822 = vmatpush1.bf16.msra.mxu0 %v558
    %823 = vmatprep.subr.bf16.mxu0 %v651
    %824 = vmatpush1.bf16.msra.mxu0 %v648
    %825 = vmatprep.subr.bf16.mxu0 0
    %826 = vmatpush1.bf16.msra.mxu0 0
    %827 = vmatprep.subr.bf16.mxu0 0
    %828 = vmatpush1.bf16.msra.mxu0 0
    %829 = vmatprep.subr.bf16.mxu0 0
    %830 = vmatpush1.bf16.msra.mxu0 0
    %831 = vmatprep.subr.bf16.mxu0 0
    %832 = vmatpush1.bf16.msra.mxu0 0
    %833 = vmatprep.subr.bf16.mxu0 0
    %834 = vmatpush1.bf16.msra.mxu0 0
    %835 = vmatprep.subr.bf16.mxu0 0
    %836 = vmatpush1.bf16.msra.mxu0 0
    %837 = vmatprep.subr.bf16.mxu0 0
    %838 = vmatpush1.bf16.msra.mxu0 0
    %839 = vmatprep.subr.bf16.mxu0 0
    %840 = vmatpush1.bf16.msra.mxu0 0
    %841 = vmatprep.subr.bf16.mxu0 0
    %842 = vmatpush1.bf16.msra.mxu0 0
    %843 = vmatprep.subr.bf16.mxu0 0
    %844 = vmatpush1.bf16.msra.mxu0 0
    %845 = vmatprep.subr.bf16.mxu0 0
    %846 = vmatpush1.bf16.msra.mxu0 0
    %847 = vmatprep.subr.bf16.mxu0 0
    %848 = vmatpush1.bf16.msra.mxu0 0
    %849 = vmatprep.subr.bf16.mxu0 0
    %850 = vmatpush1.bf16.msra.mxu0 0
    %851 = vmatprep.mubr.bf16.mxu0 0
    %852 = vmatmul.mubr.bf16.gmra.mrb[0].mxu0 %v632
    %v853 = vpop.f32.mrb[0].mxu0
    %v854 = vadd.f32 %v771, %v853
    %v855 = vpop.f32.mrb[0].mxu0
    %v856 = vadd.f32 %v773, %v855
    %v857 = vpop.f32.mrb[0].mxu0
    %v858 = vadd.f32 %v775, %v857
    %v859 = vpop.f32.mrb[0].mxu0
    %v860 = vadd.f32 %v777, %v859
    %861 = vmatprep.mubr.bf16.mxu0 0
    %862 = vmatmul.mubr.bf16.gmra.mrb[0].mxu0 %v635
    %v863 = vpop.f32.mrb[0].mxu0
    %v864 = vadd.f32 %v781, %v863
    %v865 = vpop.f32.mrb[0].mxu0
    %v866 = vadd.f32 %v783, %v865
    %v867 = vpop.f32.mrb[0].mxu0
    %v868 = vadd.f32 %v785, %v867
    %v869 = vpop.f32.mrb[0].mxu0
    %v870 = vadd.f32 %v787, %v869
    %871 = vmatprep.mubr.bf16.mxu0 0
    %872 = vmatmul.mubr.bf16.gmra.mrb[0].mxu0 %v638
    %v873 = vpop.f32.mrb[0].mxu0
    %v874 = vadd.f32 %v791, %v873
    %v875 = vpop.f32.mrb[0].mxu0
    %v876 = vadd.f32 %v793, %v875
    %v877 = vpop.f32.mrb[0].mxu0
    %v878 = vadd.f32 %v795, %v877
    %v879 = vpop.f32.mrb[0].mxu0
    %v880 = vadd.f32 %v797, %v879
    %881 = vmatprep.mubr.bf16.mxu0 0
    %882 = vmatmul.mubr.bf16.gmra.mrb[0].mxu0 %v641
    %v883 = vpop.f32.mrb[0].mxu0
    %v884 = vadd.f32 %v801, %v883
    %v885 = vpop.f32.mrb[0].mxu0
    %v886 = vadd.f32 %v803, %v885
    %v887 = vpop.f32.mrb[0].mxu0
    %v888 = vadd.f32 %v805, %v887
    %v889 = vpop.f32.mrb[0].mxu0
    %v890 = vadd.f32 %v807, %v889
    %891 = vmatprep.mubr.bf16.mxu0 0
    %892 = vmatmul.mubr.bf16.gmra.mrb[0].mxu0 %v644
    %v893 = vpop.f32.mrb[0].mxu0
    %v894 = vadd.f32 %v811, %v893
    %v895 = vpop.f32.mrb[0].mxu0
    %v896 = vadd.f32 %v813, %v895
    %v897 = vpop.f32.mrb[0].mxu0
    %v898 = vadd.f32 %v815, %v897
    %v899 = vpop.f32.mrb[0].mxu0
    %v900 = vadd.f32 %v817, %v899
    %901 = vdwg.mxu0
    %v902 = vmax.f32 %v854, 0.0
    %v903 = vmax.f32 %v856, 0.0
    %v904 = vmax.f32 %v858, 0.0
    %v905 = vmax.f32 %v860, 0.0
    %v906 = vmax.f32 %v864, 0.0
    %v907 = vmax.f32 %v866, 0.0
    %v908 = vmax.f32 %v868, 0.0
    %v909 = vmax.f32 %v870, 0.0
    %v910 = vmax.f32 %v874, 0.0
    %v911 = vmax.f32 %v876, 0.0
    %v912 = vmax.f32 %v878, 0.0
    %v913 = vmax.f32 %v880, 0.0
    %v914 = vmax.f32 %v884, 0.0
    %v915 = vmax.f32 %v886, 0.0
    %v916 = vmax.f32 %v888, 0.0
    %v917 = vmax.f32 %v890, 0.0
    %v918 = vmax.f32 %v894, 0.0
    %v919 = vmax.f32 %v896, 0.0
    %v920 = vmax.f32 %v898, 0.0
    %v921 = vmax.f32 %v900, 0.0
    %v922 = vpack.c.bf16 %v904, %v902
    %v923 = vpack.c.bf16 %v905, %v903
    %v924 = vpack.c.bf16 %v908, %v906
    %v925 = vpack.c.bf16 %v909, %v907
    %v926 = vpack.c.bf16 %v912, %v910
    %v927 = vpack.c.bf16 %v913, %v911
    %v928 = vpack.c.bf16 %v916, %v914
    %v929 = vpack.c.bf16 %v917, %v915
    %v930 = vpack.c.bf16 %v920, %v918
    %v931 = vpack.c.bf16 %v921, %v919
    %942 = vrot.lane.b32.xlu0 %v922, 127
    %v943 = vpop.permute.xlu0 %942
    %944 = vrot.lane.b32.xlu0 %v923, 127
    %v945 = vpop.permute.xlu0 %944
    %946 = vrot.lane.b32.xlu0 %v924, 127
    %v947 = vpop.permute.xlu0 %946
    %948 = vrot.lane.b32.xlu0 %v925, 127
    %v949 = vpop.permute.xlu0 %948
    %950 = vrot.lane.b32.xlu0 %v926, 127
    %v951 = vpop.permute.xlu0 %950
    %952 = vrot.lane.b32.xlu0 %v927, 127
    %v953 = vpop.permute.xlu0 %952
    %954 = vrot.lane.b32.xlu0 %v928, 127
    %v955 = vpop.permute.xlu0 %954
    %956 = vrot.lane.b32.xlu0 %v929, 127
    %v957 = vpop.permute.xlu0 %956
    %958 = vrot.lane.b32.xlu0 %v930, 127
    %v959 = vpop.permute.xlu0 %958
    %960 = vrot.lane.b32.xlu0 %v931, 127
    %v961 = vpop.permute.xlu0 %960
    %vm962 = vcmask 1039360
    %v963 = vsel %vm962, %v943, %v945
    %v964 = vsel %vm962, %v947, %v949
    %v965 = vsel %vm962, %v951, %v953
    %v966 = vsel %vm962, %v955, %v957
    %v967 = vsel %vm962, %v959, %v961
    %v978 = vmax.bf16 %v922, %v963
    %v979 = vmax.bf16 %v923, %v945
    %v980 = vmax.bf16 %v924, %v964
    %v981 = vmax.bf16 %v925, %v949
    %v982 = vmax.bf16 %v926, %v965
    %v983 = vmax.bf16 %v927, %v953
    %v984 = vmax.bf16 %v928, %v966
    %v985 = vmax.bf16 %v929, %v957
    %v986 = vmax.bf16 %v930, %v967
    %v987 = vmax.bf16 %v931, %v961
    %v988 = vld [vmem:[%s3] sm:$0xf]
    %v989 = vld [vmem:[%s3 + $0x4] sm:$0xf]
    %v990 = vld [vmem:[%s3 + $0x8] sm:$0xf]
    %v991 = vld [vmem:[%s3 + $0xc] sm:$0xf]
    %v992 = vld [vmem:[%s3 + $0x10] sm:$0xf]
    %v993 = vld [vmem:[%s3 + $0x14] sm:$0xf]
    %v994 = vld [vmem:[%s3 + $0x18] sm:$0xf]
    %v995 = vld [vmem:[%s3 + $0x1c] sm:$0xf]
    %v996 = vld [vmem:[%s3 + $0x20] sm:$0xf]
    %v997 = vld [vmem:[%s3 + $0x24] sm:$0xf]
    %v998 = vld [vmem:[%s3 + $0x28] sm:$0xf]
    %v999 = vld [vmem:[%s3 + $0x2c] sm:$0xf]
    %v1000 = vld [vmem:[%s3 + $0x30] sm:$0xf]
    %v1001 = vld [vmem:[%s3 + $0x34] sm:$0xf]
    %v1002 = vld [vmem:[%s3 + $0x38] sm:$0xf]
    %v1003 = vld [vmem:[%s3 + $0x3c] sm:$0xf]
    %v1004 = vld [vmem:[%s3 + $0x40] sm:$0xf]
    %v1005 = vld [vmem:[%s3 + $0x44] sm:$0xf]
    %v1006 = vld [vmem:[%s3 + $0x48] sm:$0xf]
    %v1007 = vld [vmem:[%s3 + $0x4c] sm:$0xf]
    %v1008 = vld [vmem:[%s3 + $0x50] sm:$0xf]
    %v1009 = vld [vmem:[%s3 + $0x54] sm:$0xf]
    %v1010 = vld [vmem:[%s3 + $0x58] sm:$0xf]
    %v1011 = vld [vmem:[%s3 + $0x5c] sm:$0xf]
    %v1012 = vld [vmem:[%s3 + $0x60] sm:$0xf]
    %v1013 = vld [vmem:[%s3 + $0x64] sm:$0xf]
    %v1014 = vld [vmem:[%s3 + $0x68] sm:$0xf]
    %v1015 = vld [vmem:[%s3 + $0x6c] sm:$0xf]
    %v1016 = vld [vmem:[%s3 + $0x70] sm:$0xf]
    %v1017 = vld [vmem:[%s3 + $0x74] sm:$0xf]
    %v1048 = vunpack.c.l.b16 %v988
    %v1049 = vunpack.c.l.b16 %v989
    %v1050 = vunpack.c.l.b16 %v990
    %v1051 = vunpack.c.l.b16 %v991
    %v1052 = vunpack.c.l.b16 %v992
    %v1053 = vunpack.c.l.b16 %v993
    %v1054 = vunpack.c.l.b16 %v994
    %v1055 = vunpack.c.l.b16 %v995
    %v1056 = vunpack.c.l.b16 %v996
    %v1057 = vunpack.c.l.b16 %v997
    %v1058 = vunpack.c.l.b16 %v998
    %v1059 = vunpack.c.l.b16 %v999
    %v1060 = vunpack.c.l.b16 %v1000
    %v1061 = vunpack.c.l.b16 %v1001
    %v1062 = vunpack.c.l.b16 %v1002
    %v1063 = vunpack.c.l.b16 %v1003
    %v1064 = vunpack.c.l.b16 %v1004
    %v1065 = vunpack.c.l.b16 %v1005
    %v1066 = vunpack.c.l.b16 %v1006
    %v1067 = vunpack.c.l.b16 %v1007
    %v1068 = vunpack.c.l.b16 %v1008
    %v1069 = vunpack.c.l.b16 %v1009
    %v1070 = vunpack.c.l.b16 %v1010
    %v1071 = vunpack.c.l.b16 %v1011
    %v1072 = vunpack.c.l.b16 %v1012
    %v1073 = vunpack.c.l.b16 %v1013
    %v1074 = vunpack.c.l.b16 %v1014
    %v1075 = vunpack.c.l.b16 %v1015
    %v1076 = vunpack.c.l.b16 %v1016
    %v1077 = vunpack.c.l.b16 %v1017
    %v1078 = vpack.c.b16 %v1049, %v1048
    %v1079 = vpack.c.b16 %v1051, %v1050
    %v1080 = vpack.c.b16 %v1053, %v1052
    %v1081 = vpack.c.b16 %v1055, %v1054
    %v1082 = vpack.c.b16 %v1057, %v1056
    %v1083 = vpack.c.b16 %v1059, %v1058
    %v1084 = vpack.c.b16 %v1061, %v1060
    %v1085 = vpack.c.b16 %v1063, %v1062
    %v1086 = vpack.c.b16 %v1065, %v1064
    %v1087 = vpack.c.b16 %v1067, %v1066
    %v1088 = vpack.c.b16 %v1069, %v1068
    %v1089 = vpack.c.b16 %v1071, %v1070
    %v1090 = vpack.c.b16 %v1073, %v1072
    %v1091 = vpack.c.b16 %v1075, %v1074
    %v1092 = vpack.c.b16 %v1077, %v1076
    %vm1107 = vcmask 908288
    %v1109 = vsel %vm1107, %v979, 0
    %v1112 = vsel %vm1107, %v981, 0
    %v1115 = vsel %vm1107, %v983, 0
    %v1118 = vsel %vm1107, %v985, 0
    %v1121 = vsel %vm1107, %v987, 0
    %vm1123 = vcmask 1046528
    %vm1124 = vcmask 1047552
    %v1125 = vsel %vm1123, 4294967295, 65535
    %v1126 = vsel %vm1124, %v1125, 0
    %v1128 = vand.u32 %v1092, %v1126
    %1130 = vmatprep.subr.bf16.mxu0 0
    %1131 = vmatpush1.bf16.msra.mxu0 %v1078
    %1132 = vmatprep.subr.bf16.mxu0 0
    %1133 = vmatpush1.bf16.msra.mxu0 %v1079
    %1134 = vmatprep.subr.bf16.mxu0 0
    %1135 = vmatpush1.bf16.msra.mxu0 %v1080
    %1136 = vmatprep.subr.bf16.mxu0 0
    %1137 = vmatpush1.bf16.msra.mxu0 %v1081
    %1138 = vmatprep.subr.bf16.mxu0 0
    %1139 = vmatpush1.bf16.msra.mxu0 %v1082
    %1140 = vmatprep.subr.bf16.mxu0 0
    %1141 = vmatpush1.bf16.msra.mxu0 %v1083
    %1142 = vmatprep.subr.bf16.mxu0 0
    %1143 = vmatpush1.bf16.msra.mxu0 %v1084
    %1144 = vmatprep.subr.bf16.mxu0 0
    %1145 = vmatpush1.bf16.msra.mxu0 %v1085
    %1146 = vmatprep.subr.bf16.mxu0 0
    %1147 = vmatpush1.bf16.msra.mxu0 %v1086
    %1148 = vmatprep.subr.bf16.mxu0 0
    %1149 = vmatpush1.bf16.msra.mxu0 %v1087
    %1150 = vmatprep.subr.bf16.mxu0 0
    %1151 = vmatpush1.bf16.msra.mxu0 %v1088
    %1152 = vmatprep.subr.bf16.mxu0 0
    %1153 = vmatpush1.bf16.msra.mxu0 %v1089
    %1154 = vmatprep.subr.bf16.mxu0 0
    %1155 = vmatpush1.bf16.msra.mxu0 %v1090
    %1156 = vmatprep.subr.bf16.mxu0 0
    %1157 = vmatpush1.bf16.msra.mxu0 %v1091
    %1158 = vmatprep.subr.bf16.mxu0 0
    %1159 = vmatpush1.bf16.msra.mxu0 %v1128
    %1160 = vmatprep.subr.bf16.mxu0 0
    %1161 = vmatpush1.bf16.msra.mxu0 0
    %1162 = vmatprep.mubr.bf16.mxu0 %v1109
    %1163 = vmatmul.mubr.bf16.gmra.mrb[0].mxu0 %v978
    %v1164 = vpop.f32.mrb[0].mxu0
    %v1165 = vadd.f32 0.0, %v1164
    %v1166 = vpop.f32.mrb[0].mxu0
    %v1167 = vpop.f32.mrb[0].mxu0
    %v1168 = vadd.f32 0.0, %v1167
    %v1169 = vpop.f32.mrb[0].mxu0
    %1170 = vmatprep.mubr.bf16.mxu0 %v1112
    %1171 = vmatmul.mubr.bf16.gmra.mrb[0].mxu0 %v980
    %v1172 = vpop.f32.mrb[0].mxu0
    %v1173 = vadd.f32 0.0, %v1172
    %v1174 = vpop.f32.mrb[0].mxu0
    %v1175 = vpop.f32.mrb[0].mxu0
    %v1176 = vadd.f32 0.0, %v1175
    %v1177 = vpop.f32.mrb[0].mxu0
    %1178 = vmatprep.mubr.bf16.mxu0 %v1115
    %1179 = vmatmul.mubr.bf16.gmra.mrb[0].mxu0 %v982
    %v1180 = vpop.f32.mrb[0].mxu0
    %v1181 = vadd.f32 0.0, %v1180
    %v1182 = vpop.f32.mrb[0].mxu0
    %v1183 = vpop.f32.mrb[0].mxu0
    %v1184 = vadd.f32 0.0, %v1183
    %v1185 = vpop.f32.mrb[0].mxu0
    %1186 = vmatprep.mubr.bf16.mxu0 %v1118
    %1187 = vmatmul.mubr.bf16.gmra.mrb[0].mxu0 %v984
    %v1188 = vpop.f32.mrb[0].mxu0
    %v1189 = vadd.f32 0.0, %v1188
    %v1190 = vpop.f32.mrb[0].mxu0
    %v1191 = vpop.f32.mrb[0].mxu0
    %v1192 = vadd.f32 0.0, %v1191
    %v1193 = vpop.f32.mrb[0].mxu0
    %1194 = vmatprep.mubr.bf16.mxu0 %v1121
    %1195 = vmatmul.mubr.bf16.gmra.mrb[0].mxu0 %v986
    %v1196 = vpop.f32.mrb[0].mxu0
    %v1197 = vadd.f32 0.0, %v1196
    %v1198 = vpop.f32.mrb[0].mxu0
    %v1199 = vpop.f32.mrb[0].mxu0
    %v1200 = vadd.f32 0.0, %v1199
    %v1201 = vpop.f32.mrb[0].mxu0
    %1202 = vdwg.mxu0
    %vm1213 = vcmask 1045504
    %v1214 = vrot.slane %v1165, 2
    %v1215 = vrot.slane %v1168, 2
    %v1216 = vsel %vm1213, %v1214, %v1215
    %v1217 = vrot.slane %v1173, 2
    %v1218 = vsel %vm1213, %v1215, %v1217
    %v1219 = vrot.slane %v1176, 2
    %v1220 = vsel %vm1213, %v1217, %v1219
    %v1221 = vrot.slane %v1181, 2
    %v1222 = vsel %vm1213, %v1219, %v1221
    %v1223 = vrot.slane %v1184, 2
    %v1224 = vsel %vm1213, %v1221, %v1223
    %v1225 = vrot.slane %v1189, 2
    %v1226 = vsel %vm1213, %v1223, %v1225
    %v1227 = vrot.slane %v1192, 2
    %v1228 = vsel %vm1213, %v1225, %v1227
    %v1229 = vrot.slane %v1197, 2
    %v1230 = vsel %vm1213, %v1227, %v1229
    %v1231 = vrot.slane %v1200, 2
    %v1232 = vsel %vm1213, %v1229, %v1231
    %v1243 = vmax.f32 %v1165, %v1216
    %v1244 = vmax.f32 %v1168, %v1218
    %v1245 = vmax.f32 %v1173, %v1220
    %v1246 = vmax.f32 %v1176, %v1222
    %v1247 = vmax.f32 %v1181, %v1224
    %v1248 = vmax.f32 %v1184, %v1226
    %v1249 = vmax.f32 %v1189, %v1228
    %v1250 = vmax.f32 %v1192, %v1230
    %v1251 = vmax.f32 %v1197, %v1232
    %v1252 = vmax.f32 %v1200, %v1231
    %v1253 = vld [vmem:[%s4] sm:$0xf]
    %v1254 = vld [vmem:[%s4 + $0x4] sm:$0xf]
    %v1255 = vld [vmem:[%s4 + $0x8] sm:$0xf]
    %v1256 = vld [vmem:[%s4 + $0xc] sm:$0xf]
    %v1257 = vld [vmem:[%s4 + $0x10] sm:$0xf]
    %v1258 = vpack.c.bf16 %v1244, %v1243
    %v1259 = vpack.c.bf16 %v1246, %v1245
    %v1260 = vpack.c.bf16 %v1248, %v1247
    %v1261 = vpack.c.bf16 %v1250, %v1249
    %v1262 = vpack.c.bf16 %v1252, %v1251
    %v1268 = vunpack.c.l.b16 %v1253
    %v1269 = vunpack.c.l.b16 %v1254
    %v1270 = vunpack.c.l.b16 %v1255
    %v1271 = vunpack.c.l.b16 %v1256
    %v1272 = vunpack.c.l.b16 %v1257
    %v1273 = vpack.c.b16 %v1269, %v1268
    %v1274 = vpack.c.b16 %v1271, %v1270
    %v1275 = vpack.c.b16 %v1272, %v1272
    %vm1276 = vcmask 637952
    %v1278 = vsel %vm1276, %v1273, 0
    %v1281 = vsel %vm1276, %v1274, 0
    %v1284 = vsel %vm1276, %v1275, 0
    %v1287 = vsel %vm1123, %v1262, 0
    %1289 = vmatprep.subr.bf16.mxu0 0
    %1290 = vmatpush1.bf16.msra.mxu0 %v1258
    %1291 = vmatprep.subr.bf16.mxu0 0
    %1292 = vmatpush1.bf16.msra.mxu0 %v1259
    %1293 = vmatprep.subr.bf16.mxu0 0
    %1294 = vmatpush1.bf16.msra.mxu0 %v1260
    %1295 = vmatprep.subr.bf16.mxu0 0
    %1296 = vmatpush1.bf16.msra.mxu0 %v1261
    %1297 = vmatprep.subr.bf16.mxu0 0
    %1298 = vmatpush1.bf16.msra.mxu0 %v1287
    %1299 = vmatprep.subr.bf16.mxu0 0
    %1300 = vmatpush1.bf16.msra.mxu0 0
    %1301 = vmatprep.subr.bf16.mxu0 0
    %1302 = vmatpush1.bf16.msra.mxu0 0
    %1303 = vmatprep.subr.bf16.mxu0 0
    %1304 = vmatpush1.bf16.msra.mxu0 0
    %1305 = vmatprep.subr.bf16.mxu0 0
    %1306 = vmatpush1.bf16.msra.mxu0 0
    %1307 = vmatprep.subr.bf16.mxu0 0
    %1308 = vmatpush1.bf16.msra.mxu0 0
    %1309 = vmatprep.subr.bf16.mxu0 0
    %1310 = vmatpush1.bf16.msra.mxu0 0
    %1311 = vmatprep.subr.bf16.mxu0 0
    %1312 = vmatpush1.bf16.msra.mxu0 0
    %1313 = vmatprep.subr.bf16.mxu0 0
    %1314 = vmatpush1.bf16.msra.mxu0 0
    %1315 = vmatprep.subr.bf16.mxu0 0
    %1316 = vmatpush1.bf16.msra.mxu0 0
    %1317 = vmatprep.subr.bf16.mxu0 0
    %1318 = vmatpush1.bf16.msra.mxu0 0
    %1319 = vmatprep.subr.bf16.mxu0 0
    %1320 = vmatpush1.bf16.msra.mxu0 0
    %1321 = vmatprep.mubr.bf16.mxu0 0
    %1322 = vmatmul.mubr.bf16.gmra.mrb[0].mxu0 %v1278
    %v1323 = vpop.f32.mrb[0].mxu0
    %v1324 = vadd.f32 0.0, %v1323
    %v1325 = vpop.f32.mrb[0].mxu0
    %v1326 = vpop.f32.mrb[0].mxu0
    %v1327 = vadd.f32 0.0, %v1326
    %v1328 = vpop.f32.mrb[0].mxu0
    %1329 = vmatprep.mubr.bf16.mxu0 0
    %1330 = vmatmul.mubr.bf16.gmra.mrb[0].mxu0 %v1281
    %v1331 = vpop.f32.mrb[0].mxu0
    %v1332 = vadd.f32 0.0, %v1331
    %v1333 = vpop.f32.mrb[0].mxu0
    %v1334 = vpop.f32.mrb[0].mxu0
    %v1335 = vadd.f32 0.0, %v1334
    %v1336 = vpop.f32.mrb[0].mxu0
    %1337 = vmatprep.mubr.bf16.mxu0 0
    %1338 = vmatmul.mubr.bf16.gmra.mrb[0].mxu0 %v1284
    %v1339 = vpop.f32.mrb[0].mxu0
    %v1340 = vadd.f32 0.0, %v1339
    %v1341 = vpop.f32.mrb[0].mxu0
    %v1342 = vpop.f32.mrb[0].mxu0
    %v1343 = vpop.f32.mrb[0].mxu0
    %1344 = vdwg.mxu0
    %v1345 = vpack.c.bf16 %v1327, %v1324
    %v1346 = vpack.c.bf16 %v1335, %v1332
    %v1347 = vpack.c.bf16 %v1340, %v1340
    %vm1351 = vcmask 1046528
    %v1352 = vrot.slane %v1345, 1
    %v1353 = vrot.slane %v1346, 1
    %v1354 = vsel %vm1351, %v1352, %v1353
    %v1355 = vrot.slane %v1347, 1
    %v1356 = vsel %vm1351, %v1353, %v1355
    %v1360 = vld [vmem:[%s5] sm:$0xff]
    %v1361 = vld [vmem:[%s5 + $0x8] sm:$0xff]
    %v1362 = vld [vmem:[%s5 + $0x10] sm:$0xff]
    %v1363 = vld [vmem:[%s5 + $0x18] sm:$0xff]
    %v1364 = vld [vmem:[%s5 + $0x20] sm:$0xff]
    %v1365 = vld [vmem:[%s5 + $0x28] sm:$0xff]
    %v1366 = vld [vmem:[%s5 + $0x30] sm:$0xff]
    %v1367 = vld [vmem:[%s5 + $0x38] sm:$0xff]
    %v1368 = vld [vmem:[%s5 + $0x40] sm:$0xff]
    %v1369 = vld [vmem:[%s5 + $0x48] sm:$0xff]
    %v1370 = vld [vmem:[%s5 + $0x50] sm:$0xff]
    %v1371 = vld [vmem:[%s5 + $0x58] sm:$0xff]
    %v1372 = vld [vmem:[%s5 + $0x60] sm:$0xff]
    %v1373 = vld [vmem:[%s5 + $0x68] sm:$0xff]
    %v1374 = vld [vmem:[%s5 + $0x70] sm:$0xff]
    %v1375 = vld [vmem:[%s5 + $0x78] sm:$0xff]
    %v1376 = vld [vmem:[%s5 + $0x80] sm:$0xff]
    %v1377 = vld [vmem:[%s5 + $0x88] sm:$0xff]
    %v1378 = vld [vmem:[%s5 + $0x90] sm:$0xff]
    %v1379 = vld [vmem:[%s5 + $0x98] sm:$0xff]
    %v1380 = vld [vmem:[%s5 + $0xa0] sm:$0xff]
    %v1381 = vld [vmem:[%s5 + $0xa8] sm:$0xff]
    %v1382 = vld [vmem:[%s5 + $0xb0] sm:$0xff]
    %v1383 = vld [vmem:[%s5 + $0xb8] sm:$0xff]
    %v1384 = vld [vmem:[%s5 + $0xc0] sm:$0xff]
    %v1385 = vld [vmem:[%s5 + $0xc8] sm:$0xff]
    %v1386 = vld [vmem:[%s5 + $0xd0] sm:$0xff]
    %v1387 = vld [vmem:[%s5 + $0xd8] sm:$0xff]
    %v1388 = vld [vmem:[%s5 + $0xe0] sm:$0xff]
    %v1389 = vld [vmem:[%s5 + $0xe8] sm:$0xff]
    %v1390 = vld [vmem:[%s5 + $0xf0] sm:$0xff]
    %v1391 = vld [vmem:[%s5 + $0xf8] sm:$0xff]
    %s1392 = scalar_lea.vmem %s5, 256
    %v1393 = vld [vmem:[%s1392] sm:$0xff]
    %v1394 = vld [vmem:[%s1392 + $0x8] sm:$0xff]
    %v1395 = vld [vmem:[%s1392 + $0x10] sm:$0xff]
    %v1396 = vld [vmem:[%s1392 + $0x18] sm:$0xff]
    %v1397 = vld [vmem:[%s1392 + $0x20] sm:$0xff]
    %v1398 = vld [vmem:[%s1392 + $0x28] sm:$0xff]
    %v1399 = vld [vmem:[%s1392 + $0x30] sm:$0xff]
    %v1400 = vld [vmem:[%s1392 + $0x38] sm:$0xff]
    %v1401 = vld [vmem:[%s1392 + $0x40] sm:$0xff]
    %v1402 = vld [vmem:[%s1392 + $0x48] sm:$0xff]
    %v1403 = vld [vmem:[%s1392 + $0x50] sm:$0xff]
    %v1404 = vld [vmem:[%s1392 + $0x58] sm:$0xff]
    %v1405 = vld [vmem:[%s1392 + $0x60] sm:$0xff]
    %v1406 = vld [vmem:[%s1392 + $0x68] sm:$0xff]
    %v1407 = vld [vmem:[%s1392 + $0x70] sm:$0xff]
    %v1408 = vld [vmem:[%s1392 + $0x78] sm:$0xff]
    %v1409 = vld [vmem:[%s1392 + $0x80] sm:$0xff]
    %v1410 = vld [vmem:[%s1392 + $0x88] sm:$0xff]
    %v1411 = vld [vmem:[%s1392 + $0x90] sm:$0xff]
    %v1412 = vld [vmem:[%s1392 + $0x98] sm:$0xff]
    %v1413 = vld [vmem:[%s1392 + $0xa0] sm:$0xff]
    %v1414 = vld [vmem:[%s1392 + $0xa8] sm:$0xff]
    %v1415 = vld [vmem:[%s1392 + $0xb0] sm:$0xff]
    %v1416 = vld [vmem:[%s1392 + $0xb8] sm:$0xff]
    %v1417 = vld [vmem:[%s1392 + $0xc0] sm:$0xff]
    %v1418 = vld [vmem:[%s1392 + $0xc8] sm:$0xff]
    %v1419 = vld [vmem:[%s1392 + $0xd0] sm:$0xff]
    %v1420 = vld [vmem:[%s1392 + $0xd8] sm:$0xff]
    %v1421 = vld [vmem:[%s1392 + $0xe0] sm:$0xff]
    %v1422 = vld [vmem:[%s1392 + $0xe8] sm:$0xff]
    %v1423 = vld [vmem:[%s1392 + $0xf0] sm:$0xff]
    %v1424 = vld [vmem:[%s1392 + $0xf8] sm:$0xff]
    %vm1425 = vcmask 1045504
    %v1426 = vrot.slane %v1345, 2
    %v1427 = vrot.slane %v1346, 2
    %v1428 = vsel %vm1425, %v1426, %v1427
    %v1429 = vrot.slane %v1354, 2
    %v1430 = vrot.slane %v1356, 2
    %v1431 = vsel %vm1425, %v1429, %v1430
    %v1468 = vunpack.c.l.b16 %v1393
    %v1469 = vunpack.c.h.b16 %v1393
    %v1470 = vunpack.c.l.b16 %v1394
    %v1471 = vunpack.c.h.b16 %v1394
    %v1472 = vunpack.c.l.b16 %v1395
    %v1473 = vunpack.c.h.b16 %v1395
    %v1474 = vunpack.c.l.b16 %v1396
    %v1475 = vunpack.c.h.b16 %v1396
    %v1476 = vunpack.c.l.b16 %v1397
    %v1477 = vunpack.c.h.b16 %v1397
    %v1478 = vunpack.c.l.b16 %v1398
    %v1479 = vunpack.c.h.b16 %v1398
    %v1480 = vunpack.c.l.b16 %v1399
    %v1481 = vunpack.c.h.b16 %v1399
    %v1482 = vunpack.c.l.b16 %v1400
    %v1483 = vunpack.c.h.b16 %v1400
    %v1484 = vunpack.c.l.b16 %v1401
    %v1485 = vunpack.c.h.b16 %v1401
    %v1486 = vunpack.c.l.b16 %v1402
    %v1487 = vunpack.c.h.b16 %v1402
    %v1488 = vunpack.c.l.b16 %v1403
    %v1489 = vunpack.c.h.b16 %v1403
    %v1490 = vunpack.c.l.b16 %v1404
    %v1491 = vunpack.c.h.b16 %v1404
    %v1492 = vunpack.c.l.b16 %v1405
    %v1493 = vunpack.c.h.b16 %v1405
    %v1494 = vunpack.c.l.b16 %v1406
    %v1495 = vunpack.c.h.b16 %v1406
    %v1496 = vunpack.c.l.b16 %v1407
    %v1497 = vunpack.c.h.b16 %v1407
    %v1498 = vunpack.c.l.b16 %v1408
    %v1499 = vunpack.c.h.b16 %v1408
    %v1500 = vunpack.c.l.b16 %v1409
    %v1501 = vunpack.c.h.b16 %v1409
    %v1502 = vunpack.c.l.b16 %v1410
    %v1503 = vunpack.c.h.b16 %v1410
    %v1504 = vunpack.c.l.b16 %v1411
    %v1505 = vunpack.c.h.b16 %v1411
    %v1506 = vunpack.c.l.b16 %v1412
    %v1507 = vunpack.c.h.b16 %v1412
    %v1508 = vunpack.c.l.b16 %v1413
    %v1509 = vunpack.c.h.b16 %v1413
    %v1510 = vunpack.c.l.b16 %v1414
    %v1511 = vunpack.c.h.b16 %v1414
    %v1512 = vunpack.c.l.b16 %v1415
    %v1513 = vunpack.c.h.b16 %v1415
    %v1514 = vunpack.c.l.b16 %v1416
    %v1515 = vunpack.c.h.b16 %v1416
    %v1516 = vunpack.c.l.b16 %v1417
    %v1517 = vunpack.c.h.b16 %v1417
    %v1518 = vunpack.c.l.b16 %v1418
    %v1519 = vunpack.c.h.b16 %v1418
    %v1520 = vunpack.c.l.b16 %v1419
    %v1521 = vunpack.c.h.b16 %v1419
    %v1522 = vunpack.c.l.b16 %v1420
    %v1523 = vunpack.c.h.b16 %v1420
    %v1524 = vunpack.c.l.b16 %v1421
    %v1525 = vunpack.c.h.b16 %v1421
    %v1526 = vunpack.c.l.b16 %v1422
    %v1527 = vunpack.c.h.b16 %v1422
    %v1528 = vunpack.c.l.b16 %v1423
    %v1529 = vunpack.c.h.b16 %v1423
    %v1530 = vunpack.c.l.b16 %v1424
    %v1531 = vunpack.c.h.b16 %v1424
    %v1532 = vpack.c.b16 %v1470, %v1468
    %v1533 = vpack.c.b16 %v1471, %v1469
    %v1534 = vpack.c.b16 %v1474, %v1472
    %v1535 = vpack.c.b16 %v1475, %v1473
    %v1536 = vpack.c.b16 %v1478, %v1476
    %v1537 = vpack.c.b16 %v1479, %v1477
    %v1538 = vpack.c.b16 %v1482, %v1480
    %v1539 = vpack.c.b16 %v1483, %v1481
    %v1540 = vpack.c.b16 %v1486, %v1484
    %v1541 = vpack.c.b16 %v1487, %v1485
    %v1542 = vpack.c.b16 %v1490, %v1488
    %v1543 = vpack.c.b16 %v1491, %v1489
    %v1544 = vpack.c.b16 %v1494, %v1492
    %v1545 = vpack.c.b16 %v1495, %v1493
    %v1546 = vpack.c.b16 %v1498, %v1496
    %v1547 = vpack.c.b16 %v1499, %v1497
    %v1548 = vpack.c.b16 %v1502, %v1500
    %v1549 = vpack.c.b16 %v1503, %v1501
    %v1550 = vpack.c.b16 %v1506, %v1504
    %v1551 = vpack.c.b16 %v1507, %v1505
    %v1552 = vpack.c.b16 %v1510, %v1508
    %v1553 = vpack.c.b16 %v1511, %v1509
    %v1554 = vpack.c.b16 %v1514, %v1512
    %v1555 = vpack.c.b16 %v1515, %v1513
    %v1556 = vpack.c.b16 %v1518, %v1516
    %v1557 = vpack.c.b16 %v1519, %v1517
    %v1558 = vpack.c.b16 %v1522, %v1520
    %v1559 = vpack.c.b16 %v1523, %v1521
    %v1560 = vpack.c.b16 %v1526, %v1524
    %v1561 = vpack.c.b16 %v1527, %v1525
    %v1562 = vpack.c.b16 %v1530, %v1528
    %v1563 = vpack.c.b16 %v1531, %v1529
    %1596 = vmatprep.subr.bf16.mxu0 %v1533
    %1597 = vmatpush1.bf16.msra.mxu0 %v1532
    %1598 = vmatprep.subr.bf16.mxu0 %v1535
    %1599 = vmatpush1.bf16.msra.mxu0 %v1534
    %1600 = vmatprep.subr.bf16.mxu0 %v1537
    %1601 = vmatpush1.bf16.msra.mxu0 %v1536
    %1602 = vmatprep.subr.bf16.mxu0 %v1539
    %1603 = vmatpush1.bf16.msra.mxu0 %v1538
    %1604 = vmatprep.subr.bf16.mxu0 %v1541
    %1605 = vmatpush1.bf16.msra.mxu0 %v1540
    %1606 = vmatprep.subr.bf16.mxu0 %v1543
    %1607 = vmatpush1.bf16.msra.mxu0 %v1542
    %1608 = vmatprep.subr.bf16.mxu0 %v1545
    %1609 = vmatpush1.bf16.msra.mxu0 %v1544
    %1610 = vmatprep.subr.bf16.mxu0 %v1547
    %1611 = vmatpush1.bf16.msra.mxu0 %v1546
    %1612 = vmatprep.subr.bf16.mxu0 %v1549
    %1613 = vmatpush1.bf16.msra.mxu0 %v1548
    %1614 = vmatprep.subr.bf16.mxu0 %v1551
    %1615 = vmatpush1.bf16.msra.mxu0 %v1550
    %1616 = vmatprep.subr.bf16.mxu0 %v1553
    %1617 = vmatpush1.bf16.msra.mxu0 %v1552
    %1618 = vmatprep.subr.bf16.mxu0 %v1555
    %1619 = vmatpush1.bf16.msra.mxu0 %v1554
    %1620 = vmatprep.subr.bf16.mxu0 %v1557
    %1621 = vmatpush1.bf16.msra.mxu0 %v1556
    %1622 = vmatprep.subr.bf16.mxu0 %v1559
    %1623 = vmatpush1.bf16.msra.mxu0 %v1558
    %1624 = vmatprep.subr.bf16.mxu0 %v1561
    %1625 = vmatpush1.bf16.msra.mxu0 %v1560
    %1626 = vmatprep.subr.bf16.mxu0 %v1563
    %1627 = vmatpush1.bf16.msra.mxu0 %v1562
    %1628 = vmatprep.mubr.bf16.mxu0 %v1431
    %1629 = vmatmul.mubr.bf16.gmra.mrb[0].mxu0 %v1428
    %v1630 = vpop.f32.mrb[0].mxu0
    %v1631 = vadd.f32 0.0, %v1630
    %v1632 = vpop.f32.mrb[0].mxu0
    %v1633 = vadd.f32 0.0, %v1632
    %v1634 = vpop.f32.mrb[0].mxu0
    %v1635 = vadd.f32 0.0, %v1634
    %v1636 = vpop.f32.mrb[0].mxu0
    %v1637 = vadd.f32 0.0, %v1636
    %1638 = vmatprep.mubr.bf16.mxu0 %v1430
    %1639 = vmatmul.mubr.bf16.gmra.mrb[0].mxu0 %v1427
    %v1640 = vpop.f32.mrb[0].mxu0
    %v1641 = vadd.f32 0.0, %v1640
    %v1642 = vpop.f32.mrb[0].mxu0
    %v1643 = vadd.f32 0.0, %v1642
    %v1644 = vpop.f32.mrb[0].mxu0
    %v1645 = vpop.f32.mrb[0].mxu0
    %1646 = vdwg.mxu0
    %s1647 = scalar_lea.vmem %s5, 512
    %v1648 = vld [vmem:[%s1647] sm:$0xff]
    %v1649 = vld [vmem:[%s1647 + $0x8] sm:$0xff]
    %v1650 = vld [vmem:[%s1647 + $0x10] sm:$0xff]
    %v1651 = vld [vmem:[%s1647 + $0x18] sm:$0xff]
    %v1652 = vld [vmem:[%s1647 + $0x20] sm:$0xff]
    %v1653 = vld [vmem:[%s1647 + $0x28] sm:$0xff]
    %v1654 = vld [vmem:[%s1647 + $0x30] sm:$0xff]
    %v1655 = vld [vmem:[%s1647 + $0x38] sm:$0xff]
    %v1656 = vld [vmem:[%s1647 + $0x40] sm:$0xff]
    %v1657 = vld [vmem:[%s1647 + $0x48] sm:$0xff]
    %v1658 = vld [vmem:[%s1647 + $0x50] sm:$0xff]
    %v1659 = vld [vmem:[%s1647 + $0x58] sm:$0xff]
    %v1660 = vld [vmem:[%s1647 + $0x60] sm:$0xff]
    %v1661 = vld [vmem:[%s1647 + $0x68] sm:$0xff]
    %v1662 = vld [vmem:[%s1647 + $0x70] sm:$0xff]
    %v1663 = vld [vmem:[%s1647 + $0x78] sm:$0xff]
    %v1664 = vld [vmem:[%s1647 + $0x80] sm:$0xff]
    %v1665 = vld [vmem:[%s1647 + $0x88] sm:$0xff]
    %v1666 = vld [vmem:[%s1647 + $0x90] sm:$0xff]
    %v1667 = vld [vmem:[%s1647 + $0x98] sm:$0xff]
    %v1668 = vld [vmem:[%s1647 + $0xa0] sm:$0xff]
    %v1669 = vld [vmem:[%s1647 + $0xa8] sm:$0xff]
    %v1670 = vld [vmem:[%s1647 + $0xb0] sm:$0xff]
    %v1671 = vld [vmem:[%s1647 + $0xb8] sm:$0xff]
    %v1672 = vld [vmem:[%s1647 + $0xc0] sm:$0xff]
    %v1673 = vld [vmem:[%s1647 + $0xc8] sm:$0xff]
    %v1674 = vld [vmem:[%s1647 + $0xd0] sm:$0xff]
    %v1675 = vld [vmem:[%s1647 + $0xd8] sm:$0xff]
    %v1676 = vld [vmem:[%s1647 + $0xe0] sm:$0xff]
    %v1677 = vld [vmem:[%s1647 + $0xe8] sm:$0xff]
    %v1678 = vld [vmem:[%s1647 + $0xf0] sm:$0xff]
    %v1679 = vld [vmem:[%s1647 + $0xf8] sm:$0xff]
    %s1680 = scalar_lea.vmem %s5, 768
    %v1681 = vld [vmem:[%s1680] sm:$0xff]
    %v1682 = vld [vmem:[%s1680 + $0x8] sm:$0xff]
    %v1683 = vld [vmem:[%s1680 + $0x10] sm:$0xff]
    %v1684 = vld [vmem:[%s1680 + $0x18] sm:$0xff]
    %v1685 = vld [vmem:[%s1680 + $0x20] sm:$0xff]
    %v1686 = vld [vmem:[%s1680 + $0x28] sm:$0xff]
    %v1687 = vld [vmem:[%s1680 + $0x30] sm:$0xff]
    %v1688 = vld [vmem:[%s1680 + $0x38] sm:$0xff]
    %v1689 = vld [vmem:[%s1680 + $0x40] sm:$0xff]
    %v1690 = vld [vmem:[%s1680 + $0x48] sm:$0xff]
    %v1691 = vld [vmem:[%s1680 + $0x50] sm:$0xff]
    %v1692 = vld [vmem:[%s1680 + $0x58] sm:$0xff]
    %v1693 = vld [vmem:[%s1680 + $0x60] sm:$0xff]
    %v1694 = vld [vmem:[%s1680 + $0x68] sm:$0xff]
    %v1695 = vld [vmem:[%s1680 + $0x70] sm:$0xff]
    %v1696 = vld [vmem:[%s1680 + $0x78] sm:$0xff]
    %v1697 = vld [vmem:[%s1680 + $0x80] sm:$0xff]
    %v1698 = vld [vmem:[%s1680 + $0x88] sm:$0xff]
    %v1699 = vld [vmem:[%s1680 + $0x90] sm:$0xff]
    %v1700 = vld [vmem:[%s1680 + $0x98] sm:$0xff]
    %v1701 = vld [vmem:[%s1680 + $0xa0] sm:$0xff]
    %v1702 = vld [vmem:[%s1680 + $0xa8] sm:$0xff]
    %v1703 = vld [vmem:[%s1680 + $0xb0] sm:$0xff]
    %v1704 = vld [vmem:[%s1680 + $0xb8] sm:$0xff]
    %v1705 = vld [vmem:[%s1680 + $0xc0] sm:$0xff]
    %v1706 = vld [vmem:[%s1680 + $0xc8] sm:$0xff]
    %v1707 = vld [vmem:[%s1680 + $0xd0] sm:$0xff]
    %v1708 = vld [vmem:[%s1680 + $0xd8] sm:$0xff]
    %v1709 = vld [vmem:[%s1680 + $0xe0] sm:$0xff]
    %v1710 = vld [vmem:[%s1680 + $0xe8] sm:$0xff]
    %v1711 = vld [vmem:[%s1680 + $0xf0] sm:$0xff]
    %v1712 = vld [vmem:[%s1680 + $0xf8] sm:$0xff]
    %vm1713 = vcmask 1041408
    %v1714 = vrot.slane %v1345, 6
    %v1715 = vrot.slane %v1346, 6
    %v1716 = vsel %vm1713, %v1714, %v1715
    %v1717 = vrot.slane %v1354, 6
    %v1718 = vrot.slane %v1356, 6
    %v1719 = vsel %vm1713, %v1717, %v1718
    %v1756 = vunpack.c.l.b16 %v1681
    %v1757 = vunpack.c.h.b16 %v1681
    %v1758 = vunpack.c.l.b16 %v1682
    %v1759 = vunpack.c.h.b16 %v1682
    %v1760 = vunpack.c.l.b16 %v1683
    %v1761 = vunpack.c.h.b16 %v1683
    %v1762 = vunpack.c.l.b16 %v1684
    %v1763 = vunpack.c.h.b16 %v1684
    %v1764 = vunpack.c.l.b16 %v1685
    %v1765 = vunpack.c.h.b16 %v1685
    %v1766 = vunpack.c.l.b16 %v1686
    %v1767 = vunpack.c.h.b16 %v1686
    %v1768 = vunpack.c.l.b16 %v1687
    %v1769 = vunpack.c.h.b16 %v1687
    %v1770 = vunpack.c.l.b16 %v1688
    %v1771 = vunpack.c.h.b16 %v1688
    %v1772 = vunpack.c.l.b16 %v1689
    %v1773 = vunpack.c.h.b16 %v1689
    %v1774 = vunpack.c.l.b16 %v1690
    %v1775 = vunpack.c.h.b16 %v1690
    %v1776 = vunpack.c.l.b16 %v1691
    %v1777 = vunpack.c.h.b16 %v1691
    %v1778 = vunpack.c.l.b16 %v1692
    %v1779 = vunpack.c.h.b16 %v1692
    %v1780 = vunpack.c.l.b16 %v1693
    %v1781 = vunpack.c.h.b16 %v1693
    %v1782 = vunpack.c.l.b16 %v1694
    %v1783 = vunpack.c.h.b16 %v1694
    %v1784 = vunpack.c.l.b16 %v1695
    %v1785 = vunpack.c.h.b16 %v1695
    %v1786 = vunpack.c.l.b16 %v1696
    %v1787 = vunpack.c.h.b16 %v1696
    %v1788 = vunpack.c.l.b16 %v1697
    %v1789 = vunpack.c.h.b16 %v1697
    %v1790 = vunpack.c.l.b16 %v1698
    %v1791 = vunpack.c.h.b16 %v1698
    %v1792 = vunpack.c.l.b16 %v1699
    %v1793 = vunpack.c.h.b16 %v1699
    %v1794 = vunpack.c.l.b16 %v1700
    %v1795 = vunpack.c.h.b16 %v1700
    %v1796 = vunpack.c.l.b16 %v1701
    %v1797 = vunpack.c.h.b16 %v1701
    %v1798 = vunpack.c.l.b16 %v1702
    %v1799 = vunpack.c.h.b16 %v1702
    %v1800 = vunpack.c.l.b16 %v1703
    %v1801 = vunpack.c.h.b16 %v1703
    %v1802 = vunpack.c.l.b16 %v1704
    %v1803 = vunpack.c.h.b16 %v1704
    %v1804 = vunpack.c.l.b16 %v1705
    %v1805 = vunpack.c.h.b16 %v1705
    %v1806 = vunpack.c.l.b16 %v1706
    %v1807 = vunpack.c.h.b16 %v1706
    %v1808 = vunpack.c.l.b16 %v1707
    %v1809 = vunpack.c.h.b16 %v1707
    %v1810 = vunpack.c.l.b16 %v1708
    %v1811 = vunpack.c.h.b16 %v1708
    %v1812 = vunpack.c.l.b16 %v1709
    %v1813 = vunpack.c.h.b16 %v1709
    %v1814 = vunpack.c.l.b16 %v1710
    %v1815 = vunpack.c.h.b16 %v1710
    %v1816 = vunpack.c.l.b16 %v1711
    %v1817 = vunpack.c.h.b16 %v1711
    %v1818 = vunpack.c.l.b16 %v1712
    %v1819 = vunpack.c.h.b16 %v1712
    %v1820 = vpack.c.b16 %v1758, %v1756
    %v1821 = vpack.c.b16 %v1759, %v1757
    %v1822 = vpack.c.b16 %v1762, %v1760
    %v1823 = vpack.c.b16 %v1763, %v1761
    %v1824 = vpack.c.b16 %v1766, %v1764
    %v1825 = vpack.c.b16 %v1767, %v1765
    %v1826 = vpack.c.b16 %v1770, %v1768
    %v1827 = vpack.c.b16 %v1771, %v1769
    %v1828 = vpack.c.b16 %v1774, %v1772
    %v1829 = vpack.c.b16 %v1775, %v1773
    %v1830 = vpack.c.b16 %v1778, %v1776
    %v1831 = vpack.c.b16 %v1779, %v1777
    %v1832 = vpack.c.b16 %v1782, %v1780
    %v1833 = vpack.c.b16 %v1783, %v1781
    %v1834 = vpack.c.b16 %v1786, %v1784
    %v1835 = vpack.c.b16 %v1787, %v1785
    %v1836 = vpack.c.b16 %v1790, %v1788
    %v1837 = vpack.c.b16 %v1791, %v1789
    %v1838 = vpack.c.b16 %v1794, %v1792
    %v1839 = vpack.c.b16 %v1795, %v1793
    %v1840 = vpack.c.b16 %v1798, %v1796
    %v1841 = vpack.c.b16 %v1799, %v1797
    %v1842 = vpack.c.b16 %v1802, %v1800
    %v1843 = vpack.c.b16 %v1803, %v1801
    %v1844 = vpack.c.b16 %v1806, %v1804
    %v1845 = vpack.c.b16 %v1807, %v1805
    %v1846 = vpack.c.b16 %v1810, %v1808
    %v1847 = vpack.c.b16 %v1811, %v1809
    %v1848 = vpack.c.b16 %v1814, %v1812
    %v1849 = vpack.c.b16 %v1815, %v1813
    %v1850 = vpack.c.b16 %v1818, %v1816
    %v1851 = vpack.c.b16 %v1819, %v1817
    %1884 = vmatprep.subr.bf16.mxu0 %v1821
    %1885 = vmatpush1.bf16.msra.mxu0 %v1820
    %1886 = vmatprep.subr.bf16.mxu0 %v1823
    %1887 = vmatpush1.bf16.msra.mxu0 %v1822
    %1888 = vmatprep.subr.bf16.mxu0 %v1825
    %1889 = vmatpush1.bf16.msra.mxu0 %v1824
    %1890 = vmatprep.subr.bf16.mxu0 %v1827
    %1891 = vmatpush1.bf16.msra.mxu0 %v1826
    %1892 = vmatprep.subr.bf16.mxu0 %v1829
    %1893 = vmatpush1.bf16.msra.mxu0 %v1828
    %1894 = vmatprep.subr.bf16.mxu0 %v1831
    %1895 = vmatpush1.bf16.msra.mxu0 %v1830
    %1896 = vmatprep.subr.bf16.mxu0 %v1833
    %1897 = vmatpush1.bf16.msra.mxu0 %v1832
    %1898 = vmatprep.subr.bf16.mxu0 %v1835
    %1899 = vmatpush1.bf16.msra.mxu0 %v1834
    %1900 = vmatprep.subr.bf16.mxu0 %v1837
    %1901 = vmatpush1.bf16.msra.mxu0 %v1836
    %1902 = vmatprep.subr.bf16.mxu0 %v1839
    %1903 = vmatpush1.bf16.msra.mxu0 %v1838
    %1904 = vmatprep.subr.bf16.mxu0 %v1841
    %1905 = vmatpush1.bf16.msra.mxu0 %v1840
    %1906 = vmatprep.subr.bf16.mxu0 %v1843
    %1907 = vmatpush1.bf16.msra.mxu0 %v1842
    %1908 = vmatprep.subr.bf16.mxu0 %v1845
    %1909 = vmatpush1.bf16.msra.mxu0 %v1844
    %1910 = vmatprep.subr.bf16.mxu0 %v1847
    %1911 = vmatpush1.bf16.msra.mxu0 %v1846
    %1912 = vmatprep.subr.bf16.mxu0 %v1849
    %1913 = vmatpush1.bf16.msra.mxu0 %v1848
    %1914 = vmatprep.subr.bf16.mxu0 %v1851
    %1915 = vmatpush1.bf16.msra.mxu0 %v1850
    %1916 = vmatprep.mubr.bf16.mxu0 %v1719
    %1917 = vmatmul.mubr.bf16.gmra.mrb[0].mxu0 %v1716
    %v1918 = vpop.f32.mrb[0].mxu0
    %v1919 = vadd.f32 0.0, %v1918
    %v1920 = vpop.f32.mrb[0].mxu0
    %v1921 = vadd.f32 0.0, %v1920
    %v1922 = vpop.f32.mrb[0].mxu0
    %v1923 = vadd.f32 0.0, %v1922
    %v1924 = vpop.f32.mrb[0].mxu0
    %v1925 = vadd.f32 0.0, %v1924
    %1926 = vmatprep.mubr.bf16.mxu0 %v1718
    %1927 = vmatmul.mubr.bf16.gmra.mrb[0].mxu0 %v1715
    %v1928 = vpop.f32.mrb[0].mxu0
    %v1929 = vadd.f32 0.0, %v1928
    %v1930 = vpop.f32.mrb[0].mxu0
    %v1931 = vadd.f32 0.0, %v1930
    %v1932 = vpop.f32.mrb[0].mxu0
    %v1933 = vpop.f32.mrb[0].mxu0
    %1934 = vdwg.mxu0
    %s1935 = scalar_lea.vmem %s5, 1024
    %v1936 = vld [vmem:[%s1935] sm:$0xff]
    %v1937 = vld [vmem:[%s1935 + $0x8] sm:$0xff]
    %v1938 = vld [vmem:[%s1935 + $0x10] sm:$0xff]
    %v1939 = vld [vmem:[%s1935 + $0x18] sm:$0xff]
    %v1940 = vld [vmem:[%s1935 + $0x20] sm:$0xff]
    %v1941 = vld [vmem:[%s1935 + $0x28] sm:$0xff]
    %v1942 = vld [vmem:[%s1935 + $0x30] sm:$0xff]
    %v1943 = vld [vmem:[%s1935 + $0x38] sm:$0xff]
    %v1944 = vld [vmem:[%s1935 + $0x40] sm:$0xff]
    %v1945 = vld [vmem:[%s1935 + $0x48] sm:$0xff]
    %v1946 = vld [vmem:[%s1935 + $0x50] sm:$0xff]
    %v1947 = vld [vmem:[%s1935 + $0x58] sm:$0xff]
    %v1948 = vld [vmem:[%s1935 + $0x60] sm:$0xff]
    %v1949 = vld [vmem:[%s1935 + $0x68] sm:$0xff]
    %v1950 = vld [vmem:[%s1935 + $0x70] sm:$0xff]
    %v1951 = vld [vmem:[%s1935 + $0x78] sm:$0xff]
    %v1952 = vld [vmem:[%s1935 + $0x80] sm:$0xff]
    %v1953 = vld [vmem:[%s1935 + $0x88] sm:$0xff]
    %v1954 = vld [vmem:[%s1935 + $0x90] sm:$0xff]
    %v1955 = vld [vmem:[%s1935 + $0x98] sm:$0xff]
    %v1956 = vld [vmem:[%s1935 + $0xa0] sm:$0xff]
    %v1957 = vld [vmem:[%s1935 + $0xa8] sm:$0xff]
    %v1958 = vld [vmem:[%s1935 + $0xb0] sm:$0xff]
    %v1959 = vld [vmem:[%s1935 + $0xb8] sm:$0xff]
    %v1960 = vld [vmem:[%s1935 + $0xc0] sm:$0xff]
    %v1961 = vld [vmem:[%s1935 + $0xc8] sm:$0xff]
    %v1962 = vld [vmem:[%s1935 + $0xd0] sm:$0xff]
    %v1963 = vld [vmem:[%s1935 + $0xd8] sm:$0xff]
    %v1964 = vld [vmem:[%s1935 + $0xe0] sm:$0xff]
    %v1965 = vld [vmem:[%s1935 + $0xe8] sm:$0xff]
    %v1966 = vld [vmem:[%s1935 + $0xf0] sm:$0xff]
    %v1967 = vld [vmem:[%s1935 + $0xf8] sm:$0xff]
    %v1968 = vld [vmem:[%s6] sm:$0xff]
    %v1969 = vld [vmem:[%s6 + $0x8] sm:$0xff]
    %v1970 = vld [vmem:[%s6 + $0x10] sm:$0xff]
    %v1971 = vld [vmem:[%s6 + $0x18] sm:$0xff]
    %v1972 = vld [vmem:[%s6 + $0x20] sm:$0xff]
    %v1973 = vld [vmem:[%s6 + $0x28] sm:$0xff]
    %v1974 = vld [vmem:[%s6 + $0x30] sm:$0xff]
    %v1975 = vld [vmem:[%s6 + $0x38] sm:$0xff]
    %v1976 = vld [vmem:[%s6 + $0x40] sm:$0xff]
    %v1977 = vld [vmem:[%s6 + $0x48] sm:$0xff]
    %v1978 = vld [vmem:[%s6 + $0x50] sm:$0xff]
    %v1979 = vld [vmem:[%s6 + $0x58] sm:$0xff]
    %v1980 = vld [vmem:[%s6 + $0x60] sm:$0xff]
    %v1981 = vld [vmem:[%s6 + $0x68] sm:$0xff]
    %v1982 = vld [vmem:[%s6 + $0x70] sm:$0xff]
    %v1983 = vld [vmem:[%s6 + $0x78] sm:$0xff]
    %v1984 = vrot.slane %v1347, 2
    %v1985 = vsel %vm1425, %v1427, %v1984
    %v2004 = vunpack.c.l.b16 %v1968
    %v2005 = vunpack.c.h.b16 %v1968
    %v2006 = vunpack.c.l.b16 %v1969
    %v2007 = vunpack.c.h.b16 %v1969
    %v2008 = vunpack.c.l.b16 %v1970
    %v2009 = vunpack.c.h.b16 %v1970
    %v2010 = vunpack.c.l.b16 %v1971
    %v2011 = vunpack.c.h.b16 %v1971
    %v2012 = vunpack.c.l.b16 %v1972
    %v2013 = vunpack.c.h.b16 %v1972
    %v2014 = vunpack.c.l.b16 %v1973
    %v2015 = vunpack.c.h.b16 %v1973
    %v2016 = vunpack.c.l.b16 %v1974
    %v2017 = vunpack.c.h.b16 %v1974
    %v2018 = vunpack.c.l.b16 %v1975
    %v2019 = vunpack.c.h.b16 %v1975
    %v2020 = vunpack.c.l.b16 %v1976
    %v2021 = vunpack.c.h.b16 %v1976
    %v2022 = vunpack.c.l.b16 %v1977
    %v2023 = vunpack.c.h.b16 %v1977
    %v2024 = vunpack.c.l.b16 %v1978
    %v2025 = vunpack.c.h.b16 %v1978
    %v2026 = vunpack.c.l.b16 %v1979
    %v2027 = vunpack.c.h.b16 %v1979
    %v2028 = vunpack.c.l.b16 %v1980
    %v2029 = vunpack.c.h.b16 %v1980
    %v2030 = vunpack.c.l.b16 %v1981
    %v2031 = vunpack.c.h.b16 %v1981
    %v2032 = vunpack.c.l.b16 %v1982
    %v2033 = vunpack.c.h.b16 %v1982
    %v2034 = vunpack.c.l.b16 %v1983
    %v2035 = vunpack.c.h.b16 %v1983
    %v2036 = vpack.c.b16 %v2006, %v2004
    %v2037 = vpack.c.b16 %v2007, %v2005
    %v2038 = vpack.c.b16 %v2010, %v2008
    %v2039 = vpack.c.b16 %v2011, %v2009
    %v2040 = vpack.c.b16 %v2014, %v2012
    %v2041 = vpack.c.b16 %v2015, %v2013
    %v2042 = vpack.c.b16 %v2018, %v2016
    %v2043 = vpack.c.b16 %v2019, %v2017
    %v2044 = vpack.c.b16 %v2022, %v2020
    %v2045 = vpack.c.b16 %v2023, %v2021
    %v2046 = vpack.c.b16 %v2026, %v2024
    %v2047 = vpack.c.b16 %v2027, %v2025
    %v2048 = vpack.c.b16 %v2030, %v2028
    %v2049 = vpack.c.b16 %v2031, %v2029
    %v2050 = vpack.c.b16 %v2034, %v2032
    %v2051 = vpack.c.b16 %v2035, %v2033
    %2068 = vmatprep.subr.bf16.mxu0 %v2037
    %2069 = vmatpush1.bf16.msra.mxu0 %v2036
    %2070 = vmatprep.subr.bf16.mxu0 %v2039
    %2071 = vmatpush1.bf16.msra.mxu0 %v2038
    %2072 = vmatprep.subr.bf16.mxu0 %v2041
    %2073 = vmatpush1.bf16.msra.mxu0 %v2040
    %2074 = vmatprep.subr.bf16.mxu0 %v2043
    %2075 = vmatpush1.bf16.msra.mxu0 %v2042
    %2076 = vmatprep.subr.bf16.mxu0 %v2045
    %2077 = vmatpush1.bf16.msra.mxu0 %v2044
    %2078 = vmatprep.subr.bf16.mxu0 %v2047
    %2079 = vmatpush1.bf16.msra.mxu0 %v2046
    %2080 = vmatprep.subr.bf16.mxu0 %v2049
    %2081 = vmatpush1.bf16.msra.mxu0 %v2048
    %2082 = vmatprep.subr.bf16.mxu0 %v2051
    %2083 = vmatpush1.bf16.msra.mxu0 %v2050
    %2084 = vmatprep.subr.bf16.mxu0 0
    %2085 = vmatpush1.bf16.msra.mxu0 0
    %2086 = vmatprep.subr.bf16.mxu0 0
    %2087 = vmatpush1.bf16.msra.mxu0 0
    %2088 = vmatprep.subr.bf16.mxu0 0
    %2089 = vmatpush1.bf16.msra.mxu0 0
    %2090 = vmatprep.subr.bf16.mxu0 0
    %2091 = vmatpush1.bf16.msra.mxu0 0
    %2092 = vmatprep.subr.bf16.mxu0 0
    %2093 = vmatpush1.bf16.msra.mxu0 0
    %2094 = vmatprep.subr.bf16.mxu0 0
    %2095 = vmatpush1.bf16.msra.mxu0 0
    %2096 = vmatprep.subr.bf16.mxu0 0
    %2097 = vmatpush1.bf16.msra.mxu0 0
    %2098 = vmatprep.subr.bf16.mxu0 0
    %2099 = vmatpush1.bf16.msra.mxu0 0
    %2100 = vmatprep.mubr.bf16.mxu0 0
    %2101 = vmatmul.mubr.bf16.gmra.mrb[0].mxu0 %v1985
    %v2102 = vpop.f32.mrb[0].mxu0
    %v2103 = vadd.f32 0.0, %v2102
    %v2104 = vpop.f32.mrb[0].mxu0
    %v2105 = vadd.f32 0.0, %v2104
    %v2106 = vpop.f32.mrb[0].mxu0
    %v2107 = vadd.f32 0.0, %v2106
    %v2108 = vpop.f32.mrb[0].mxu0
    %v2109 = vadd.f32 0.0, %v2108
    %2110 = vmatprep.mubr.bf16.mxu0 0
    %2111 = vmatmul.mubr.bf16.gmra.mrb[0].mxu0 %v1984
    %v2112 = vpop.f32.mrb[0].mxu0
    %v2113 = vadd.f32 0.0, %v2112
    %v2114 = vpop.f32.mrb[0].mxu0
    %v2115 = vadd.f32 0.0, %v2114
    %v2116 = vpop.f32.mrb[0].mxu0
    %v2117 = vpop.f32.mrb[0].mxu0
    %2118 = vdwg.mxu0
    %v2151 = vunpack.c.l.b16 %v1360
    %v2152 = vunpack.c.h.b16 %v1360
    %v2153 = vunpack.c.l.b16 %v1361
    %v2154 = vunpack.c.h.b16 %v1361
    %v2155 = vunpack.c.l.b16 %v1362
    %v2156 = vunpack.c.h.b16 %v1362
    %v2157 = vunpack.c.l.b16 %v1363
    %v2158 = vunpack.c.h.b16 %v1363
    %v2159 = vunpack.c.l.b16 %v1364
    %v2160 = vunpack.c.h.b16 %v1364
    %v2161 = vunpack.c.l.b16 %v1365
    %v2162 = vunpack.c.h.b16 %v1365
    %v2163 = vunpack.c.l.b16 %v1366
    %v2164 = vunpack.c.h.b16 %v1366
    %v2165 = vunpack.c.l.b16 %v1367
    %v2166 = vunpack.c.h.b16 %v1367
    %v2167 = vunpack.c.l.b16 %v1368
    %v2168 = vunpack.c.h.b16 %v1368
    %v2169 = vunpack.c.l.b16 %v1369
    %v2170 = vunpack.c.h.b16 %v1369
    %v2171 = vunpack.c.l.b16 %v1370
    %v2172 = vunpack.c.h.b16 %v1370
    %v2173 = vunpack.c.l.b16 %v1371
    %v2174 = vunpack.c.h.b16 %v1371
    %v2175 = vunpack.c.l.b16 %v1372
    %v2176 = vunpack.c.h.b16 %v1372
    %v2177 = vunpack.c.l.b16 %v1373
    %v2178 = vunpack.c.h.b16 %v1373
    %v2179 = vunpack.c.l.b16 %v1374
    %v2180 = vunpack.c.h.b16 %v1374
    %v2181 = vunpack.c.l.b16 %v1375
    %v2182 = vunpack.c.h.b16 %v1375
    %v2183 = vunpack.c.l.b16 %v1376
    %v2184 = vunpack.c.h.b16 %v1376
    %v2185 = vunpack.c.l.b16 %v1377
    %v2186 = vunpack.c.h.b16 %v1377
    %v2187 = vunpack.c.l.b16 %v1378
    %v2188 = vunpack.c.h.b16 %v1378
    %v2189 = vunpack.c.l.b16 %v1379
    %v2190 = vunpack.c.h.b16 %v1379
    %v2191 = vunpack.c.l.b16 %v1380
    %v2192 = vunpack.c.h.b16 %v1380
    %v2193 = vunpack.c.l.b16 %v1381
    %v2194 = vunpack.c.h.b16 %v1381
    %v2195 = vunpack.c.l.b16 %v1382
    %v2196 = vunpack.c.h.b16 %v1382
    %v2197 = vunpack.c.l.b16 %v1383
    %v2198 = vunpack.c.h.b16 %v1383
    %v2199 = vunpack.c.l.b16 %v1384
    %v2200 = vunpack.c.h.b16 %v1384
    %v2201 = vunpack.c.l.b16 %v1385
    %v2202 = vunpack.c.h.b16 %v1385
    %v2203 = vunpack.c.l.b16 %v1386
    %v2204 = vunpack.c.h.b16 %v1386
    %v2205 = vunpack.c.l.b16 %v1387
    %v2206 = vunpack.c.h.b16 %v1387
    %v2207 = vunpack.c.l.b16 %v1388
    %v2208 = vunpack.c.h.b16 %v1388
    %v2209 = vunpack.c.l.b16 %v1389
    %v2210 = vunpack.c.h.b16 %v1389
    %v2211 = vunpack.c.l.b16 %v1390
    %v2212 = vunpack.c.h.b16 %v1390
    %v2213 = vunpack.c.l.b16 %v1391
    %v2214 = vunpack.c.h.b16 %v1391
    %v2215 = vpack.c.b16 %v2153, %v2151
    %v2216 = vpack.c.b16 %v2154, %v2152
    %v2217 = vpack.c.b16 %v2157, %v2155
    %v2218 = vpack.c.b16 %v2158, %v2156
    %v2219 = vpack.c.b16 %v2161, %v2159
    %v2220 = vpack.c.b16 %v2162, %v2160
    %v2221 = vpack.c.b16 %v2165, %v2163
    %v2222 = vpack.c.b16 %v2166, %v2164
    %v2223 = vpack.c.b16 %v2169, %v2167
    %v2224 = vpack.c.b16 %v2170, %v2168
    %v2225 = vpack.c.b16 %v2173, %v2171
    %v2226 = vpack.c.b16 %v2174, %v2172
    %v2227 = vpack.c.b16 %v2177, %v2175
    %v2228 = vpack.c.b16 %v2178, %v2176
    %v2229 = vpack.c.b16 %v2181, %v2179
    %v2230 = vpack.c.b16 %v2182, %v2180
    %v2231 = vpack.c.b16 %v2185, %v2183
    %v2232 = vpack.c.b16 %v2186, %v2184
    %v2233 = vpack.c.b16 %v2189, %v2187
    %v2234 = vpack.c.b16 %v2190, %v2188
    %v2235 = vpack.c.b16 %v2193, %v2191
    %v2236 = vpack.c.b16 %v2194, %v2192
    %v2237 = vpack.c.b16 %v2197, %v2195
    %v2238 = vpack.c.b16 %v2198, %v2196
    %v2239 = vpack.c.b16 %v2201, %v2199
    %v2240 = vpack.c.b16 %v2202, %v2200
    %v2241 = vpack.c.b16 %v2205, %v2203
    %v2242 = vpack.c.b16 %v2206, %v2204
    %v2243 = vpack.c.b16 %v2209, %v2207
    %v2244 = vpack.c.b16 %v2210, %v2208
    %v2245 = vpack.c.b16 %v2213, %v2211
    %v2246 = vpack.c.b16 %v2214, %v2212
    %2279 = vmatprep.subr.bf16.mxu0 %v2216
    %2280 = vmatpush1.bf16.msra.mxu0 %v2215
    %2281 = vmatprep.subr.bf16.mxu0 %v2218
    %2282 = vmatpush1.bf16.msra.mxu0 %v2217
    %2283 = vmatprep.subr.bf16.mxu0 %v2220
    %2284 = vmatpush1.bf16.msra.mxu0 %v2219
    %2285 = vmatprep.subr.bf16.mxu0 %v2222
    %2286 = vmatpush1.bf16.msra.mxu0 %v2221
    %2287 = vmatprep.subr.bf16.mxu0 %v2224
    %2288 = vmatpush1.bf16.msra.mxu0 %v2223
    %2289 = vmatprep.subr.bf16.mxu0 %v2226
    %2290 = vmatpush1.bf16.msra.mxu0 %v2225
    %2291 = vmatprep.subr.bf16.mxu0 %v2228
    %2292 = vmatpush1.bf16.msra.mxu0 %v2227
    %2293 = vmatprep.subr.bf16.mxu0 %v2230
    %2294 = vmatpush1.bf16.msra.mxu0 %v2229
    %2295 = vmatprep.subr.bf16.mxu0 %v2232
    %2296 = vmatpush1.bf16.msra.mxu0 %v2231
    %2297 = vmatprep.subr.bf16.mxu0 %v2234
    %2298 = vmatpush1.bf16.msra.mxu0 %v2233
    %2299 = vmatprep.subr.bf16.mxu0 %v2236
    %2300 = vmatpush1.bf16.msra.mxu0 %v2235
    %2301 = vmatprep.subr.bf16.mxu0 %v2238
    %2302 = vmatpush1.bf16.msra.mxu0 %v2237
    %2303 = vmatprep.subr.bf16.mxu0 %v2240
    %2304 = vmatpush1.bf16.msra.mxu0 %v2239
    %2305 = vmatprep.subr.bf16.mxu0 %v2242
    %2306 = vmatpush1.bf16.msra.mxu0 %v2241
    %2307 = vmatprep.subr.bf16.mxu0 %v2244
    %2308 = vmatpush1.bf16.msra.mxu0 %v2243
    %2309 = vmatprep.subr.bf16.mxu0 %v2246
    %2310 = vmatpush1.bf16.msra.mxu0 %v2245
    %2311 = vmatprep.mubr.bf16.mxu0 %v1354
    %2312 = vmatmul.mubr.bf16.gmra.mrb[0].mxu0 %v1345
    %v2313 = vpop.f32.mrb[0].mxu0
    %v2314 = vadd.f32 %v1631, %v2313
    %v2315 = vpop.f32.mrb[0].mxu0
    %v2316 = vadd.f32 %v1633, %v2315
    %v2317 = vpop.f32.mrb[0].mxu0
    %v2318 = vadd.f32 %v1635, %v2317
    %v2319 = vpop.f32.mrb[0].mxu0
    %v2320 = vadd.f32 %v1637, %v2319
    %2321 = vmatprep.mubr.bf16.mxu0 %v1356
    %2322 = vmatmul.mubr.bf16.gmra.mrb[0].mxu0 %v1346
    %v2323 = vpop.f32.mrb[0].mxu0
    %v2324 = vadd.f32 %v1641, %v2323
    %v2325 = vpop.f32.mrb[0].mxu0
    %v2326 = vadd.f32 %v1643, %v2325
    %v2327 = vpop.f32.mrb[0].mxu0
    %v2328 = vpop.f32.mrb[0].mxu0
    %2329 = vdwg.mxu0
    %vm2330 = vcmask 1043456
    %v2331 = vrot.slane %v1345, 4
    %v2332 = vrot.slane %v1346, 4
    %v2333 = vsel %vm2330, %v2331, %v2332
    %v2334 = vrot.slane %v1354, 4
    %v2335 = vrot.slane %v1356, 4
    %v2336 = vsel %vm2330, %v2334, %v2335
    %v2373 = vunpack.c.l.b16 %v1648
    %v2374 = vunpack.c.h.b16 %v1648
    %v2375 = vunpack.c.l.b16 %v1649
    %v2376 = vunpack.c.h.b16 %v1649
    %v2377 = vunpack.c.l.b16 %v1650
    %v2378 = vunpack.c.h.b16 %v1650
    %v2379 = vunpack.c.l.b16 %v1651
    %v2380 = vunpack.c.h.b16 %v1651
    %v2381 = vunpack.c.l.b16 %v1652
    %v2382 = vunpack.c.h.b16 %v1652
    %v2383 = vunpack.c.l.b16 %v1653
    %v2384 = vunpack.c.h.b16 %v1653
    %v2385 = vunpack.c.l.b16 %v1654
    %v2386 = vunpack.c.h.b16 %v1654
    %v2387 = vunpack.c.l.b16 %v1655
    %v2388 = vunpack.c.h.b16 %v1655
    %v2389 = vunpack.c.l.b16 %v1656
    %v2390 = vunpack.c.h.b16 %v1656
    %v2391 = vunpack.c.l.b16 %v1657
    %v2392 = vunpack.c.h.b16 %v1657
    %v2393 = vunpack.c.l.b16 %v1658
    %v2394 = vunpack.c.h.b16 %v1658
    %v2395 = vunpack.c.l.b16 %v1659
    %v2396 = vunpack.c.h.b16 %v1659
    %v2397 = vunpack.c.l.b16 %v1660
    %v2398 = vunpack.c.h.b16 %v1660
    %v2399 = vunpack.c.l.b16 %v1661
    %v2400 = vunpack.c.h.b16 %v1661
    %v2401 = vunpack.c.l.b16 %v1662
    %v2402 = vunpack.c.h.b16 %v1662
    %v2403 = vunpack.c.l.b16 %v1663
    %v2404 = vunpack.c.h.b16 %v1663
    %v2405 = vunpack.c.l.b16 %v1664
    %v2406 = vunpack.c.h.b16 %v1664
    %v2407 = vunpack.c.l.b16 %v1665
    %v2408 = vunpack.c.h.b16 %v1665
    %v2409 = vunpack.c.l.b16 %v1666
    %v2410 = vunpack.c.h.b16 %v1666
    %v2411 = vunpack.c.l.b16 %v1667
    %v2412 = vunpack.c.h.b16 %v1667
    %v2413 = vunpack.c.l.b16 %v1668
    %v2414 = vunpack.c.h.b16 %v1668
    %v2415 = vunpack.c.l.b16 %v1669
    %v2416 = vunpack.c.h.b16 %v1669
    %v2417 = vunpack.c.l.b16 %v1670
    %v2418 = vunpack.c.h.b16 %v1670
    %v2419 = vunpack.c.l.b16 %v1671
    %v2420 = vunpack.c.h.b16 %v1671
    %v2421 = vunpack.c.l.b16 %v1672
    %v2422 = vunpack.c.h.b16 %v1672
    %v2423 = vunpack.c.l.b16 %v1673
    %v2424 = vunpack.c.h.b16 %v1673
    %v2425 = vunpack.c.l.b16 %v1674
    %v2426 = vunpack.c.h.b16 %v1674
    %v2427 = vunpack.c.l.b16 %v1675
    %v2428 = vunpack.c.h.b16 %v1675
    %v2429 = vunpack.c.l.b16 %v1676
    %v2430 = vunpack.c.h.b16 %v1676
    %v2431 = vunpack.c.l.b16 %v1677
    %v2432 = vunpack.c.h.b16 %v1677
    %v2433 = vunpack.c.l.b16 %v1678
    %v2434 = vunpack.c.h.b16 %v1678
    %v2435 = vunpack.c.l.b16 %v1679
    %v2436 = vunpack.c.h.b16 %v1679
    %v2437 = vpack.c.b16 %v2375, %v2373
    %v2438 = vpack.c.b16 %v2376, %v2374
    %v2439 = vpack.c.b16 %v2379, %v2377
    %v2440 = vpack.c.b16 %v2380, %v2378
    %v2441 = vpack.c.b16 %v2383, %v2381
    %v2442 = vpack.c.b16 %v2384, %v2382
    %v2443 = vpack.c.b16 %v2387, %v2385
    %v2444 = vpack.c.b16 %v2388, %v2386
    %v2445 = vpack.c.b16 %v2391, %v2389
    %v2446 = vpack.c.b16 %v2392, %v2390
    %v2447 = vpack.c.b16 %v2395, %v2393
    %v2448 = vpack.c.b16 %v2396, %v2394
    %v2449 = vpack.c.b16 %v2399, %v2397
    %v2450 = vpack.c.b16 %v2400, %v2398
    %v2451 = vpack.c.b16 %v2403, %v2401
    %v2452 = vpack.c.b16 %v2404, %v2402
    %v2453 = vpack.c.b16 %v2407, %v2405
    %v2454 = vpack.c.b16 %v2408, %v2406
    %v2455 = vpack.c.b16 %v2411, %v2409
    %v2456 = vpack.c.b16 %v2412, %v2410
    %v2457 = vpack.c.b16 %v2415, %v2413
    %v2458 = vpack.c.b16 %v2416, %v2414
    %v2459 = vpack.c.b16 %v2419, %v2417
    %v2460 = vpack.c.b16 %v2420, %v2418
    %v2461 = vpack.c.b16 %v2423, %v2421
    %v2462 = vpack.c.b16 %v2424, %v2422
    %v2463 = vpack.c.b16 %v2427, %v2425
    %v2464 = vpack.c.b16 %v2428, %v2426
    %v2465 = vpack.c.b16 %v2431, %v2429
    %v2466 = vpack.c.b16 %v2432, %v2430
    %v2467 = vpack.c.b16 %v2435, %v2433
    %v2468 = vpack.c.b16 %v2436, %v2434
    %2501 = vmatprep.subr.bf16.mxu0 %v2438
    %2502 = vmatpush1.bf16.msra.mxu0 %v2437
    %2503 = vmatprep.subr.bf16.mxu0 %v2440
    %2504 = vmatpush1.bf16.msra.mxu0 %v2439
    %2505 = vmatprep.subr.bf16.mxu0 %v2442
    %2506 = vmatpush1.bf16.msra.mxu0 %v2441
    %2507 = vmatprep.subr.bf16.mxu0 %v2444
    %2508 = vmatpush1.bf16.msra.mxu0 %v2443
    %2509 = vmatprep.subr.bf16.mxu0 %v2446
    %2510 = vmatpush1.bf16.msra.mxu0 %v2445
    %2511 = vmatprep.subr.bf16.mxu0 %v2448
    %2512 = vmatpush1.bf16.msra.mxu0 %v2447
    %2513 = vmatprep.subr.bf16.mxu0 %v2450
    %2514 = vmatpush1.bf16.msra.mxu0 %v2449
    %2515 = vmatprep.subr.bf16.mxu0 %v2452
    %2516 = vmatpush1.bf16.msra.mxu0 %v2451
    %2517 = vmatprep.subr.bf16.mxu0 %v2454
    %2518 = vmatpush1.bf16.msra.mxu0 %v2453
    %2519 = vmatprep.subr.bf16.mxu0 %v2456
    %2520 = vmatpush1.bf16.msra.mxu0 %v2455
    %2521 = vmatprep.subr.bf16.mxu0 %v2458
    %2522 = vmatpush1.bf16.msra.mxu0 %v2457
    %2523 = vmatprep.subr.bf16.mxu0 %v2460
    %2524 = vmatpush1.bf16.msra.mxu0 %v2459
    %2525 = vmatprep.subr.bf16.mxu0 %v2462
    %2526 = vmatpush1.bf16.msra.mxu0 %v2461
    %2527 = vmatprep.subr.bf16.mxu0 %v2464
    %2528 = vmatpush1.bf16.msra.mxu0 %v2463
    %2529 = vmatprep.subr.bf16.mxu0 %v2466
    %2530 = vmatpush1.bf16.msra.mxu0 %v2465
    %2531 = vmatprep.subr.bf16.mxu0 %v2468
    %2532 = vmatpush1.bf16.msra.mxu0 %v2467
    %2533 = vmatprep.mubr.bf16.mxu0 %v2336
    %2534 = vmatmul.mubr.bf16.gmra.mrb[0].mxu0 %v2333
    %v2535 = vpop.f32.mrb[0].mxu0
    %v2536 = vadd.f32 %v1919, %v2535
    %v2537 = vpop.f32.mrb[0].mxu0
    %v2538 = vadd.f32 %v1921, %v2537
    %v2539 = vpop.f32.mrb[0].mxu0
    %v2540 = vadd.f32 %v1923, %v2539
    %v2541 = vpop.f32.mrb[0].mxu0
    %v2542 = vadd.f32 %v1925, %v2541
    %2543 = vmatprep.mubr.bf16.mxu0 %v2335
    %2544 = vmatmul.mubr.bf16.gmra.mrb[0].mxu0 %v2332
    %v2545 = vpop.f32.mrb[0].mxu0
    %v2546 = vadd.f32 %v1929, %v2545
    %v2547 = vpop.f32.mrb[0].mxu0
    %v2548 = vadd.f32 %v1931, %v2547
    %v2549 = vpop.f32.mrb[0].mxu0
    %v2550 = vpop.f32.mrb[0].mxu0
    %2551 = vdwg.mxu0
    %v2552 = vadd.f32 %v2314, %v2536
    %v2553 = vadd.f32 %v2316, %v2538
    %v2554 = vadd.f32 %v2318, %v2540
    %v2555 = vadd.f32 %v2320, %v2542
    %v2556 = vadd.f32 %v2324, %v2546
    %v2557 = vadd.f32 %v2326, %v2548
    %v2590 = vunpack.c.l.b16 %v1936
    %v2591 = vunpack.c.h.b16 %v1936
    %v2592 = vunpack.c.l.b16 %v1937
    %v2593 = vunpack.c.h.b16 %v1937
    %v2594 = vunpack.c.l.b16 %v1938
    %v2595 = vunpack.c.h.b16 %v1938
    %v2596 = vunpack.c.l.b16 %v1939
    %v2597 = vunpack.c.h.b16 %v1939
    %v2598 = vunpack.c.l.b16 %v1940
    %v2599 = vunpack.c.h.b16 %v1940
    %v2600 = vunpack.c.l.b16 %v1941
    %v2601 = vunpack.c.h.b16 %v1941
    %v2602 = vunpack.c.l.b16 %v1942
    %v2603 = vunpack.c.h.b16 %v1942
    %v2604 = vunpack.c.l.b16 %v1943
    %v2605 = vunpack.c.h.b16 %v1943
    %v2606 = vunpack.c.l.b16 %v1944
    %v2607 = vunpack.c.h.b16 %v1944
    %v2608 = vunpack.c.l.b16 %v1945
    %v2609 = vunpack.c.h.b16 %v1945
    %v2610 = vunpack.c.l.b16 %v1946
    %v2611 = vunpack.c.h.b16 %v1946
    %v2612 = vunpack.c.l.b16 %v1947
    %v2613 = vunpack.c.h.b16 %v1947
    %v2614 = vunpack.c.l.b16 %v1948
    %v2615 = vunpack.c.h.b16 %v1948
    %v2616 = vunpack.c.l.b16 %v1949
    %v2617 = vunpack.c.h.b16 %v1949
    %v2618 = vunpack.c.l.b16 %v1950
    %v2619 = vunpack.c.h.b16 %v1950
    %v2620 = vunpack.c.l.b16 %v1951
    %v2621 = vunpack.c.h.b16 %v1951
    %v2622 = vunpack.c.l.b16 %v1952
    %v2623 = vunpack.c.h.b16 %v1952
    %v2624 = vunpack.c.l.b16 %v1953
    %v2625 = vunpack.c.h.b16 %v1953
    %v2626 = vunpack.c.l.b16 %v1954
    %v2627 = vunpack.c.h.b16 %v1954
    %v2628 = vunpack.c.l.b16 %v1955
    %v2629 = vunpack.c.h.b16 %v1955
    %v2630 = vunpack.c.l.b16 %v1956
    %v2631 = vunpack.c.h.b16 %v1956
    %v2632 = vunpack.c.l.b16 %v1957
    %v2633 = vunpack.c.h.b16 %v1957
    %v2634 = vunpack.c.l.b16 %v1958
    %v2635 = vunpack.c.h.b16 %v1958
    %v2636 = vunpack.c.l.b16 %v1959
    %v2637 = vunpack.c.h.b16 %v1959
    %v2638 = vunpack.c.l.b16 %v1960
    %v2639 = vunpack.c.h.b16 %v1960
    %v2640 = vunpack.c.l.b16 %v1961
    %v2641 = vunpack.c.h.b16 %v1961
    %v2642 = vunpack.c.l.b16 %v1962
    %v2643 = vunpack.c.h.b16 %v1962
    %v2644 = vunpack.c.l.b16 %v1963
    %v2645 = vunpack.c.h.b16 %v1963
    %v2646 = vunpack.c.l.b16 %v1964
    %v2647 = vunpack.c.h.b16 %v1964
    %v2648 = vunpack.c.l.b16 %v1965
    %v2649 = vunpack.c.h.b16 %v1965
    %v2650 = vunpack.c.l.b16 %v1966
    %v2651 = vunpack.c.h.b16 %v1966
    %v2652 = vunpack.c.l.b16 %v1967
    %v2653 = vunpack.c.h.b16 %v1967
    %v2654 = vpack.c.b16 %v2592, %v2590
    %v2655 = vpack.c.b16 %v2593, %v2591
    %v2656 = vpack.c.b16 %v2596, %v2594
    %v2657 = vpack.c.b16 %v2597, %v2595
    %v2658 = vpack.c.b16 %v2600, %v2598
    %v2659 = vpack.c.b16 %v2601, %v2599
    %v2660 = vpack.c.b16 %v2604, %v2602
    %v2661 = vpack.c.b16 %v2605, %v2603
    %v2662 = vpack.c.b16 %v2608, %v2606
    %v2663 = vpack.c.b16 %v2609, %v2607
    %v2664 = vpack.c.b16 %v2612, %v2610
    %v2665 = vpack.c.b16 %v2613, %v2611
    %v2666 = vpack.c.b16 %v2616, %v2614
    %v2667 = vpack.c.b16 %v2617, %v2615
    %v2668 = vpack.c.b16 %v2620, %v2618
    %v2669 = vpack.c.b16 %v2621, %v2619
    %v2670 = vpack.c.b16 %v2624, %v2622
    %v2671 = vpack.c.b16 %v2625, %v2623
    %v2672 = vpack.c.b16 %v2628, %v2626
    %v2673 = vpack.c.b16 %v2629, %v2627
    %v2674 = vpack.c.b16 %v2632, %v2630
    %v2675 = vpack.c.b16 %v2633, %v2631
    %v2676 = vpack.c.b16 %v2636, %v2634
    %v2677 = vpack.c.b16 %v2637, %v2635
    %v2678 = vpack.c.b16 %v2640, %v2638
    %v2679 = vpack.c.b16 %v2641, %v2639
    %v2680 = vpack.c.b16 %v2644, %v2642
    %v2681 = vpack.c.b16 %v2645, %v2643
    %v2682 = vpack.c.b16 %v2648, %v2646
    %v2683 = vpack.c.b16 %v2649, %v2647
    %v2684 = vpack.c.b16 %v2652, %v2650
    %v2685 = vpack.c.b16 %v2653, %v2651
    %2718 = vmatprep.subr.bf16.mxu0 %v2655
    %2719 = vmatpush1.bf16.msra.mxu0 %v2654
    %2720 = vmatprep.subr.bf16.mxu0 %v2657
    %2721 = vmatpush1.bf16.msra.mxu0 %v2656
    %2722 = vmatprep.subr.bf16.mxu0 %v2659
    %2723 = vmatpush1.bf16.msra.mxu0 %v2658
    %2724 = vmatprep.subr.bf16.mxu0 %v2661
    %2725 = vmatpush1.bf16.msra.mxu0 %v2660
    %2726 = vmatprep.subr.bf16.mxu0 %v2663
    %2727 = vmatpush1.bf16.msra.mxu0 %v2662
    %2728 = vmatprep.subr.bf16.mxu0 %v2665
    %2729 = vmatpush1.bf16.msra.mxu0 %v2664
    %2730 = vmatprep.subr.bf16.mxu0 %v2667
    %2731 = vmatpush1.bf16.msra.mxu0 %v2666
    %2732 = vmatprep.subr.bf16.mxu0 %v2669
    %2733 = vmatpush1.bf16.msra.mxu0 %v2668
    %2734 = vmatprep.subr.bf16.mxu0 %v2671
    %2735 = vmatpush1.bf16.msra.mxu0 %v2670
    %2736 = vmatprep.subr.bf16.mxu0 %v2673
    %2737 = vmatpush1.bf16.msra.mxu0 %v2672
    %2738 = vmatprep.subr.bf16.mxu0 %v2675
    %2739 = vmatpush1.bf16.msra.mxu0 %v2674
    %2740 = vmatprep.subr.bf16.mxu0 %v2677
    %2741 = vmatpush1.bf16.msra.mxu0 %v2676
    %2742 = vmatprep.subr.bf16.mxu0 %v2679
    %2743 = vmatpush1.bf16.msra.mxu0 %v2678
    %2744 = vmatprep.subr.bf16.mxu0 %v2681
    %2745 = vmatpush1.bf16.msra.mxu0 %v2680
    %2746 = vmatprep.subr.bf16.mxu0 %v2683
    %2747 = vmatpush1.bf16.msra.mxu0 %v2682
    %2748 = vmatprep.subr.bf16.mxu0 %v2685
    %2749 = vmatpush1.bf16.msra.mxu0 %v2684
    %2750 = vmatprep.mubr.bf16.mxu0 %v1356
    %2751 = vmatmul.mubr.bf16.gmra.mrb[0].mxu0 %v1346
    %v2752 = vpop.f32.mrb[0].mxu0
    %v2753 = vadd.f32 %v2103, %v2752
    %v2754 = vpop.f32.mrb[0].mxu0
    %v2755 = vadd.f32 %v2105, %v2754
    %v2756 = vpop.f32.mrb[0].mxu0
    %v2757 = vadd.f32 %v2107, %v2756
    %v2758 = vpop.f32.mrb[0].mxu0
    %v2759 = vadd.f32 %v2109, %v2758
    %2760 = vmatprep.mubr.bf16.mxu0 %v1355
    %2761 = vmatmul.mubr.bf16.gmra.mrb[0].mxu0 %v1347
    %v2762 = vpop.f32.mrb[0].mxu0
    %v2763 = vadd.f32 %v2113, %v2762
    %v2764 = vpop.f32.mrb[0].mxu0
    %v2765 = vadd.f32 %v2115, %v2764
    %v2766 = vpop.f32.mrb[0].mxu0
    %v2767 = vpop.f32.mrb[0].mxu0
    %2768 = vdwg.mxu0
    %v2769 = vadd.f32 %v2552, %v2753
    %v2770 = vadd.f32 %v2553, %v2755
    %v2771 = vadd.f32 %v2554, %v2757
    %v2772 = vadd.f32 %v2555, %v2759
    %v2773 = vadd.f32 %v2556, %v2763
    %v2774 = vadd.f32 %v2557, %v2765
    %v2775 = vld [vmem:[%s7] sm:$0x3]
    %v2777 = vlaneseq
    %v2778 = vshrl.u32 %v2777, 7
    %v2779 = vsub.s32 0, %v2778
    %v2780 = vrot.slane %v2775, %v2779
    %v2781 = vlaneseq
    %v2782 = vshrl.u32 %v2781, 7
    %v2783 = vsub.s32 1, %v2782
    %v2784 = vrot.slane %v2775, %v2783
    %v2787 = vadd.f32 %v2769, %v2780
    %v2788 = vadd.f32 %v2770, %v2784
    %v2789 = vadd.f32 %v2771, %v2780
    %v2790 = vadd.f32 %v2772, %v2784
    %v2791 = vadd.f32 %v2773, %v2780
    %v2792 = vadd.f32 %v2774, %v2784
    %v2793 = vmax.f32 %v2787, 0.0
    %v2794 = vmax.f32 %v2788, 0.0
    %v2795 = vmax.f32 %v2789, 0.0
    %v2796 = vmax.f32 %v2790, 0.0
    %v2797 = vmax.f32 %v2791, 0.0
    %v2798 = vmax.f32 %v2792, 0.0
    %v2799 = vpack.c.bf16 %v2795, %v2793
    %v2800 = vpack.c.bf16 %v2796, %v2794
    %v2801 = vpack.c.bf16 %v2797, %v2797
    %v2802 = vpack.c.bf16 %v2798, %v2798
    %2807 = vrot.lane.b32.xlu0 %v2799, 127
    %v2808 = vpop.permute.xlu0 %2807
    %2809 = vrot.lane.b32.xlu0 %v2800, 127
    %v2810 = vpop.permute.xlu0 %2809
    %2811 = vrot.lane.b32.xlu0 %v2801, 127
    %v2812 = vpop.permute.xlu0 %2811
    %2813 = vrot.lane.b32.xlu0 %v2802, 127
    %v2814 = vpop.permute.xlu0 %2813
    %v2815 = vsel %vm962, %v2808, %v2810
    %v2816 = vsel %vm962, %v2812, %v2814
    %v2821 = vmax.bf16 %v2799, %v2815
    %v2822 = vmax.bf16 %v2800, %v2810
    %v2823 = vmax.bf16 %v2801, %v2816
    %v2824 = vmax.bf16 %v2802, %v2814
    %v2825 = vld [vmem:[%s8] sm:$0xf]
    %v2826 = vld [vmem:[%s8 + $0x4] sm:$0xf]
    %v2827 = vld [vmem:[%s8 + $0x8] sm:$0xf]
    %v2828 = vld [vmem:[%s8 + $0xc] sm:$0xf]
    %v2829 = vld [vmem:[%s8 + $0x10] sm:$0xf]
    %v2830 = vld [vmem:[%s8 + $0x14] sm:$0xf]
    %v2831 = vld [vmem:[%s8 + $0x18] sm:$0xf]
    %v2832 = vld [vmem:[%s8 + $0x1c] sm:$0xf]
    %v2833 = vld [vmem:[%s8 + $0x20] sm:$0xf]
    %v2834 = vld [vmem:[%s8 + $0x24] sm:$0xf]
    %v2835 = vld [vmem:[%s8 + $0x28] sm:$0xf]
    %v2836 = vld [vmem:[%s8 + $0x2c] sm:$0xf]
    %v2837 = vld [vmem:[%s8 + $0x30] sm:$0xf]
    %v2838 = vld [vmem:[%s8 + $0x34] sm:$0xf]
    %v2839 = vld [vmem:[%s8 + $0x38] sm:$0xf]
    %v2840 = vld [vmem:[%s8 + $0x3c] sm:$0xf]
    %v2841 = vld [vmem:[%s8 + $0x40] sm:$0xf]
    %v2842 = vld [vmem:[%s8 + $0x44] sm:$0xf]
    %v2843 = vld [vmem:[%s8 + $0x48] sm:$0xf]
    %v2844 = vld [vmem:[%s8 + $0x4c] sm:$0xf]
    %v2845 = vld [vmem:[%s8 + $0x50] sm:$0xf]
    %v2846 = vld [vmem:[%s8 + $0x54] sm:$0xf]
    %v2847 = vld [vmem:[%s8 + $0x58] sm:$0x3]
    %v2871 = vunpack.c.l.b16 %v2825
    %v2872 = vunpack.c.l.b16 %v2826
    %v2873 = vunpack.c.l.b16 %v2827
    %v2874 = vunpack.c.l.b16 %v2828
    %v2875 = vunpack.c.l.b16 %v2829
    %v2876 = vunpack.c.l.b16 %v2830
    %v2877 = vunpack.c.l.b16 %v2831
    %v2878 = vunpack.c.l.b16 %v2832
    %v2879 = vunpack.c.l.b16 %v2833
    %v2880 = vunpack.c.l.b16 %v2834
    %v2881 = vunpack.c.l.b16 %v2835
    %v2882 = vunpack.c.l.b16 %v2836
    %v2883 = vunpack.c.l.b16 %v2837
    %v2884 = vunpack.c.l.b16 %v2838
    %v2885 = vunpack.c.l.b16 %v2839
    %v2886 = vunpack.c.l.b16 %v2840
    %v2887 = vunpack.c.l.b16 %v2841
    %v2888 = vunpack.c.l.b16 %v2842
    %v2889 = vunpack.c.l.b16 %v2843
    %v2890 = vunpack.c.l.b16 %v2844
    %v2891 = vunpack.c.l.b16 %v2845
    %v2892 = vunpack.c.l.b16 %v2846
    %v2893 = vunpack.c.l.b16 %v2847
    %v2894 = vpack.c.b16 %v2872, %v2871
    %v2895 = vpack.c.b16 %v2874, %v2873
    %v2896 = vpack.c.b16 %v2876, %v2875
    %v2897 = vpack.c.b16 %v2878, %v2877
    %v2898 = vpack.c.b16 %v2880, %v2879
    %v2899 = vpack.c.b16 %v2882, %v2881
    %v2900 = vpack.c.b16 %v2884, %v2883
    %v2901 = vpack.c.b16 %v2886, %v2885
    %v2902 = vpack.c.b16 %v2888, %v2887
    %v2903 = vpack.c.b16 %v2890, %v2889
    %v2904 = vpack.c.b16 %v2892, %v2891
    %v2905 = vpack.c.b16 %v2893, %v2893
    %vm2917 = vcmask 416768
    %v2919 = vsel %vm2917, %v2822, 0
    %v2922 = vsel %vm2917, %v2824, 0
    %vm2924 = vcmask 1040384
    %vm2925 = vcmask 1041408
    %v2926 = vsel %vm2924, 4294967295, 65535
    %v2927 = vsel %vm2925, %v2926, 0
    %v2929 = vand.u32 %v2905, %v2927
    %2931 = vmatprep.subr.bf16.mxu0 0
    %2932 = vmatpush1.bf16.msra.mxu0 %v2894
    %2933 = vmatprep.subr.bf16.mxu0 0
    %2934 = vmatpush1.bf16.msra.mxu0 %v2895
    %2935 = vmatprep.subr.bf16.mxu0 0
    %2936 = vmatpush1.bf16.msra.mxu0 %v2896
    %2937 = vmatprep.subr.bf16.mxu0 0
    %2938 = vmatpush1.bf16.msra.mxu0 %v2897
    %2939 = vmatprep.subr.bf16.mxu0 0
    %2940 = vmatpush1.bf16.msra.mxu0 %v2898
    %2941 = vmatprep.subr.bf16.mxu0 0
    %2942 = vmatpush1.bf16.msra.mxu0 %v2899
    %2943 = vmatprep.subr.bf16.mxu0 0
    %2944 = vmatpush1.bf16.msra.mxu0 %v2900
    %2945 = vmatprep.subr.bf16.mxu0 0
    %2946 = vmatpush1.bf16.msra.mxu0 %v2901
    %2947 = vmatprep.subr.bf16.mxu0 0
    %2948 = vmatpush1.bf16.msra.mxu0 %v2902
    %2949 = vmatprep.subr.bf16.mxu0 0
    %2950 = vmatpush1.bf16.msra.mxu0 %v2903
    %2951 = vmatprep.subr.bf16.mxu0 0
    %2952 = vmatpush1.bf16.msra.mxu0 %v2904
    %2953 = vmatprep.subr.bf16.mxu0 0
    %2954 = vmatpush1.bf16.msra.mxu0 %v2929
    %2955 = vmatprep.subr.bf16.mxu0 0
    %2956 = vmatpush1.bf16.msra.mxu0 0
    %2957 = vmatprep.subr.bf16.mxu0 0
    %2958 = vmatpush1.bf16.msra.mxu0 0
    %2959 = vmatprep.subr.bf16.mxu0 0
    %2960 = vmatpush1.bf16.msra.mxu0 0
    %2961 = vmatprep.subr.bf16.mxu0 0
    %2962 = vmatpush1.bf16.msra.mxu0 0
    %2963 = vmatprep.mubr.bf16.mxu0 %v2919
    %2964 = vmatmul.mubr.bf16.gmra.mrb[0].mxu0 %v2821
    %v2965 = vpop.f32.mrb[0].mxu0
    %v2966 = vadd.f32 0.0, %v2965
    %v2967 = vpop.f32.mrb[0].mxu0
    %v2968 = vpop.f32.mrb[0].mxu0
    %v2969 = vadd.f32 0.0, %v2968
    %v2970 = vpop.f32.mrb[0].mxu0
    %2971 = vmatprep.mubr.bf16.mxu0 %v2922
    %2972 = vmatmul.mubr.bf16.gmra.mrb[0].mxu0 %v2823
    %v2973 = vpop.f32.mrb[0].mxu0
    %v2974 = vadd.f32 0.0, %v2973
    %v2975 = vpop.f32.mrb[0].mxu0
    %v2976 = vpop.f32.mrb[0].mxu0
    %v2977 = vpop.f32.mrb[0].mxu0
    %2978 = vdwg.mxu0
    %v2982 = vrot.slane %v2966, 2
    %v2983 = vrot.slane %v2969, 2
    %v2984 = vsel %vm1213, %v2982, %v2983
    %v2985 = vrot.slane %v2974, 2
    %v2986 = vsel %vm1213, %v2983, %v2985
    %v2990 = vmax.f32 %v2966, %v2984
    %v2991 = vmax.f32 %v2969, %v2986
    %v2992 = vmax.f32 %v2974, %v2985
    %v2993 = vld [vmem:[%s9] sm:$0xf]
    %v2994 = vld [vmem:[%s9 + $0x4] sm:$0x1]
    %v2995 = vpack.c.bf16 %v2991, %v2990
    %v2996 = vpack.c.bf16 %v2992, %v2992
    %v2999 = vunpack.c.l.b16 %v2993
    %v3000 = vunpack.c.l.b16 %v2994
    %v3001 = vpack.c.b16 %v3000, %v2999
    %vm3002 = vcmask 146432
    %v3004 = vsel %vm3002, %v3001, 0
    %v3007 = vsel %vm2924, %v2996, 0
    %3009 = vmatprep.subr.bf16.mxu0 0
    %3010 = vmatpush1.bf16.msra.mxu0 %v2995
    %3011 = vmatprep.subr.bf16.mxu0 0
    %3012 = vmatpush1.bf16.msra.mxu0 %v3007
    %3013 = vmatprep.subr.bf16.mxu0 0
    %3014 = vmatpush1.bf16.msra.mxu0 0
    %3015 = vmatprep.subr.bf16.mxu0 0
    %3016 = vmatpush1.bf16.msra.mxu0 0
    %3017 = vmatprep.subr.bf16.mxu0 0
    %3018 = vmatpush1.bf16.msra.mxu0 0
    %3019 = vmatprep.subr.bf16.mxu0 0
    %3020 = vmatpush1.bf16.msra.mxu0 0
    %3021 = vmatprep.subr.bf16.mxu0 0
    %3022 = vmatpush1.bf16.msra.mxu0 0
    %3023 = vmatprep.subr.bf16.mxu0 0
    %3024 = vmatpush1.bf16.msra.mxu0 0
    %3025 = vmatprep.subr.bf16.mxu0 0
    %3026 = vmatpush1.bf16.msra.mxu0 0
    %3027 = vmatprep.subr.bf16.mxu0 0
    %3028 = vmatpush1.bf16.msra.mxu0 0
    %3029 = vmatprep.subr.bf16.mxu0 0
    %3030 = vmatpush1.bf16.msra.mxu0 0
    %3031 = vmatprep.subr.bf16.mxu0 0
    %3032 = vmatpush1.bf16.msra.mxu0 0
    %3033 = vmatprep.subr.bf16.mxu0 0
    %3034 = vmatpush1.bf16.msra.mxu0 0
    %3035 = vmatprep.subr.bf16.mxu0 0
    %3036 = vmatpush1.bf16.msra.mxu0 0
    %3037 = vmatprep.subr.bf16.mxu0 0
    %3038 = vmatpush1.bf16.msra.mxu0 0
    %3039 = vmatprep.subr.bf16.mxu0 0
    %3040 = vmatpush1.bf16.msra.mxu0 0
    %3041 = vmatprep.mubr.bf16.mxu0 0
    %3042 = vmatmul.mubr.bf16.gmra.mrb[0].mxu0 %v3004
    %v3043 = vpop.f32.mrb[0].mxu0
    %v3044 = vadd.f32 0.0, %v3043
    %v3045 = vpop.f32.mrb[0].mxu0
    %v3046 = vpop.f32.mrb[0].mxu0
    %v3047 = vadd.f32 0.0, %v3046
    %v3048 = vpop.f32.mrb[0].mxu0
    %3049 = vdwg.mxu0
    %v3050 = vpack.c.bf16 %v3047, %v3044
    %v3051 = vld [vmem:[%s10] sm:$0xf]
    %v3052 = vld [vmem:[%s10 + $0x4] sm:$0xf]
    %v3053 = vld [vmem:[%s10 + $0x8] sm:$0xf]
    %v3054 = vld [vmem:[%s10 + $0xc] sm:$0xf]
    %v3055 = vld [vmem:[%s10 + $0x10] sm:$0xf]
    %v3056 = vld [vmem:[%s10 + $0x14] sm:$0xf]
    %v3057 = vld [vmem:[%s10 + $0x18] sm:$0xf]
    %v3058 = vld [vmem:[%s10 + $0x1c] sm:$0xf]
    %v3059 = vld [vmem:[%s10 + $0x20] sm:$0xf]
    %v3060 = vld [vmem:[%s10 + $0x24] sm:$0xf]
    %v3061 = vld [vmem:[%s10 + $0x28] sm:$0xf]
    %v3062 = vld [vmem:[%s10 + $0x2c] sm:$0x1]
    %s3063 = scalar_lea.vmem %s10, 48
    %v3064 = vld [vmem:[%s3063] sm:$0xf]
    %v3065 = vld [vmem:[%s3063 + $0x4] sm:$0xf]
    %v3066 = vld [vmem:[%s3063 + $0x8] sm:$0xf]
    %v3067 = vld [vmem:[%s3063 + $0xc] sm:$0xf]
    %v3068 = vld [vmem:[%s3063 + $0x10] sm:$0xf]
    %v3069 = vld [vmem:[%s3063 + $0x14] sm:$0xf]
    %v3070 = vld [vmem:[%s3063 + $0x18] sm:$0xf]
    %v3071 = vld [vmem:[%s3063 + $0x1c] sm:$0xf]
    %v3072 = vld [vmem:[%s3063 + $0x20] sm:$0xf]
    %v3073 = vld [vmem:[%s3063 + $0x24] sm:$0xf]
    %v3074 = vld [vmem:[%s3063 + $0x28] sm:$0xf]
    %v3075 = vld [vmem:[%s3063 + $0x2c] sm:$0x1]
    %v3077 = vrot.slane %v3050, 1
    %v3090 = vunpack.c.l.b16 %v3064
    %v3091 = vunpack.c.l.b16 %v3065
    %v3092 = vunpack.c.l.b16 %v3066
    %v3093 = vunpack.c.l.b16 %v3067
    %v3094 = vunpack.c.l.b16 %v3068
    %v3095 = vunpack.c.l.b16 %v3069
    %v3096 = vunpack.c.l.b16 %v3070
    %v3097 = vunpack.c.l.b16 %v3071
    %v3098 = vunpack.c.l.b16 %v3072
    %v3099 = vunpack.c.l.b16 %v3073
    %v3100 = vunpack.c.l.b16 %v3074
    %v3101 = vunpack.c.l.b16 %v3075
    %v3102 = vpack.c.b16 %v3091, %v3090
    %v3103 = vpack.c.b16 %v3093, %v3092
    %v3104 = vpack.c.b16 %v3095, %v3094
    %v3105 = vpack.c.b16 %v3097, %v3096
    %v3106 = vpack.c.b16 %v3099, %v3098
    %v3107 = vpack.c.b16 %v3101, %v3100
    %vm3113 = vcmask 736256
    %v3115 = vsel %vm3113, %v3077, 0
    %vm3117 = vcmask 1044480
    %v3119 = vsel %vm3117, %v3107, 0
    %3121 = vmatprep.subr.bf16.mxu0 0
    %3122 = vmatpush1.bf16.msra.mxu0 %v3102
    %3123 = vmatprep.subr.bf16.mxu0 0
    %3124 = vmatpush1.bf16.msra.mxu0 %v3103
    %3125 = vmatprep.subr.bf16.mxu0 0
    %3126 = vmatpush1.bf16.msra.mxu0 %v3104
    %3127 = vmatprep.subr.bf16.mxu0 0
    %3128 = vmatpush1.bf16.msra.mxu0 %v3105
    %3129 = vmatprep.subr.bf16.mxu0 0
    %3130 = vmatpush1.bf16.msra.mxu0 %v3106
    %3131 = vmatprep.subr.bf16.mxu0 0
    %3132 = vmatpush1.bf16.msra.mxu0 %v3119
    %3133 = vmatprep.subr.bf16.mxu0 0
    %3134 = vmatpush1.bf16.msra.mxu0 0
    %3135 = vmatprep.subr.bf16.mxu0 0
    %3136 = vmatpush1.bf16.msra.mxu0 0
    %3137 = vmatprep.subr.bf16.mxu0 0
    %3138 = vmatpush1.bf16.msra.mxu0 0
    %3139 = vmatprep.subr.bf16.mxu0 0
    %3140 = vmatpush1.bf16.msra.mxu0 0
    %3141 = vmatprep.subr.bf16.mxu0 0
    %3142 = vmatpush1.bf16.msra.mxu0 0
    %3143 = vmatprep.subr.bf16.mxu0 0
    %3144 = vmatpush1.bf16.msra.mxu0 0
    %3145 = vmatprep.subr.bf16.mxu0 0
    %3146 = vmatpush1.bf16.msra.mxu0 0
    %3147 = vmatprep.subr.bf16.mxu0 0
    %3148 = vmatpush1.bf16.msra.mxu0 0
    %3149 = vmatprep.subr.bf16.mxu0 0
    %3150 = vmatpush1.bf16.msra.mxu0 0
    %3151 = vmatprep.subr.bf16.mxu0 0
    %3152 = vmatpush1.bf16.msra.mxu0 0
    %3153 = vmatprep.mubr.bf16.mxu0 0
    %3154 = vmatmul.mubr.bf16.gmra.mrb[0].mxu0 %v3115
    %v3155 = vpop.f32.mrb[0].mxu0
    %v3156 = vadd.f32 0.0, %v3155
    %v3157 = vpop.f32.mrb[0].mxu0
    %v3158 = vpop.f32.mrb[0].mxu0
    %v3159 = vpop.f32.mrb[0].mxu0
    %3160 = vdwg.mxu0
    %s3161 = scalar_lea.vmem %s10, 96
    %v3162 = vld [vmem:[%s3161] sm:$0xf]
    %v3163 = vld [vmem:[%s3161 + $0x4] sm:$0xf]
    %v3164 = vld [vmem:[%s3161 + $0x8] sm:$0xf]
    %v3165 = vld [vmem:[%s3161 + $0xc] sm:$0xf]
    %v3166 = vld [vmem:[%s3161 + $0x10] sm:$0xf]
    %v3167 = vld [vmem:[%s3161 + $0x14] sm:$0xf]
    %v3168 = vld [vmem:[%s3161 + $0x18] sm:$0xf]
    %v3169 = vld [vmem:[%s3161 + $0x1c] sm:$0xf]
    %v3170 = vld [vmem:[%s3161 + $0x20] sm:$0xf]
    %v3171 = vld [vmem:[%s3161 + $0x24] sm:$0xf]
    %v3172 = vld [vmem:[%s3161 + $0x28] sm:$0xf]
    %v3173 = vld [vmem:[%s3161 + $0x2c] sm:$0x1]
    %s3174 = scalar_lea.vmem %s10, 144
    %v3175 = vld [vmem:[%s3174] sm:$0xf]
    %v3176 = vld [vmem:[%s3174 + $0x4] sm:$0xf]
    %v3177 = vld [vmem:[%s3174 + $0x8] sm:$0xf]
    %v3178 = vld [vmem:[%s3174 + $0xc] sm:$0xf]
    %v3179 = vld [vmem:[%s3174 + $0x10] sm:$0xf]
    %v3180 = vld [vmem:[%s3174 + $0x14] sm:$0xf]
    %v3181 = vld [vmem:[%s3174 + $0x18] sm:$0xf]
    %v3182 = vld [vmem:[%s3174 + $0x1c] sm:$0xf]
    %v3183 = vld [vmem:[%s3174 + $0x20] sm:$0xf]
    %v3184 = vld [vmem:[%s3174 + $0x24] sm:$0xf]
    %v3185 = vld [vmem:[%s3174 + $0x28] sm:$0xf]
    %v3186 = vld [vmem:[%s3174 + $0x2c] sm:$0x1]
    %v3187 = vrot.slane %v3050, 3
    %v3200 = vunpack.c.l.b16 %v3175
    %v3201 = vunpack.c.l.b16 %v3176
    %v3202 = vunpack.c.l.b16 %v3177
    %v3203 = vunpack.c.l.b16 %v3178
    %v3204 = vunpack.c.l.b16 %v3179
    %v3205 = vunpack.c.l.b16 %v3180
    %v3206 = vunpack.c.l.b16 %v3181
    %v3207 = vunpack.c.l.b16 %v3182
    %v3208 = vunpack.c.l.b16 %v3183
    %v3209 = vunpack.c.l.b16 %v3184
    %v3210 = vunpack.c.l.b16 %v3185
    %v3211 = vunpack.c.l.b16 %v3186
    %v3212 = vpack.c.b16 %v3201, %v3200
    %v3213 = vpack.c.b16 %v3203, %v3202
    %v3214 = vpack.c.b16 %v3205, %v3204
    %v3215 = vpack.c.b16 %v3207, %v3206
    %v3216 = vpack.c.b16 %v3209, %v3208
    %v3217 = vpack.c.b16 %v3211, %v3210
    %v3224 = vsel %vm3113, %v3187, 0
    %v3227 = vsel %vm3117, %v3217, 0
    %3229 = vmatprep.subr.bf16.mxu0 0
    %3230 = vmatpush1.bf16.msra.mxu0 %v3212
    %3231 = vmatprep.subr.bf16.mxu0 0
    %3232 = vmatpush1.bf16.msra.mxu0 %v3213
    %3233 = vmatprep.subr.bf16.mxu0 0
    %3234 = vmatpush1.bf16.msra.mxu0 %v3214
    %3235 = vmatprep.subr.bf16.mxu0 0
    %3236 = vmatpush1.bf16.msra.mxu0 %v3215
    %3237 = vmatprep.subr.bf16.mxu0 0
    %3238 = vmatpush1.bf16.msra.mxu0 %v3216
    %3239 = vmatprep.subr.bf16.mxu0 0
    %3240 = vmatpush1.bf16.msra.mxu0 %v3227
    %3241 = vmatprep.subr.bf16.mxu0 0
    %3242 = vmatpush1.bf16.msra.mxu0 0
    %3243 = vmatprep.subr.bf16.mxu0 0
    %3244 = vmatpush1.bf16.msra.mxu0 0
    %3245 = vmatprep.subr.bf16.mxu0 0
    %3246 = vmatpush1.bf16.msra.mxu0 0
    %3247 = vmatprep.subr.bf16.mxu0 0
    %3248 = vmatpush1.bf16.msra.mxu0 0
    %3249 = vmatprep.subr.bf16.mxu0 0
    %3250 = vmatpush1.bf16.msra.mxu0 0
    %3251 = vmatprep.subr.bf16.mxu0 0
    %3252 = vmatpush1.bf16.msra.mxu0 0
    %3253 = vmatprep.subr.bf16.mxu0 0
    %3254 = vmatpush1.bf16.msra.mxu0 0
    %3255 = vmatprep.subr.bf16.mxu0 0
    %3256 = vmatpush1.bf16.msra.mxu0 0
    %3257 = vmatprep.subr.bf16.mxu0 0
    %3258 = vmatpush1.bf16.msra.mxu0 0
    %3259 = vmatprep.subr.bf16.mxu0 0
    %3260 = vmatpush1.bf16.msra.mxu0 0
    %3261 = vmatprep.mubr.bf16.mxu0 0
    %3262 = vmatmul.mubr.bf16.gmra.mrb[0].mxu0 %v3224
    %v3263 = vpop.f32.mrb[0].mxu0
    %v3264 = vadd.f32 0.0, %v3263
    %v3265 = vpop.f32.mrb[0].mxu0
    %v3266 = vpop.f32.mrb[0].mxu0
    %v3267 = vpop.f32.mrb[0].mxu0
    %3268 = vdwg.mxu0
    %s3269 = scalar_lea.vmem %s10, 192
    %v3270 = vld [vmem:[%s3269] sm:$0xf]
    %v3271 = vld [vmem:[%s3269 + $0x4] sm:$0xf]
    %v3272 = vld [vmem:[%s3269 + $0x8] sm:$0xf]
    %v3273 = vld [vmem:[%s3269 + $0xc] sm:$0xf]
    %v3274 = vld [vmem:[%s3269 + $0x10] sm:$0xf]
    %v3275 = vld [vmem:[%s3269 + $0x14] sm:$0xf]
    %v3276 = vld [vmem:[%s3269 + $0x18] sm:$0xf]
    %v3277 = vld [vmem:[%s3269 + $0x1c] sm:$0xf]
    %v3278 = vld [vmem:[%s3269 + $0x20] sm:$0xf]
    %v3279 = vld [vmem:[%s3269 + $0x24] sm:$0xf]
    %v3280 = vld [vmem:[%s3269 + $0x28] sm:$0xf]
    %v3281 = vld [vmem:[%s3269 + $0x2c] sm:$0x1]
    %v3282 = vrot.slane %v3050, 4
    %v3295 = vunpack.c.l.b16 %v3270
    %v3296 = vunpack.c.l.b16 %v3271
    %v3297 = vunpack.c.l.b16 %v3272
    %v3298 = vunpack.c.l.b16 %v3273
    %v3299 = vunpack.c.l.b16 %v3274
    %v3300 = vunpack.c.l.b16 %v3275
    %v3301 = vunpack.c.l.b16 %v3276
    %v3302 = vunpack.c.l.b16 %v3277
    %v3303 = vunpack.c.l.b16 %v3278
    %v3304 = vunpack.c.l.b16 %v3279
    %v3305 = vunpack.c.l.b16 %v3280
    %v3306 = vunpack.c.l.b16 %v3281
    %v3307 = vpack.c.b16 %v3296, %v3295
    %v3308 = vpack.c.b16 %v3298, %v3297
    %v3309 = vpack.c.b16 %v3300, %v3299
    %v3310 = vpack.c.b16 %v3302, %v3301
    %v3311 = vpack.c.b16 %v3304, %v3303
    %v3312 = vpack.c.b16 %v3306, %v3305
    %v3319 = vsel %vm3113, %v3282, 0
    %v3322 = vsel %vm3117, %v3312, 0
    %3324 = vmatprep.subr.bf16.mxu0 0
    %3325 = vmatpush1.bf16.msra.mxu0 %v3307
    %3326 = vmatprep.subr.bf16.mxu0 0
    %3327 = vmatpush1.bf16.msra.mxu0 %v3308
    %3328 = vmatprep.subr.bf16.mxu0 0
    %3329 = vmatpush1.bf16.msra.mxu0 %v3309
    %3330 = vmatprep.subr.bf16.mxu0 0
    %3331 = vmatpush1.bf16.msra.mxu0 %v3310
    %3332 = vmatprep.subr.bf16.mxu0 0
    %3333 = vmatpush1.bf16.msra.mxu0 %v3311
    %3334 = vmatprep.subr.bf16.mxu0 0
    %3335 = vmatpush1.bf16.msra.mxu0 %v3322
    %3336 = vmatprep.subr.bf16.mxu0 0
    %3337 = vmatpush1.bf16.msra.mxu0 0
    %3338 = vmatprep.subr.bf16.mxu0 0
    %3339 = vmatpush1.bf16.msra.mxu0 0
    %3340 = vmatprep.subr.bf16.mxu0 0
    %3341 = vmatpush1.bf16.msra.mxu0 0
    %3342 = vmatprep.subr.bf16.mxu0 0
    %3343 = vmatpush1.bf16.msra.mxu0 0
    %3344 = vmatprep.subr.bf16.mxu0 0
    %3345 = vmatpush1.bf16.msra.mxu0 0
    %3346 = vmatprep.subr.bf16.mxu0 0
    %3347 = vmatpush1.bf16.msra.mxu0 0
    %3348 = vmatprep.subr.bf16.mxu0 0
    %3349 = vmatpush1.bf16.msra.mxu0 0
    %3350 = vmatprep.subr.bf16.mxu0 0
    %3351 = vmatpush1.bf16.msra.mxu0 0
    %3352 = vmatprep.subr.bf16.mxu0 0
    %3353 = vmatpush1.bf16.msra.mxu0 0
    %3354 = vmatprep.subr.bf16.mxu0 0
    %3355 = vmatpush1.bf16.msra.mxu0 0
    %3356 = vmatprep.mubr.bf16.mxu0 0
    %3357 = vmatmul.mubr.bf16.gmra.mrb[0].mxu0 %v3319
    %v3358 = vpop.f32.mrb[0].mxu0
    %v3359 = vadd.f32 0.0, %v3358
    %v3360 = vpop.f32.mrb[0].mxu0
    %v3361 = vpop.f32.mrb[0].mxu0
    %v3362 = vpop.f32.mrb[0].mxu0
    %3363 = vdwg.mxu0
    %v3376 = vunpack.c.l.b16 %v3051
    %v3377 = vunpack.c.l.b16 %v3052
    %v3378 = vunpack.c.l.b16 %v3053
    %v3379 = vunpack.c.l.b16 %v3054
    %v3380 = vunpack.c.l.b16 %v3055
    %v3381 = vunpack.c.l.b16 %v3056
    %v3382 = vunpack.c.l.b16 %v3057
    %v3383 = vunpack.c.l.b16 %v3058
    %v3384 = vunpack.c.l.b16 %v3059
    %v3385 = vunpack.c.l.b16 %v3060
    %v3386 = vunpack.c.l.b16 %v3061
    %v3387 = vunpack.c.l.b16 %v3062
    %v3388 = vpack.c.b16 %v3377, %v3376
    %v3389 = vpack.c.b16 %v3379, %v3378
    %v3390 = vpack.c.b16 %v3381, %v3380
    %v3391 = vpack.c.b16 %v3383, %v3382
    %v3392 = vpack.c.b16 %v3385, %v3384
    %v3393 = vpack.c.b16 %v3387, %v3386
    %v3400 = vsel %vm3113, %v3050, 0
    %v3403 = vsel %vm3117, %v3393, 0
    %3405 = vmatprep.subr.bf16.mxu0 0
    %3406 = vmatpush1.bf16.msra.mxu0 %v3388
    %3407 = vmatprep.subr.bf16.mxu0 0
    %3408 = vmatpush1.bf16.msra.mxu0 %v3389
    %3409 = vmatprep.subr.bf16.mxu0 0
    %3410 = vmatpush1.bf16.msra.mxu0 %v3390
    %3411 = vmatprep.subr.bf16.mxu0 0
    %3412 = vmatpush1.bf16.msra.mxu0 %v3391
    %3413 = vmatprep.subr.bf16.mxu0 0
    %3414 = vmatpush1.bf16.msra.mxu0 %v3392
    %3415 = vmatprep.subr.bf16.mxu0 0
    %3416 = vmatpush1.bf16.msra.mxu0 %v3403
    %3417 = vmatprep.subr.bf16.mxu0 0
    %3418 = vmatpush1.bf16.msra.mxu0 0
    %3419 = vmatprep.subr.bf16.mxu0 0
    %3420 = vmatpush1.bf16.msra.mxu0 0
    %3421 = vmatprep.subr.bf16.mxu0 0
    %3422 = vmatpush1.bf16.msra.mxu0 0
    %3423 = vmatprep.subr.bf16.mxu0 0
    %3424 = vmatpush1.bf16.msra.mxu0 0
    %3425 = vmatprep.subr.bf16.mxu0 0
    %3426 = vmatpush1.bf16.msra.mxu0 0
    %3427 = vmatprep.subr.bf16.mxu0 0
    %3428 = vmatpush1.bf16.msra.mxu0 0
    %3429 = vmatprep.subr.bf16.mxu0 0
    %3430 = vmatpush1.bf16.msra.mxu0 0
    %3431 = vmatprep.subr.bf16.mxu0 0
    %3432 = vmatpush1.bf16.msra.mxu0 0
    %3433 = vmatprep.subr.bf16.mxu0 0
    %3434 = vmatpush1.bf16.msra.mxu0 0
    %3435 = vmatprep.subr.bf16.mxu0 0
    %3436 = vmatpush1.bf16.msra.mxu0 0
    %3437 = vmatprep.mubr.bf16.mxu0 0
    %3438 = vmatmul.mubr.bf16.gmra.mrb[0].mxu0 %v3400
    %v3439 = vpop.f32.mrb[0].mxu0
    %v3440 = vadd.f32 %v3156, %v3439
    %v3441 = vpop.f32.mrb[0].mxu0
    %v3442 = vpop.f32.mrb[0].mxu0
    %v3443 = vpop.f32.mrb[0].mxu0
    %3444 = vdwg.mxu0
    %v3445 = vrot.slane %v3050, 2
    %v3458 = vunpack.c.l.b16 %v3162
    %v3459 = vunpack.c.l.b16 %v3163
    %v3460 = vunpack.c.l.b16 %v3164
    %v3461 = vunpack.c.l.b16 %v3165
    %v3462 = vunpack.c.l.b16 %v3166
    %v3463 = vunpack.c.l.b16 %v3167
    %v3464 = vunpack.c.l.b16 %v3168
    %v3465 = vunpack.c.l.b16 %v3169
    %v3466 = vunpack.c.l.b16 %v3170
    %v3467 = vunpack.c.l.b16 %v3171
    %v3468 = vunpack.c.l.b16 %v3172
    %v3469 = vunpack.c.l.b16 %v3173
    %v3470 = vpack.c.b16 %v3459, %v3458
    %v3471 = vpack.c.b16 %v3461, %v3460
    %v3472 = vpack.c.b16 %v3463, %v3462
    %v3473 = vpack.c.b16 %v3465, %v3464
    %v3474 = vpack.c.b16 %v3467, %v3466
    %v3475 = vpack.c.b16 %v3469, %v3468
    %v3482 = vsel %vm3113, %v3445, 0
    %v3485 = vsel %vm3117, %v3475, 0
    %3487 = vmatprep.subr.bf16.mxu0 0
    %3488 = vmatpush1.bf16.msra.mxu0 %v3470
    %3489 = vmatprep.subr.bf16.mxu0 0
    %3490 = vmatpush1.bf16.msra.mxu0 %v3471
    %3491 = vmatprep.subr.bf16.mxu0 0
    %3492 = vmatpush1.bf16.msra.mxu0 %v3472
    %3493 = vmatprep.subr.bf16.mxu0 0
    %3494 = vmatpush1.bf16.msra.mxu0 %v3473
    %3495 = vmatprep.subr.bf16.mxu0 0
    %3496 = vmatpush1.bf16.msra.mxu0 %v3474
    %3497 = vmatprep.subr.bf16.mxu0 0
    %3498 = vmatpush1.bf16.msra.mxu0 %v3485
    %3499 = vmatprep.subr.bf16.mxu0 0
    %3500 = vmatpush1.bf16.msra.mxu0 0
    %3501 = vmatprep.subr.bf16.mxu0 0
    %3502 = vmatpush1.bf16.msra.mxu0 0
    %3503 = vmatprep.subr.bf16.mxu0 0
    %3504 = vmatpush1.bf16.msra.mxu0 0
    %3505 = vmatprep.subr.bf16.mxu0 0
    %3506 = vmatpush1.bf16.msra.mxu0 0
    %3507 = vmatprep.subr.bf16.mxu0 0
    %3508 = vmatpush1.bf16.msra.mxu0 0
    %3509 = vmatprep.subr.bf16.mxu0 0
    %3510 = vmatpush1.bf16.msra.mxu0 0
    %3511 = vmatprep.subr.bf16.mxu0 0
    %3512 = vmatpush1.bf16.msra.mxu0 0
    %3513 = vmatprep.subr.bf16.mxu0 0
    %3514 = vmatpush1.bf16.msra.mxu0 0
    %3515 = vmatprep.subr.bf16.mxu0 0
    %3516 = vmatpush1.bf16.msra.mxu0 0
    %3517 = vmatprep.subr.bf16.mxu0 0
    %3518 = vmatpush1.bf16.msra.mxu0 0
    %3519 = vmatprep.mubr.bf16.mxu0 0
    %3520 = vmatmul.mubr.bf16.gmra.mrb[0].mxu0 %v3482
    %v3521 = vpop.f32.mrb[0].mxu0
    %v3522 = vadd.f32 %v3264, %v3521
    %v3523 = vpop.f32.mrb[0].mxu0
    %v3524 = vpop.f32.mrb[0].mxu0
    %v3525 = vpop.f32.mrb[0].mxu0
    %3526 = vdwg.mxu0
    %v3527 = vadd.f32 %v3440, %v3522
    %v3528 = vadd.f32 %v3527, %v3359
    %v3529 = vld [vmem:[%s11] sm:$0x1]
    %v3531 = vlaneseq
    %v3532 = vshrl.u32 %v3531, 7
    %v3533 = vsub.s32 0, %v3532
    %v3534 = vrot.slane %v3529, %v3533
    %v3536 = vadd.f32 %v3528, %v3534
    %v3537 = vmax.f32 %v3536, 0.0
    %v3538 = vpack.c.bf16 %v3537, %v3537
    %v3539 = vld [vmem:[%s12] sm:$0xf]
    %v3540 = vld [vmem:[%s12 + $0x4] sm:$0xf]
    %v3541 = vld [vmem:[%s12 + $0x8] sm:$0xf]
    %v3542 = vld [vmem:[%s12 + $0xc] sm:$0xf]
    %v3543 = vld [vmem:[%s12 + $0x10] sm:$0xf]
    %v3544 = vld [vmem:[%s12 + $0x14] sm:$0xf]
    %v3545 = vld [vmem:[%s12 + $0x18] sm:$0xf]
    %v3546 = vld [vmem:[%s12 + $0x1c] sm:$0xf]
    %v3547 = vld [vmem:[%s12 + $0x20] sm:$0xf]
    %v3548 = vld [vmem:[%s12 + $0x24] sm:$0xf]
    %v3549 = vld [vmem:[%s12 + $0x28] sm:$0x3]
    %v3550 = vld [vmem:[%s13] sm:$0x1]
    %v3552 = vlaneseq
    %v3553 = vshrl.u32 %v3552, 7
    %v3554 = vsub.s32 0, %v3553
    %v3555 = vrot.slane %v3550, %v3554
    %v3568 = vunpack.c.l.b16 %v3539
    %v3569 = vunpack.c.l.b16 %v3540
    %v3570 = vunpack.c.l.b16 %v3541
    %v3571 = vunpack.c.l.b16 %v3542
    %v3572 = vunpack.c.l.b16 %v3543
    %v3573 = vunpack.c.l.b16 %v3544
    %v3574 = vunpack.c.l.b16 %v3545
    %v3575 = vunpack.c.l.b16 %v3546
    %v3576 = vunpack.c.l.b16 %v3547
    %v3577 = vunpack.c.l.b16 %v3548
    %v3578 = vunpack.c.l.b16 %v3549
    %v3579 = vpack.c.b16 %v3569, %v3568
    %v3580 = vpack.c.b16 %v3571, %v3570
    %v3581 = vpack.c.b16 %v3573, %v3572
    %v3582 = vpack.c.b16 %v3575, %v3574
    %v3583 = vpack.c.b16 %v3577, %v3576
    %v3584 = vpack.c.b16 %v3578, %v3578
    %vm3590 = vcmask 687104
    %v3592 = vsel %vm3590, %v3538, 0
    %v3595 = vsel %vm2925, %v3584, 0
    %3597 = vmatprep.subr.bf16.mxu0 0
    %3598 = vmatpush1.bf16.msra.mxu0 %v3579
    %3599 = vmatprep.subr.bf16.mxu0 0
    %3600 = vmatpush1.bf16.msra.mxu0 %v3580
    %3601 = vmatprep.subr.bf16.mxu0 0
    %3602 = vmatpush1.bf16.msra.mxu0 %v3581
    %3603 = vmatprep.subr.bf16.mxu0 0
    %3604 = vmatpush1.bf16.msra.mxu0 %v3582
    %3605 = vmatprep.subr.bf16.mxu0 0
    %3606 = vmatpush1.bf16.msra.mxu0 %v3583
    %3607 = vmatprep.subr.bf16.mxu0 0
    %3608 = vmatpush1.bf16.msra.mxu0 %v3595
    %3609 = vmatprep.subr.bf16.mxu0 0
    %3610 = vmatpush1.bf16.msra.mxu0 0
    %3611 = vmatprep.subr.bf16.mxu0 0
    %3612 = vmatpush1.bf16.msra.mxu0 0
    %3613 = vmatprep.subr.bf16.mxu0 0
    %3614 = vmatpush1.bf16.msra.mxu0 0
    %3615 = vmatprep.subr.bf16.mxu0 0
    %3616 = vmatpush1.bf16.msra.mxu0 0
    %3617 = vmatprep.subr.bf16.mxu0 0
    %3618 = vmatpush1.bf16.msra.mxu0 0
    %3619 = vmatprep.subr.bf16.mxu0 0
    %3620 = vmatpush1.bf16.msra.mxu0 0
    %3621 = vmatprep.subr.bf16.mxu0 0
    %3622 = vmatpush1.bf16.msra.mxu0 0
    %3623 = vmatprep.subr.bf16.mxu0 0
    %3624 = vmatpush1.bf16.msra.mxu0 0
    %3625 = vmatprep.subr.bf16.mxu0 0
    %3626 = vmatpush1.bf16.msra.mxu0 0
    %3627 = vmatprep.subr.bf16.mxu0 0
    %3628 = vmatpush1.bf16.msra.mxu0 0
    %3629 = vmatprep.mubr.bf16.mxu0 0
    %3630 = vmatmul.mubr.bf16.gmra.mrb[0].mxu0 %v3592
    %v3631 = vpop.f32.mrb[0].mxu0
    %v3632 = vadd.f32 %v3555, %v3631
    %v3633 = vpop.f32.mrb[0].mxu0
    %v3634 = vpop.f32.mrb[0].mxu0
    %v3635 = vpop.f32.mrb[0].mxu0
    %3636 = vdwg.mxu0
    %vm3637 = vcmask 33792
    %v3638 = vsel %vm3637, %v3632, -inf
    %3639 = vmax.xlane.f32.xlu0 %v3638
    %v3640 = vpop.xlane.xlu0 %3639
    %v3641 = vsub.f32 %v3632, %v3640
    %v3642 = vmul.f32 %v3641, 1.442695
    %v3643 = vpow.pop %v3642
    %v3644 = vsel %vm3637, %v3643, 0.0
    %3645 = vadd.xlane.f32.xlu0 %v3644
    %v3646 = vpop.xlane.xlu0 %3645
    %v3647 = vrcp.pop %v3646
    %v3648 = vmul.f32 %v3643, %v3647
    %3649 = vst.msk [vmem:[#allocation2] sm:$0x3] %vm3637, %v3648
    // Predicated region
    $region58: #{forward.1} parent=1 // pred_check
      _
    $region59: #{forward.1} parent=1 // pred_check_branch
      %3651 = sbr.rel (0) target = $region61
    $region60: #{forward.1} parent=1 // pred_region
      %s3653 = ssub.s32 32, 32
      %3654 = vsyncadd [#allocation3], %s3653
      %s3656 = sshll.u32 [#allocation2], 4
      %s3657 = int_to_ptr.vmem [resolvable:$true] %s3656
      %3659 = dma.vmem_to_hbm [thread:$0]  %s3657, 32, %s14, [#allocation3]
    $region61: #{forward.1} parent=1 // pred_fallthru
      _
    // Predicated region
    $region62: #{forward.1} parent=1 // pred_check
      _
    $region63: #{forward.1} parent=1 // pred_check_branch
      %3661 = sbr.rel (0) target = $region65
    $region64: #{forward.1} parent=1 // pred_region
      %3662 = dma.done [#allocation3], 32
    $region65: #{forward.1} parent=1 // pred_fallthru
      _
    %3663 = vsyncpa [#allocation3], 1

</llo_original>
